<compile_context>
chip_gen: v5e
topology: v5e:2x2
jax: 0.10.0
libtpu: 0.0.40
codegen_flags: <defaults>
</compile_context>

<pallas_src>
import jax
import jax.numpy as jnp
from jax.experimental import pallas as pl
from jax.experimental.pallas import tpu as pltpu


def _round_up(v, m):
    return (v + m - 1) // m * m


def _pick_divisor(total, candidates):
    for c in candidates:
        if c <= total and total % c == 0:
            return c
    return total


# ---------------------------------------------------------------------------
# Kernel 1: layer-1 linear projections (feature-K tiled).
#   proj1  = x @ W1l           (aggregated later)
#   rootb1 = x @ W1r + b1      (root/self term + lin_l bias)
# ---------------------------------------------------------------------------
def sage_linear_kernel(x_ref, wl_ref, wr_ref, bl_ref,
                       proj_ref, rootb_ref, accl_ref, accr_ref):
    k = pl.program_id(1)

    @pl.when(k == 0)
    def _():
        accl_ref[...] = jnp.zeros_like(accl_ref)
        accr_ref[...] = jnp.zeros_like(accr_ref)

    x = x_ref[...]
    accl_ref[...] += jnp.dot(x, wl_ref[...], preferred_element_type=jnp.float32)
    accr_ref[...] += jnp.dot(x, wr_ref[...], preferred_element_type=jnp.float32)

    @pl.when(k == pl.num_programs(1) - 1)
    def _():
        proj_ref[...] = accl_ref[...].astype(proj_ref.dtype)
        rootb_ref[...] = (accr_ref[...] + bl_ref[...]).astype(rootb_ref.dtype)


def sage_linear(x_bf16, w_l, w_r, b_l, *, tm, tkf):
    n_pad, f_pad = x_bf16.shape
    h_pad = w_l.shape[1]
    const = lambda i, k: (0, 0)
    return pl.pallas_call(
        sage_linear_kernel,
        out_shape=(
            jax.ShapeDtypeStruct((n_pad, h_pad), jnp.bfloat16),   # proj1
            jax.ShapeDtypeStruct((n_pad, h_pad), jnp.bfloat16),   # rootb1
        ),
        grid=(n_pad // tm, f_pad // tkf),
        in_specs=[
            pl.BlockSpec((tm, tkf), lambda i, k: (i, k)),
            pl.BlockSpec((tkf, h_pad), lambda i, k: (k, 0)),
            pl.BlockSpec((tkf, h_pad), lambda i, k: (k, 0)),
            pl.BlockSpec((1, h_pad), const),
        ],
        out_specs=(
            pl.BlockSpec((tm, h_pad), lambda i, k: (i, 0)),
            pl.BlockSpec((tm, h_pad), lambda i, k: (i, 0)),
        ),
        scratch_shapes=[pltpu.VMEM((tm, h_pad), jnp.float32),
                        pltpu.VMEM((tm, h_pad), jnp.float32)],
        compiler_params=pltpu.CompilerParams(
            dimension_semantics=("parallel", "arbitrary")),
    )(x_bf16, w_l, w_r, b_l)


# ---------------------------------------------------------------------------
# Kernel 2: layer-1 aggregation + transition, fused with layer-2's linear.
#   acc += A_{0,1} @ proj1   over neighbor tiles (int8 adj -> bf16 in-kernel)
#   epilogue: h = rootb1 + inv_deg * acc ; L2-normalize ; ReLU ; folded BN
#             proj2 = h @ W2l ; rootb2 = h @ W2r + b2    (bf16 outputs)
# ---------------------------------------------------------------------------
def sage1_fused_kernel(adj_ref, proj_ref, rootb_ref, invdeg_ref,
                       scale_ref, shift_ref, w2l_ref, w2r_ref, b2_ref,
                       proj2_ref, rootb2_ref, acc_ref):
    k = pl.program_id(1)

    @pl.when(k == 0)
    def _():
        acc_ref[...] = jnp.zeros_like(acc_ref)

    acc_ref[...] += jnp.dot(adj_ref[...].astype(jnp.bfloat16), proj_ref[...],
                            preferred_element_type=jnp.float32)

    @pl.when(k == pl.num_programs(1) - 1)
    def _():
        # SAGEConv1: mean-normalize neighbor sum (f32, exact) + root term.
        h = rootb_ref[...].astype(jnp.float32) + invdeg_ref[...] * acc_ref[...]
        # F.normalize(h, p=2, dim=-1)  -> rsqrt on EUP.
        sumsq = jnp.sum(h * h, axis=-1, keepdims=True)
        h = h * jax.lax.rsqrt(jnp.maximum(sumsq, 1e-24))
        # transition: ReLU + BatchNorm1d(eval, folded); Dropout(eval)=identity.
        h = jnp.maximum(h, 0.0) * scale_ref[...] + shift_ref[...]
        # Fused layer-2 projections (MXU is otherwise idle in the epilogue).
        h_bf = h.astype(jnp.bfloat16)
        proj2_ref[...] = jnp.dot(
            h_bf, w2l_ref[...],
            preferred_element_type=jnp.float32).astype(proj2_ref.dtype)
        rootb2_ref[...] = (jnp.dot(h_bf, w2r_ref[...],
                                   preferred_element_type=jnp.float32)
                           + b2_ref[...]).astype(rootb2_ref.dtype)


def sage1_fused(adj_i8, proj1, rootb1, inv_deg, bn_scale, bn_shift,
                w2l, w2r, b2, *, tm, tk):
    n_pad = adj_i8.shape[0]
    h_pad = proj1.shape[1]
    const = lambda i, k: (0, 0)
    return pl.pallas_call(
        sage1_fused_kernel,
        out_shape=(
            jax.ShapeDtypeStruct((n_pad, h_pad), jnp.bfloat16),   # proj2
            jax.ShapeDtypeStruct((n_pad, h_pad), jnp.bfloat16),   # rootb2
        ),
        grid=(n_pad // tm, n_pad // tk),
        in_specs=[
            pl.BlockSpec((tm, tk), lambda i, k: (i, k)),        # adjacency (i8)
            pl.BlockSpec((tk, h_pad), lambda i, k: (k, 0)),     # proj1
            pl.BlockSpec((tm, h_pad), lambda i, k: (i, 0)),     # rootb1
            pl.BlockSpec((tm, 1), lambda i, k: (i, 0)),         # inv_deg
            pl.BlockSpec((1, h_pad), const),                    # bn scale
            pl.BlockSpec((1, h_pad), const),                    # bn shift
            pl.BlockSpec((h_pad, h_pad), const),                # W2l (resident)
            pl.BlockSpec((h_pad, h_pad), const),                # W2r (resident)
            pl.BlockSpec((1, h_pad), const),                    # b2
        ],
        out_specs=(
            pl.BlockSpec((tm, h_pad), lambda i, k: (i, 0)),
            pl.BlockSpec((tm, h_pad), lambda i, k: (i, 0)),
        ),
        scratch_shapes=[pltpu.VMEM((tm, h_pad), jnp.float32)],
        compiler_params=pltpu.CompilerParams(
            dimension_semantics=("parallel", "arbitrary")),
    )(adj_i8, proj1, rootb1, inv_deg, bn_scale, bn_shift, w2l, w2r, b2)


# ---------------------------------------------------------------------------
# Kernel 3: layer-2 aggregation + L2-normalize (final output, f32).
# ---------------------------------------------------------------------------
def sage2_aggregate_kernel(adj_ref, proj_ref, rootb_ref, invdeg_ref,
                           out_ref, acc_ref):
    k = pl.program_id(1)

    @pl.when(k == 0)
    def _():
        acc_ref[...] = jnp.zeros_like(acc_ref)

    acc_ref[...] += jnp.dot(adj_ref[...].astype(jnp.bfloat16), proj_ref[...],
                            preferred_element_type=jnp.float32)

    @pl.when(k == pl.num_programs(1) - 1)
    def _():
        h = rootb_ref[...].astype(jnp.float32) + invdeg_ref[...] * acc_ref[...]
        sumsq = jnp.sum(h * h, axis=-1, keepdims=True)
        out_ref[...] = (h * jax.lax.rsqrt(jnp.maximum(sumsq, 1e-24))
                        ).astype(out_ref.dtype)


def sage2_aggregate(adj_i8, proj2, rootb2, inv_deg, *, tm, tk):
    n_pad = adj_i8.shape[0]
    h_pad = proj2.shape[1]
    return pl.pallas_call(
        sage2_aggregate_kernel,
        out_shape=jax.ShapeDtypeStruct((n_pad, h_pad), jnp.float32),
        grid=(n_pad // tm, n_pad // tk),
        in_specs=[
            pl.BlockSpec((tm, tk), lambda i, k: (i, k)),
            pl.BlockSpec((tk, h_pad), lambda i, k: (k, 0)),
            pl.BlockSpec((tm, h_pad), lambda i, k: (i, 0)),
            pl.BlockSpec((tm, 1), lambda i, k: (i, 0)),
        ],
        out_specs=pl.BlockSpec((tm, h_pad), lambda i, k: (i, 0)),
        scratch_shapes=[pltpu.VMEM((tm, h_pad), jnp.float32)],
        compiler_params=pltpu.CompilerParams(
            dimension_semantics=("parallel", "arbitrary")),
    )(adj_i8, proj2, rootb2, inv_deg)


# ---------------------------------------------------------------------------
# NIFTY.forward(x, edge_index) == GraphSAGE encoder forward (eval mode).
# ---------------------------------------------------------------------------
def nifty_forward(x, edge_index, params):
    n, nfeat = x.shape
    nhid = params["w1l"].shape[1]

    # Row tile: keep >= 2 row tiles for v7x's two TensorCores on big graphs.
    tm = 256 if n <= 1024 else 512
    n_pad = _round_up(n, tm)
    # Reduction (neighbor) tile: as large as divides n_pad, up to 2048.
    tk = _pick_divisor(n_pad, (2048, 1024, 512, 256))
    f_pad = _round_up(nfeat, 128)
    h_pad = _round_up(nhid, 128)
    tkf = _pick_divisor(f_pad, (2048, 1024, 512, 256, 128))

    # --- glue: unnormalized {0,1} adjacency as int8 + per-row 1/deg (f32) ----
    # (single int8 N^2 scatter; no f32 N^2 temp, no divide/cast passes)
    src = edge_index[0]
    dst = edge_index[1]
    adj_i8 = (jnp.zeros((n_pad, n_pad), jnp.int8)
              .at[dst, src].add(jnp.ones(src.shape, jnp.int8)))
    deg = jnp.zeros((n_pad,), jnp.float32).at[dst].add(1.0)
    inv_deg = (1.0 / jnp.maximum(deg, 1.0)).reshape(n_pad, 1)

    # --- pad inputs / parameters (zero padding keeps the math exact) ---------
    # Padded rows/cols only ever multiply by zero adjacency columns and are
    # sliced off at the end, so their (garbage) normalized values are harmless.
    x_bf = (jnp.zeros((n_pad, f_pad), jnp.bfloat16)
            .at[:n, :nfeat].set(x.astype(jnp.bfloat16)))

    def pad_w(w, rows, cols):
        return (jnp.zeros((rows, cols), jnp.bfloat16)
                .at[:w.shape[0], :w.shape[1]].set(w.astype(jnp.bfloat16)))

    def pad_row(v, cols, fill):
        return (jnp.full((1, cols), fill, jnp.float32)
                .at[:, :v.shape[1]].set(v.astype(jnp.float32)))

    w1l = pad_w(params["w1l"], f_pad, h_pad)
    w1r = pad_w(params["w1r"], f_pad, h_pad)
    b1l = pad_row(params["b1l"], h_pad, 0.0)
    bn_scale = pad_row(params["bn_scale"], h_pad, 1.0)
    bn_shift = pad_row(params["bn_shift"], h_pad, 0.0)
    w2l = pad_w(params["w2l"], h_pad, h_pad)
    w2r = pad_w(params["w2r"], h_pad, h_pad)
    b2l = pad_row(params["b2l"], h_pad, 0.0)

    # ---- SAGEConv 1 linear (proj1, rootb1) -----------------------------------
    proj1, rootb1 = sage_linear(x_bf, w1l, w1r, b1l, tm=tm, tkf=tkf)

    # ---- SAGEConv 1 aggregation + transition, fused with SAGEConv 2 linear ---
    proj2, rootb2 = sage1_fused(adj_i8, proj1, rootb1, inv_deg,
                                bn_scale, bn_shift, w2l, w2r, b2l,
                                tm=tm, tk=tk)

    # ---- SAGEConv 2 aggregation + L2-normalize -------------------------------
    out = sage2_aggregate(adj_i8, proj2, rootb2, inv_deg, tm=tm, tk=tk)

    return out[:n, :nhid]


# ---------------------------------------------------------------------------
# Pure-JAX f32 reference (same eval-mode semantics) for a sanity check.
# ---------------------------------------------------------------------------
def nifty_forward_ref(x, edge_index, params):
    n = x.shape[0]
    src, dst = edge_index[0], edge_index[1]
    a = jnp.zeros((n, n), jnp.float32).at[dst, src].add(1.0)
    deg = jnp.sum(a, axis=1, keepdims=True)
    adj = a / jnp.maximum(deg, 1.0)

    def sage_layer(h, wl, bl, wr):
        out = adj @ (h @ wl) + bl + h @ wr
        nrm = jnp.sqrt(jnp.sum(out * out, axis=-1, keepdims=True))
        return out / jnp.maximum(nrm, 1e-12)

    h = sage_layer(x, params["w1l"], params["b1l"], params["w1r"])
    h = jnp.maximum(h, 0.0) * params["bn_scale"] + params["bn_shift"]
    return sage_layer(h, params["w2l"], params["b2l"], params["w2r"])


def xavier_uniform(key, fan_in, fan_out):
    limit = (6.0 / (fan_in + fan_out)) ** 0.5
    # stored as [in, out] so kernels use x @ W directly
    return jax.random.uniform(key, (fan_in, fan_out), jnp.float32, -limit, limit)


def init_params(key, nfeat, nhid):
    k = jax.random.split(key, 4)
    eps = 1e-5
    gamma = jnp.ones((1, nhid), jnp.float32)
    beta = jnp.zeros((1, nhid), jnp.float32)
    run_var = jnp.ones((1, nhid), jnp.float32)
    run_mean = jnp.zeros((1, nhid), jnp.float32)
    bn_scale = gamma / jnp.sqrt(run_var + eps)
    bn_shift = beta - run_mean * bn_scale
    return {
        # SAGEConv1: lin_l (has bias), lin_r (no bias)
        "w1l": xavier_uniform(k[0], nfeat, nhid),
        "b1l": jnp.zeros((1, nhid), jnp.float32),
        "w1r": xavier_uniform(k[1], nfeat, nhid),
        # transition BatchNorm1d folded (eval mode, running stats)
        "bn_scale": bn_scale,
        "bn_shift": bn_shift,
        # SAGEConv2
        "w2l": xavier_uniform(k[2], nhid, nhid),
        "b2l": jnp.zeros((1, nhid), jnp.float32),
        "w2r": xavier_uniform(k[3], nhid, nhid),
    }


if __name__ == "__main__":
    key = jax.random.PRNGKey(0)
    k_x, k_e, k_p = jax.random.split(key, 3)

    N, nfeat, nhid, E = 16, 32, 32, 48
    x = jax.random.normal(k_x, (N, nfeat), jnp.float32)
    edge_index = jax.random.randint(k_e, (2, E), 0, N, jnp.int32)
    params = init_params(k_p, nfeat, nhid)

    out = jax.jit(nifty_forward)(x, edge_index, params)
    out = jax.block_until_ready(out)
    assert out.shape == (N, nhid)
    assert bool(jnp.all(jnp.isfinite(out)))

    ref = nifty_forward_ref(x, edge_index, params)
    max_err = float(jnp.max(jnp.abs(out - ref)))
    assert max_err < 5e-2, f"mismatch vs f32 reference: {max_err}"

    print("KERNEL_OK")
</pallas_src>

<mosaic_0001>
module attributes {stable_mosaic.version = 11 : i64} {
  func.func @sage_linear_kernel(%arg0: i32, %arg1: i32, %arg2: memref<256x128xbf16, #tpu.memory_space<vmem>>, %arg3: memref<128x128xbf16, #tpu.memory_space<vmem>>, %arg4: memref<128x128xbf16, #tpu.memory_space<vmem>>, %arg5: memref<1x128xf32, #tpu.memory_space<vmem>>, %arg6: memref<256x128xbf16, #tpu.memory_space<vmem>>, %arg7: memref<256x128xbf16, #tpu.memory_space<vmem>>, %arg8: memref<256x128xf32, #tpu.memory_space<vmem>>, %arg9: memref<256x128xf32, #tpu.memory_space<vmem>>) attributes {dimension_semantics = [#tpu.dimension_semantics<parallel>, #tpu.dimension_semantics<arbitrary>], iteration_bounds = array<i64: 1, 1>, scalar_prefetch = 0 : i64, scratch_operands = 2 : i64, tpu.core_type = #tpu.core_type<tc>, window_params = [{transform_indices = @transform_0, window_bounds = array<i64: 256, 128>}, {transform_indices = @transform_1, window_bounds = array<i64: 128, 128>}, {transform_indices = @transform_2, window_bounds = array<i64: 128, 128>}, {pipeline_mode = #tpu.pipeline_mode<synchronous>, transform_indices = @transform_3, window_bounds = array<i64: 1, 128>}, {transform_indices = @transform_4, window_bounds = array<i64: 256, 128>}, {transform_indices = @transform_5, window_bounds = array<i64: 256, 128>}]} {
    %c0_i32 = arith.constant 0 : i32
    %0 = arith.cmpi eq, %arg1, %c0_i32 : i32
    %1 = arith.extui %0 : i1 to i32
    %c0_i32_0 = arith.constant 0 : i32
    %2 = arith.cmpi ne, %1, %c0_i32_0 : i32
    scf.if %2 {
      %cst_17 = arith.constant 0.000000e+00 : f32
      %17 = vector.broadcast %cst_17 : f32 to vector<256x128xf32>
      %c0_18 = arith.constant 0 : index
      %c0_19 = arith.constant 0 : index
      %18 = vector.load %arg8[%c0_18, %c0_19] : memref<256x128xf32, #tpu.memory_space<vmem>>, vector<256x128xf32>
      tpu.vector_store %arg8[%c0_18, %c0_19], %17 {strides = array<i32>} : memref<256x128xf32, #tpu.memory_space<vmem>>, vector<256x128xf32>,
      %cst_20 = arith.constant 0.000000e+00 : f32
      %19 = vector.broadcast %cst_20 : f32 to vector<256x128xf32>
      %c0_21 = arith.constant 0 : index
      %c0_22 = arith.constant 0 : index
      %20 = vector.load %arg9[%c0_21, %c0_22] : memref<256x128xf32, #tpu.memory_space<vmem>>, vector<256x128xf32>
      tpu.vector_store %arg9[%c0_21, %c0_22], %19 {strides = array<i32>} : memref<256x128xf32, #tpu.memory_space<vmem>>, vector<256x128xf32>,
    } else {
    }
    %c0 = arith.constant 0 : index
    %c0_1 = arith.constant 0 : index
    %3 = vector.load %arg2[%c0, %c0_1] : memref<256x128xbf16, #tpu.memory_space<vmem>>, vector<256x128xbf16>
    %c0_2 = arith.constant 0 : index
    %c0_3 = arith.constant 0 : index
    %4 = vector.load %arg8[%c0_2, %c0_3] : memref<256x128xf32, #tpu.memory_space<vmem>>, vector<256x128xf32>
    %c0_4 = arith.constant 0 : index
    %c0_5 = arith.constant 0 : index
    %5 = vector.load %arg3[%c0_4, %c0_5] : memref<128x128xbf16, #tpu.memory_space<vmem>>, vector<128x128xbf16>
    %cst = arith.constant dense<0.000000e+00> : vector<256x128xf32>
    %6 = tpu.matmul %3, %5, %cst {dimension_numbers = #tpu.dot_dimension_numbers<[1], [0], [0], [1], [0, 0, 1, 1], [], []>} : vector<256x128xbf16>, vector<128x128xbf16>, vector<256x128xf32> -> vector<256x128xf32>
    %7 = arith.addf %4, %6 : vector<256x128xf32>
    %c0_6 = arith.constant 0 : index
    %c0_7 = arith.constant 0 : index
    %8 = vector.load %arg8[%c0_6, %c0_7] : memref<256x128xf32, #tpu.memory_space<vmem>>, vector<256x128xf32>
    tpu.vector_store %arg8[%c0_6, %c0_7], %7 {strides = array<i32>} : memref<256x128xf32, #tpu.memory_space<vmem>>, vector<256x128xf32>,
    %c0_8 = arith.constant 0 : index
    %c0_9 = arith.constant 0 : index
    %9 = vector.load %arg9[%c0_8, %c0_9] : memref<256x128xf32, #tpu.memory_space<vmem>>, vector<256x128xf32>
    %c0_10 = arith.constant 0 : index
    %c0_11 = arith.constant 0 : index
    %10 = vector.load %arg4[%c0_10, %c0_11] : memref<128x128xbf16, #tpu.memory_space<vmem>>, vector<128x128xbf16>
    %cst_12 = arith.constant dense<0.000000e+00> : vector<256x128xf32>
    %11 = tpu.matmul %3, %10, %cst_12 {dimension_numbers = #tpu.dot_dimension_numbers<[1], [0], [0], [1], [0, 0, 1, 1], [], []>} : vector<256x128xbf16>, vector<128x128xbf16>, vector<256x128xf32> -> vector<256x128xf32>
    %12 = arith.addf %9, %11 : vector<256x128xf32>
    %c0_13 = arith.constant 0 : index
    %c0_14 = arith.constant 0 : index
    %13 = vector.load %arg9[%c0_13, %c0_14] : memref<256x128xf32, #tpu.memory_space<vmem>>, vector<256x128xf32>
    tpu.vector_store %arg9[%c0_13, %c0_14], %12 {strides = array<i32>} : memref<256x128xf32, #tpu.memory_space<vmem>>, vector<256x128xf32>,
    %c0_i32_15 = arith.constant 0 : i32
    %14 = arith.cmpi eq, %arg1, %c0_i32_15 : i32
    %15 = arith.extui %14 : i1 to i32
    %c0_i32_16 = arith.constant 0 : i32
    %16 = arith.cmpi ne, %15, %c0_i32_16 : i32
    scf.if %16 {
      %c0_17 = arith.constant 0 : index
      %c0_18 = arith.constant 0 : index
      %17 = vector.load %arg8[%c0_17, %c0_18] : memref<256x128xf32, #tpu.memory_space<vmem>>, vector<256x128xf32>
      %18 = arith.truncf %17 : vector<256x128xf32> to vector<256x128xbf16>
      %c0_19 = arith.constant 0 : index
      %c0_20 = arith.constant 0 : index
      %19 = vector.load %arg6[%c0_19, %c0_20] : memref<256x128xbf16, #tpu.memory_space<vmem>>, vector<256x128xbf16>
      tpu.vector_store %arg6[%c0_19, %c0_20], %18 {strides = array<i32>} : memref<256x128xbf16, #tpu.memory_space<vmem>>, vector<256x128xbf16>,
      %c0_21 = arith.constant 0 : index
      %c0_22 = arith.constant 0 : index
      %20 = vector.load %arg9[%c0_21, %c0_22] : memref<256x128xf32, #tpu.memory_space<vmem>>, vector<256x128xf32>
      %c0_23 = arith.constant 0 : index
      %c0_24 = arith.constant 0 : index
      %21 = vector.load %arg5[%c0_23, %c0_24] : memref<1x128xf32, #tpu.memory_space<vmem>>, vector<1x128xf32>
      %22 = vector.broadcast %21 : vector<1x128xf32> to vector<256x128xf32>
      %23 = arith.addf %20, %22 : vector<256x128xf32>
      %24 = arith.truncf %23 : vector<256x128xf32> to vector<256x128xbf16>
      %c0_25 = arith.constant 0 : index
      %c0_26 = arith.constant 0 : index
      %25 = vector.load %arg7[%c0_25, %c0_26] : memref<256x128xbf16, #tpu.memory_space<vmem>>, vector<256x128xbf16>
      tpu.vector_store %arg7[%c0_25, %c0_26], %24 {strides = array<i32>} : memref<256x128xbf16, #tpu.memory_space<vmem>>, vector<256x128xbf16>,
    } else {
    }
    return
  }
  func.func @transform_0(%arg0: i32, %arg1: i32) -> (i32, i32) {
    %c0_i32 = arith.constant 0 : i32
    return %arg0, %arg1 : i32, i32
  }
  func.func @transform_1(%arg0: i32, %arg1: i32) -> (i32, i32) {
    %c0_i32 = arith.constant 0 : i32
    %c0_i32_0 = arith.constant 0 : i32
    return %arg1, %c0_i32 : i32, i32
  }
  func.func @transform_2(%arg0: i32, %arg1: i32) -> (i32, i32) {
    %c0_i32 = arith.constant 0 : i32
    %c0_i32_0 = arith.constant 0 : i32
    return %arg1, %c0_i32 : i32, i32
  }
  func.func @transform_3(%arg0: i32, %arg1: i32) -> (i32, i32) {
    %c0_i32 = arith.constant 0 : i32
    %c0_i32_0 = arith.constant 0 : i32
    %c0_i32_1 = arith.constant 0 : i32
    return %c0_i32, %c0_i32_0 : i32, i32
  }
  func.func @transform_4(%arg0: i32, %arg1: i32) -> (i32, i32) {
    %c0_i32 = arith.constant 0 : i32
    %c0_i32_0 = arith.constant 0 : i32
    return %arg0, %c0_i32 : i32, i32
  }
  func.func @transform_5(%arg0: i32, %arg1: i32) -> (i32, i32) {
    %c0_i32 = arith.constant 0 : i32
    %c0_i32_0 = arith.constant 0 : i32
    return %arg0, %c0_i32 : i32, i32
  }
}

module attributes {stable_mosaic.version = 11 : i64} {
  func.func @sage1_fused_kernel(%arg0: i32, %arg1: i32, %arg2: memref<256x256xi8, #tpu.memory_space<vmem>>, %arg3: memref<256x128xbf16, #tpu.memory_space<vmem>>, %arg4: memref<256x128xbf16, #tpu.memory_space<vmem>>, %arg5: memref<256x1xf32, #tpu.memory_space<vmem>>, %arg6: memref<1x128xf32, #tpu.memory_space<vmem>>, %arg7: memref<1x128xf32, #tpu.memory_space<vmem>>, %arg8: memref<128x128xbf16, #tpu.memory_space<vmem>>, %arg9: memref<128x128xbf16, #tpu.memory_space<vmem>>, %arg10: memref<1x128xf32, #tpu.memory_space<vmem>>, %arg11: memref<256x128xbf16, #tpu.memory_space<vmem>>, %arg12: memref<256x128xbf16, #tpu.memory_space<vmem>>, %arg13: memref<256x128xf32, #tpu.memory_space<vmem>>) attributes {dimension_semantics = [#tpu.dimension_semantics<parallel>, #tpu.dimension_semantics<arbitrary>], iteration_bounds = array<i64: 1, 1>, scalar_prefetch = 0 : i64, scratch_operands = 1 : i64, tpu.core_type = #tpu.core_type<tc>, window_params = [{transform_indices = @transform_0, window_bounds = array<i64: 256, 256>}, {transform_indices = @transform_1, window_bounds = array<i64: 256, 128>}, {transform_indices = @transform_2, window_bounds = array<i64: 256, 128>}, {transform_indices = @transform_3, window_bounds = array<i64: 256, 1>}, {pipeline_mode = #tpu.pipeline_mode<synchronous>, transform_indices = @transform_4, window_bounds = array<i64: 1, 128>}, {pipeline_mode = #tpu.pipeline_mode<synchronous>, transform_indices = @transform_5, window_bounds = array<i64: 1, 128>}, {pipeline_mode = #tpu.pipeline_mode<synchronous>, transform_indices = @transform_6, window_bounds = array<i64: 128, 128>}, {pipeline_mode = #tpu.pipeline_mode<synchronous>, transform_indices = @transform_7, window_bounds = array<i64: 128, 128>}, {pipeline_mode = #tpu.pipeline_mode<synchronous>, transform_indices = @transform_8, window_bounds = array<i64: 1, 128>}, {transform_indices = @transform_9, window_bounds = array<i64: 256, 128>}, {transform_indices = @transform_10, window_bounds = array<i64: 256, 128>}]} {
    %c0_i32 = arith.constant 0 : i32
    %0 = arith.cmpi eq, %arg1, %c0_i32 : i32
    %1 = arith.extui %0 : i1 to i32
    %c0_i32_0 = arith.constant 0 : i32
    %2 = arith.cmpi ne, %1, %c0_i32_0 : i32
    scf.if %2 {
      %cst_10 = arith.constant 0.000000e+00 : f32
      %13 = vector.broadcast %cst_10 : f32 to vector<256x128xf32>
      %c0_11 = arith.constant 0 : index
      %c0_12 = arith.constant 0 : index
      %14 = vector.load %arg13[%c0_11, %c0_12] : memref<256x128xf32, #tpu.memory_space<vmem>>, vector<256x128xf32>
      tpu.vector_store %arg13[%c0_11, %c0_12], %13 {strides = array<i32>} : memref<256x128xf32, #tpu.memory_space<vmem>>, vector<256x128xf32>,
    } else {
    }
    %c0 = arith.constant 0 : index
    %c0_1 = arith.constant 0 : index
    %3 = vector.load %arg13[%c0, %c0_1] : memref<256x128xf32, #tpu.memory_space<vmem>>, vector<256x128xf32>
    %c0_2 = arith.constant 0 : index
    %c0_3 = arith.constant 0 : index
    %4 = vector.load %arg2[%c0_2, %c0_3] : memref<256x256xi8, #tpu.memory_space<vmem>>, vector<256x256xi8>
    %5 = arith.sitofp %4 : vector<256x256xi8> to vector<256x256xbf16>
    %c0_4 = arith.constant 0 : index
    %c0_5 = arith.constant 0 : index
    %6 = vector.load %arg3[%c0_4, %c0_5] : memref<256x128xbf16, #tpu.memory_space<vmem>>, vector<256x128xbf16>
    %cst = arith.constant dense<0.000000e+00> : vector<256x128xf32>
    %7 = tpu.matmul %5, %6, %cst {dimension_numbers = #tpu.dot_dimension_numbers<[1], [0], [0], [1], [0, 0, 1, 1], [], []>} : vector<256x256xbf16>, vector<256x128xbf16>, vector<256x128xf32> -> vector<256x128xf32>
    %8 = arith.addf %3, %7 : vector<256x128xf32>
    %c0_6 = arith.constant 0 : index
    %c0_7 = arith.constant 0 : index
    %9 = vector.load %arg13[%c0_6, %c0_7] : memref<256x128xf32, #tpu.memory_space<vmem>>, vector<256x128xf32>
    tpu.vector_store %arg13[%c0_6, %c0_7], %8 {strides = array<i32>} : memref<256x128xf32, #tpu.memory_space<vmem>>, vector<256x128xf32>,
    %c0_i32_8 = arith.constant 0 : i32
    %10 = arith.cmpi eq, %arg1, %c0_i32_8 : i32
    %11 = arith.extui %10 : i1 to i32
    %c0_i32_9 = arith.constant 0 : i32
    %12 = arith.cmpi ne, %11, %c0_i32_9 : i32
    scf.if %12 {
      %c0_10 = arith.constant 0 : index
      %c0_11 = arith.constant 0 : index
      %13 = vector.load %arg4[%c0_10, %c0_11] : memref<256x128xbf16, #tpu.memory_space<vmem>>, vector<256x128xbf16>
      %14 = arith.extf %13 : vector<256x128xbf16> to vector<256x128xf32>
      %c0_12 = arith.constant 0 : index
      %c0_13 = arith.constant 0 : index
      %15 = vector.load %arg5[%c0_12, %c0_13] : memref<256x1xf32, #tpu.memory_space<vmem>>, vector<256x1xf32>
      %c0_14 = arith.constant 0 : index
      %c0_15 = arith.constant 0 : index
      %16 = vector.load %arg13[%c0_14, %c0_15] : memref<256x128xf32, #tpu.memory_space<vmem>>, vector<256x128xf32>
      %17 = vector.broadcast %15 : vector<256x1xf32> to vector<256x128xf32>
      %18 = arith.mulf %17, %16 : vector<256x128xf32>
      %19 = arith.addf %14, %18 : vector<256x128xf32>
      %20 = arith.mulf %19, %19 : vector<256x128xf32>
      %cst_16 = arith.constant dense<0.000000e+00> : vector<256xf32>
      %21 = vector.multi_reduction <add>, %20, %cst_16 [1] : vector<256x128xf32> to vector<256xf32>
      %22 = vector.shape_cast %21 : vector<256xf32> to vector<256x1xf32>
      %cst_17 = arith.constant 1.000000e-24 : f32
      %23 = vector.broadcast %cst_17 : f32 to vector<256x1xf32>
      %24 = arith.maximumf %22, %23 : vector<256x1xf32>
      %25 = math.rsqrt %24 : vector<256x1xf32>
      %26 = vector.broadcast %25 : vector<256x1xf32> to vector<256x128xf32>
      %27 = arith.mulf %19, %26 : vector<256x128xf32>
      %cst_18 = arith.constant 0.000000e+00 : f32
      %28 = vector.broadcast %cst_18 : f32 to vector<256x128xf32>
      %29 = arith.maximumf %27, %28 : vector<256x128xf32>
      %c0_19 = arith.constant 0 : index
      %c0_20 = arith.constant 0 : index
      %30 = vector.load %arg6[%c0_19, %c0_20] : memref<1x128xf32, #tpu.memory_space<vmem>>, vector<1x128xf32>
      %31 = vector.broadcast %30 : vector<1x128xf32> to vector<256x128xf32>
      %32 = arith.mulf %29, %31 : vector<256x128xf32>
      %c0_21 = arith.constant 0 : index
      %c0_22 = arith.constant 0 : index
      %33 = vector.load %arg7[%c0_21, %c0_22] : memref<1x128xf32, #tpu.memory_space<vmem>>, vector<1x128xf32>
      %34 = vector.broadcast %33 : vector<1x128xf32> to vector<256x128xf32>
      %35 = arith.addf %32, %34 : vector<256x128xf32>
      %36 = arith.truncf %35 : vector<256x128xf32> to vector<256x128xbf16>
      %c0_23 = arith.constant 0 : index
      %c0_24 = arith.constant 0 : index
      %37 = vector.load %arg8[%c0_23, %c0_24] : memref<128x128xbf16, #tpu.memory_space<vmem>>, vector<128x128xbf16>
      %cst_25 = arith.constant dense<0.000000e+00> : vector<256x128xf32>
      %38 = tpu.matmul %36, %37, %cst_25 {dimension_numbers = #tpu.dot_dimension_numbers<[1], [0], [0], [1], [0, 0, 1, 1], [], []>} : vector<256x128xbf16>, vector<128x128xbf16>, vector<256x128xf32> -> vector<256x128xf32>
      %39 = arith.truncf %38 : vector<256x128xf32> to vector<256x128xbf16>
      %c0_26 = arith.constant 0 : index
      %c0_27 = arith.constant 0 : index
      %40 = vector.load %arg11[%c0_26, %c0_27] : memref<256x128xbf16, #tpu.memory_space<vmem>>, vector<256x128xbf16>
      tpu.vector_store %arg11[%c0_26, %c0_27], %39 {strides = array<i32>} : memref<256x128xbf16, #tpu.memory_space<vmem>>, vector<256x128xbf16>,
      %c0_28 = arith.constant 0 : index
      %c0_29 = arith.constant 0 : index
      %41 = vector.load %arg9[%c0_28, %c0_29] : memref<128x128xbf16, #tpu.memory_space<vmem>>, vector<128x128xbf16>
      %cst_30 = arith.constant dense<0.000000e+00> : vector<256x128xf32>
      %42 = tpu.matmul %36, %41, %cst_30 {dimension_numbers = #tpu.dot_dimension_numbers<[1], [0], [0], [1], [0, 0, 1, 1], [], []>} : vector<256x128xbf16>, vector<128x128xbf16>, vector<256x128xf32> -> vector<256x128xf32>
      %c0_31 = arith.constant 0 : index
      %c0_32 = arith.constant 0 : index
      %43 = vector.load %arg10[%c0_31, %c0_32] : memref<1x128xf32, #tpu.memory_space<vmem>>, vector<1x128xf32>
      %44 = vector.broadcast %43 : vector<1x128xf32> to vector<256x128xf32>
      %45 = arith.addf %42, %44 : vector<256x128xf32>
      %46 = arith.truncf %45 : vector<256x128xf32> to vector<256x128xbf16>
      %c0_33 = arith.constant 0 : index
      %c0_34 = arith.constant 0 : index
      %47 = vector.load %arg12[%c0_33, %c0_34] : memref<256x128xbf16, #tpu.memory_space<vmem>>, vector<256x128xbf16>
      tpu.vector_store %arg12[%c0_33, %c0_34], %46 {strides = array<i32>} : memref<256x128xbf16, #tpu.memory_space<vmem>>, vector<256x128xbf16>,
    } else {
    }
    return
  }
  func.func @transform_0(%arg0: i32, %arg1: i32) -> (i32, i32) {
    %c0_i32 = arith.constant 0 : i32
    return %arg0, %arg1 : i32, i32
  }
  func.func @transform_1(%arg0: i32, %arg1: i32) -> (i32, i32) {
    %c0_i32 = arith.constant 0 : i32
    %c0_i32_0 = arith.constant 0 : i32
    return %arg1, %c0_i32 : i32, i32
  }
  func.func @transform_2(%arg0: i32, %arg1: i32) -> (i32, i32) {
    %c0_i32 = arith.constant 0 : i32
    %c0_i32_0 = arith.constant 0 : i32
    return %arg0, %c0_i32 : i32, i32
  }
  func.func @transform_3(%arg0: i32, %arg1: i32) -> (i32, i32) {
    %c0_i32 = arith.constant 0 : i32
    %c0_i32_0 = arith.constant 0 : i32
    return %arg0, %c0_i32 : i32, i32
  }
  func.func @transform_4(%arg0: i32, %arg1: i32) -> (i32, i32) {
    %c0_i32 = arith.constant 0 : i32
    %c0_i32_0 = arith.constant 0 : i32
    %c0_i32_1 = arith.constant 0 : i32
    return %c0_i32, %c0_i32_0 : i32, i32
  }
  func.func @transform_5(%arg0: i32, %arg1: i32) -> (i32, i32) {
    %c0_i32 = arith.constant 0 : i32
    %c0_i32_0 = arith.constant 0 : i32
    %c0_i32_1 = arith.constant 0 : i32
    return %c0_i32, %c0_i32_0 : i32, i32
  }
  func.func @transform_6(%arg0: i32, %arg1: i32) -> (i32, i32) {
    %c0_i32 = arith.constant 0 : i32
    %c0_i32_0 = arith.constant 0 : i32
    %c0_i32_1 = arith.constant 0 : i32
    return %c0_i32, %c0_i32_0 : i32, i32
  }
  func.func @transform_7(%arg0: i32, %arg1: i32) -> (i32, i32) {
    %c0_i32 = arith.constant 0 : i32
    %c0_i32_0 = arith.constant 0 : i32
    %c0_i32_1 = arith.constant 0 : i32
    return %c0_i32, %c0_i32_0 : i32, i32
  }
  func.func @transform_8(%arg0: i32, %arg1: i32) -> (i32, i32) {
    %c0_i32 = arith.constant 0 : i32
    %c0_i32_0 = arith.constant 0 : i32
    %c0_i32_1 = arith.constant 0 : i32
    return %c0_i32, %c0_i32_0 : i32, i32
  }
  func.func @transform_9(%arg0: i32, %arg1: i32) -> (i32, i32) {
    %c0_i32 = arith.constant 0 : i32
    %c0_i32_0 = arith.constant 0 : i32
    return %arg0, %c0_i32 : i32, i32
  }
  func.func @transform_10(%arg0: i32, %arg1: i32) -> (i32, i32) {
    %c0_i32 = arith.constant 0 : i32
    %c0_i32_0 = arith.constant 0 : i32
    return %arg0, %c0_i32 : i32, i32
  }
}

module attributes {stable_mosaic.version = 11 : i64} {
  func.func @sage2_aggregate_kernel(%arg0: i32, %arg1: i32, %arg2: memref<256x256xi8, #tpu.memory_space<vmem>>, %arg3: memref<256x128xbf16, #tpu.memory_space<vmem>>, %arg4: memref<256x128xbf16, #tpu.memory_space<vmem>>, %arg5: memref<256x1xf32, #tpu.memory_space<vmem>>, %arg6: memref<256x128xf32, #tpu.memory_space<vmem>>, %arg7: memref<256x128xf32, #tpu.memory_space<vmem>>) attributes {dimension_semantics = [#tpu.dimension_semantics<parallel>, #tpu.dimension_semantics<arbitrary>], iteration_bounds = array<i64: 1, 1>, scalar_prefetch = 0 : i64, scratch_operands = 1 : i64, tpu.core_type = #tpu.core_type<tc>, window_params = [{transform_indices = @transform_0, window_bounds = array<i64: 256, 256>}, {transform_indices = @transform_1, window_bounds = array<i64: 256, 128>}, {transform_indices = @transform_2, window_bounds = array<i64: 256, 128>}, {transform_indices = @transform_3, window_bounds = array<i64: 256, 1>}, {transform_indices = @transform_4, window_bounds = array<i64: 256, 128>}]} {
    %c0_i32 = arith.constant 0 : i32
    %0 = arith.cmpi eq, %arg1, %c0_i32 : i32
    %1 = arith.extui %0 : i1 to i32
    %c0_i32_0 = arith.constant 0 : i32
    %2 = arith.cmpi ne, %1, %c0_i32_0 : i32
    scf.if %2 {
      %cst_10 = arith.constant 0.000000e+00 : f32
      %13 = vector.broadcast %cst_10 : f32 to vector<256x128xf32>
      %c0_11 = arith.constant 0 : index
      %c0_12 = arith.constant 0 : index
      %14 = vector.load %arg7[%c0_11, %c0_12] : memref<256x128xf32, #tpu.memory_space<vmem>>, vector<256x128xf32>
      tpu.vector_store %arg7[%c0_11, %c0_12], %13 {strides = array<i32>} : memref<256x128xf32, #tpu.memory_space<vmem>>, vector<256x128xf32>,
    } else {
    }
    %c0 = arith.constant 0 : index
    %c0_1 = arith.constant 0 : index
    %3 = vector.load %arg7[%c0, %c0_1] : memref<256x128xf32, #tpu.memory_space<vmem>>, vector<256x128xf32>
    %c0_2 = arith.constant 0 : index
    %c0_3 = arith.constant 0 : index
    %4 = vector.load %arg2[%c0_2, %c0_3] : memref<256x256xi8, #tpu.memory_space<vmem>>, vector<256x256xi8>
    %5 = arith.sitofp %4 : vector<256x256xi8> to vector<256x256xbf16>
    %c0_4 = arith.constant 0 : index
    %c0_5 = arith.constant 0 : index
    %6 = vector.load %arg3[%c0_4, %c0_5] : memref<256x128xbf16, #tpu.memory_space<vmem>>, vector<256x128xbf16>
    %cst = arith.constant dense<0.000000e+00> : vector<256x128xf32>
    %7 = tpu.matmul %5, %6, %cst {dimension_numbers = #tpu.dot_dimension_numbers<[1], [0], [0], [1], [0, 0, 1, 1], [], []>} : vector<256x256xbf16>, vector<256x128xbf16>, vector<256x128xf32> -> vector<256x128xf32>
    %8 = arith.addf %3, %7 : vector<256x128xf32>
    %c0_6 = arith.constant 0 : index
    %c0_7 = arith.constant 0 : index
    %9 = vector.load %arg7[%c0_6, %c0_7] : memref<256x128xf32, #tpu.memory_space<vmem>>, vector<256x128xf32>
    tpu.vector_store %arg7[%c0_6, %c0_7], %8 {strides = array<i32>} : memref<256x128xf32, #tpu.memory_space<vmem>>, vector<256x128xf32>,
    %c0_i32_8 = arith.constant 0 : i32
    %10 = arith.cmpi eq, %arg1, %c0_i32_8 : i32
    %11 = arith.extui %10 : i1 to i32
    %c0_i32_9 = arith.constant 0 : i32
    %12 = arith.cmpi ne, %11, %c0_i32_9 : i32
    scf.if %12 {
      %c0_10 = arith.constant 0 : index
      %c0_11 = arith.constant 0 : index
      %13 = vector.load %arg4[%c0_10, %c0_11] : memref<256x128xbf16, #tpu.memory_space<vmem>>, vector<256x128xbf16>
      %14 = arith.extf %13 : vector<256x128xbf16> to vector<256x128xf32>
      %c0_12 = arith.constant 0 : index
      %c0_13 = arith.constant 0 : index
      %15 = vector.load %arg5[%c0_12, %c0_13] : memref<256x1xf32, #tpu.memory_space<vmem>>, vector<256x1xf32>
      %c0_14 = arith.constant 0 : index
      %c0_15 = arith.constant 0 : index
      %16 = vector.load %arg7[%c0_14, %c0_15] : memref<256x128xf32, #tpu.memory_space<vmem>>, vector<256x128xf32>
      %17 = vector.broadcast %15 : vector<256x1xf32> to vector<256x128xf32>
      %18 = arith.mulf %17, %16 : vector<256x128xf32>
      %19 = arith.addf %14, %18 : vector<256x128xf32>
      %20 = arith.mulf %19, %19 : vector<256x128xf32>
      %cst_16 = arith.constant dense<0.000000e+00> : vector<256xf32>
      %21 = vector.multi_reduction <add>, %20, %cst_16 [1] : vector<256x128xf32> to vector<256xf32>
      %22 = vector.shape_cast %21 : vector<256xf32> to vector<256x1xf32>
      %cst_17 = arith.constant 1.000000e-24 : f32
      %23 = vector.broadcast %cst_17 : f32 to vector<256x1xf32>
      %24 = arith.maximumf %22, %23 : vector<256x1xf32>
      %25 = math.rsqrt %24 : vector<256x1xf32>
      %26 = vector.broadcast %25 : vector<256x1xf32> to vector<256x128xf32>
      %27 = arith.mulf %19, %26 : vector<256x128xf32>
      %c0_18 = arith.constant 0 : index
      %c0_19 = arith.constant 0 : index
      %28 = vector.load %arg6[%c0_18, %c0_19] : memref<256x128xf32, #tpu.memory_space<vmem>>, vector<256x128xf32>
      tpu.vector_store %arg6[%c0_18, %c0_19], %27 {strides = array<i32>} : memref<256x128xf32, #tpu.memory_space<vmem>>, vector<256x128xf32>,
    } else {
    }
    return
  }
  func.func @transform_0(%arg0: i32, %arg1: i32) -> (i32, i32) {
    %c0_i32 = arith.constant 0 : i32
    return %arg0, %arg1 : i32, i32
  }
  func.func @transform_1(%arg0: i32, %arg1: i32) -> (i32, i32) {
    %c0_i32 = arith.constant 0 : i32
    %c0_i32_0 = arith.constant 0 : i32
    return %arg1, %c0_i32 : i32, i32
  }
  func.func @transform_2(%arg0: i32, %arg1: i32) -> (i32, i32) {
    %c0_i32 = arith.constant 0 : i32
    %c0_i32_0 = arith.constant 0 : i32
    return %arg0, %c0_i32 : i32, i32
  }
  func.func @transform_3(%arg0: i32, %arg1: i32) -> (i32, i32) {
    %c0_i32 = arith.constant 0 : i32
    %c0_i32_0 = arith.constant 0 : i32
    return %arg0, %c0_i32 : i32, i32
  }
  func.func @transform_4(%arg0: i32, %arg1: i32) -> (i32, i32) {
    %c0_i32 = arith.constant 0 : i32
    %c0_i32_0 = arith.constant 0 : i32
    return %arg0, %c0_i32 : i32, i32
  }
}

</mosaic_0001>

<llo_original>
// kernel: nifty_forward.3
$region0: #{nifty_forward.3}
  #allocation0 [shape = 'u32[]', space=smem, size = 0x4, offset = 0x4, fixed_abs, tag = 'smem constant byte address 0x4 - core index']
  #allocation1 [shape = 'u32[72,128]{1,0:T(1,128)}', space=vmem, size = 0x9000, scoped, tag = 'internal scratch']
  #allocation2 [shape = 'f32[256,128]{1,0:T(8,128)}', space=vmem, size = 0x20000, scoped, tag = 'scratch operand']
  #allocation3 [shape = 'f32[256,128]{1,0:T(8,128)}', space=vmem, size = 0x20000, scoped, tag = 'scratch operand']
  %s0 = inlined_call_operand.vmem [shape: bf16[256,128], index: 0, kind: input, shape index: {}]
  %s1 = inlined_call_operand.vmem [shape: bf16[128,128], index: 1, kind: input, shape index: {}]
  %s2 = inlined_call_operand.vmem [shape: bf16[128,128], index: 2, kind: input, shape index: {}]
  %s3 = inlined_call_operand.vmem [shape: f32[1,128], index: 3, kind: input, shape index: {}]
  %s4 = inlined_call_operand.vmem [shape: bf16[256,128], index: 4, kind: output, shape index: {0}]
  %s5 = inlined_call_operand.vmem [shape: bf16[256,128], index: 5, kind: output, shape index: {1}]
  %6 = xla_tuple %s4, %s5
  %s7 = sld [smem:[#allocation0]]
  $region42: #{nifty_forward.3} parent=0
    _
  %s9 = ssub.s32 1, %s7
  %s10 = scalar_select 0, %s9, %s7
  // Predicated region
  $region2: #{nifty_forward.3} parent=0 // pred_check
    _
  $region3: #{nifty_forward.3} parent=0 // pred_check_branch
    %12 = sbr.rel (0) target = $region5
  $region4: #{nifty_forward.3} parent=0 // pred_region
    _
  $region5: #{nifty_forward.3} parent=0 // pred_fallthru
    _
  // Predicated region
  $region6: #{nifty_forward.3} parent=0 // pred_check
    _
  $region7: #{nifty_forward.3} parent=0 // pred_check_branch
    %14 = sbr.rel (0) target = $region9
  $region8: #{nifty_forward.3} parent=0 // pred_region
    _
  $region9: #{nifty_forward.3} parent=0 // pred_fallthru
    _
  // Predicated region
  $region10: #{nifty_forward.3} parent=0 // pred_check
    _
  $region11: #{nifty_forward.3} parent=0 // pred_check_branch
    %16 = sbr.rel (0) target = $region13
  $region12: #{nifty_forward.3} parent=0 // pred_region
    _
  $region13: #{nifty_forward.3} parent=0 // pred_fallthru
    _
  // Predicated region
  $region14: #{nifty_forward.3} parent=0 // pred_check
    _
  $region15: #{nifty_forward.3} parent=0 // pred_check_branch
    %18 = sbr.rel (0) target = $region17
  $region16: #{nifty_forward.3} parent=0 // pred_region
    _
  $region17: #{nifty_forward.3} parent=0 // pred_fallthru
    _
  %p19 = scmp.eq.s32.totalorder 0, 0
  // Predicated region
  $region18: #{nifty_forward.3} parent=0 // pred_check
    %p20 = pneg %p19
  $region19: #{nifty_forward.3} parent=0 // pred_check_branch
    %22 = sbr.rel (%p20) target = $region21
  $region20: #{nifty_forward.3} parent=0 // pred_region
    %23 = vst [vmem:[#allocation2] sm:$0xff] 0.0
    %24 = vst [vmem:[#allocation2 + $0x8] sm:$0xff] 0.0
    %25 = vst [vmem:[#allocation2 + $0x10] sm:$0xff] 0.0
    %26 = vst [vmem:[#allocation2 + $0x18] sm:$0xff] 0.0
    %27 = vst [vmem:[#allocation2 + $0x20] sm:$0xff] 0.0
    %28 = vst [vmem:[#allocation2 + $0x28] sm:$0xff] 0.0
    %29 = vst [vmem:[#allocation2 + $0x30] sm:$0xff] 0.0
    %30 = vst [vmem:[#allocation2 + $0x38] sm:$0xff] 0.0
    %31 = vst [vmem:[#allocation2 + $0x40] sm:$0xff] 0.0
    %32 = vst [vmem:[#allocation2 + $0x48] sm:$0xff] 0.0
    %33 = vst [vmem:[#allocation2 + $0x50] sm:$0xff] 0.0
    %34 = vst [vmem:[#allocation2 + $0x58] sm:$0xff] 0.0
    %35 = vst [vmem:[#allocation2 + $0x60] sm:$0xff] 0.0
    %36 = vst [vmem:[#allocation2 + $0x68] sm:$0xff] 0.0
    %37 = vst [vmem:[#allocation2 + $0x70] sm:$0xff] 0.0
    %38 = vst [vmem:[#allocation2 + $0x78] sm:$0xff] 0.0
    %39 = vst [vmem:[#allocation2 + $0x80] sm:$0xff] 0.0
    %40 = vst [vmem:[#allocation2 + $0x88] sm:$0xff] 0.0
    %41 = vst [vmem:[#allocation2 + $0x90] sm:$0xff] 0.0
    %42 = vst [vmem:[#allocation2 + $0x98] sm:$0xff] 0.0
    %43 = vst [vmem:[#allocation2 + $0xa0] sm:$0xff] 0.0
    %44 = vst [vmem:[#allocation2 + $0xa8] sm:$0xff] 0.0
    %45 = vst [vmem:[#allocation2 + $0xb0] sm:$0xff] 0.0
    %46 = vst [vmem:[#allocation2 + $0xb8] sm:$0xff] 0.0
    %47 = vst [vmem:[#allocation2 + $0xc0] sm:$0xff] 0.0
    %48 = vst [vmem:[#allocation2 + $0xc8] sm:$0xff] 0.0
    %49 = vst [vmem:[#allocation2 + $0xd0] sm:$0xff] 0.0
    %50 = vst [vmem:[#allocation2 + $0xd8] sm:$0xff] 0.0
    %51 = vst [vmem:[#allocation2 + $0xe0] sm:$0xff] 0.0
    %52 = vst [vmem:[#allocation2 + $0xe8] sm:$0xff] 0.0
    %53 = vst [vmem:[#allocation2 + $0xf0] sm:$0xff] 0.0
    %54 = vst [vmem:[#allocation2 + $0xf8] sm:$0xff] 0.0
    %55 = vst [vmem:[#allocation3] sm:$0xff] 0.0
    %56 = vst [vmem:[#allocation3 + $0x8] sm:$0xff] 0.0
    %57 = vst [vmem:[#allocation3 + $0x10] sm:$0xff] 0.0
    %58 = vst [vmem:[#allocation3 + $0x18] sm:$0xff] 0.0
    %59 = vst [vmem:[#allocation3 + $0x20] sm:$0xff] 0.0
    %60 = vst [vmem:[#allocation3 + $0x28] sm:$0xff] 0.0
    %61 = vst [vmem:[#allocation3 + $0x30] sm:$0xff] 0.0
    %62 = vst [vmem:[#allocation3 + $0x38] sm:$0xff] 0.0
    %63 = vst [vmem:[#allocation3 + $0x40] sm:$0xff] 0.0
    %64 = vst [vmem:[#allocation3 + $0x48] sm:$0xff] 0.0
    %65 = vst [vmem:[#allocation3 + $0x50] sm:$0xff] 0.0
    %66 = vst [vmem:[#allocation3 + $0x58] sm:$0xff] 0.0
    %67 = vst [vmem:[#allocation3 + $0x60] sm:$0xff] 0.0
    %68 = vst [vmem:[#allocation3 + $0x68] sm:$0xff] 0.0
    %69 = vst [vmem:[#allocation3 + $0x70] sm:$0xff] 0.0
    %70 = vst [vmem:[#allocation3 + $0x78] sm:$0xff] 0.0
    %71 = vst [vmem:[#allocation3 + $0x80] sm:$0xff] 0.0
    %72 = vst [vmem:[#allocation3 + $0x88] sm:$0xff] 0.0
    %73 = vst [vmem:[#allocation3 + $0x90] sm:$0xff] 0.0
    %74 = vst [vmem:[#allocation3 + $0x98] sm:$0xff] 0.0
    %75 = vst [vmem:[#allocation3 + $0xa0] sm:$0xff] 0.0
    %76 = vst [vmem:[#allocation3 + $0xa8] sm:$0xff] 0.0
    %77 = vst [vmem:[#allocation3 + $0xb0] sm:$0xff] 0.0
    %78 = vst [vmem:[#allocation3 + $0xb8] sm:$0xff] 0.0
    %79 = vst [vmem:[#allocation3 + $0xc0] sm:$0xff] 0.0
    %80 = vst [vmem:[#allocation3 + $0xc8] sm:$0xff] 0.0
    %81 = vst [vmem:[#allocation3 + $0xd0] sm:$0xff] 0.0
    %82 = vst [vmem:[#allocation3 + $0xd8] sm:$0xff] 0.0
    %83 = vst [vmem:[#allocation3 + $0xe0] sm:$0xff] 0.0
    %84 = vst [vmem:[#allocation3 + $0xe8] sm:$0xff] 0.0
    %85 = vst [vmem:[#allocation3 + $0xf0] sm:$0xff] 0.0
    %86 = vst [vmem:[#allocation3 + $0xf8] sm:$0xff] 0.0
  $region21: #{nifty_forward.3} parent=0 // pred_fallthru
    _
  %v87 = vld [vmem:[%s0] sm:$0xf]
  %v88 = vld [vmem:[%s0 + $0x4] sm:$0xf]
  %v89 = vld [vmem:[%s0 + $0x8] sm:$0xf]
  %v90 = vld [vmem:[%s0 + $0xc] sm:$0xf]
  %v91 = vld [vmem:[%s0 + $0x10] sm:$0xf]
  %v92 = vld [vmem:[%s0 + $0x14] sm:$0xf]
  %v93 = vld [vmem:[%s0 + $0x18] sm:$0xf]
  %v94 = vld [vmem:[%s0 + $0x1c] sm:$0xf]
  %v95 = vld [vmem:[%s0 + $0x20] sm:$0xf]
  %v96 = vld [vmem:[%s0 + $0x24] sm:$0xf]
  %v97 = vld [vmem:[%s0 + $0x28] sm:$0xf]
  %v98 = vld [vmem:[%s0 + $0x2c] sm:$0xf]
  %v99 = vld [vmem:[%s0 + $0x30] sm:$0xf]
  %v100 = vld [vmem:[%s0 + $0x34] sm:$0xf]
  %v101 = vld [vmem:[%s0 + $0x38] sm:$0xf]
  %v102 = vld [vmem:[%s0 + $0x3c] sm:$0xf]
  %v103 = vld [vmem:[%s0 + $0x40] sm:$0xf]
  %v104 = vld [vmem:[%s0 + $0x44] sm:$0xf]
  %v105 = vld [vmem:[%s0 + $0x48] sm:$0xf]
  %v106 = vld [vmem:[%s0 + $0x4c] sm:$0xf]
  %v107 = vld [vmem:[%s0 + $0x50] sm:$0xf]
  %v108 = vld [vmem:[%s0 + $0x54] sm:$0xf]
  %v109 = vld [vmem:[%s0 + $0x58] sm:$0xf]
  %v110 = vld [vmem:[%s0 + $0x5c] sm:$0xf]
  %v111 = vld [vmem:[%s0 + $0x60] sm:$0xf]
  %v112 = vld [vmem:[%s0 + $0x64] sm:$0xf]
  %v113 = vld [vmem:[%s0 + $0x68] sm:$0xf]
  %v114 = vld [vmem:[%s0 + $0x6c] sm:$0xf]
  %v115 = vld [vmem:[%s0 + $0x70] sm:$0xf]
  %v116 = vld [vmem:[%s0 + $0x74] sm:$0xf]
  %v117 = vld [vmem:[%s0 + $0x78] sm:$0xf]
  %v118 = vld [vmem:[%s0 + $0x7c] sm:$0xf]
  %v119 = vld [vmem:[#allocation2] sm:$0xff]
  %v120 = vld [vmem:[#allocation2 + $0x8] sm:$0xff]
  %v121 = vld [vmem:[#allocation2 + $0x10] sm:$0xff]
  %v122 = vld [vmem:[#allocation2 + $0x18] sm:$0xff]
  %v123 = vld [vmem:[#allocation2 + $0x20] sm:$0xff]
  %v124 = vld [vmem:[#allocation2 + $0x28] sm:$0xff]
  %v125 = vld [vmem:[#allocation2 + $0x30] sm:$0xff]
  %v126 = vld [vmem:[#allocation2 + $0x38] sm:$0xff]
  %v127 = vld [vmem:[#allocation2 + $0x40] sm:$0xff]
  %v128 = vld [vmem:[#allocation2 + $0x48] sm:$0xff]
  %v129 = vld [vmem:[#allocation2 + $0x50] sm:$0xff]
  %v130 = vld [vmem:[#allocation2 + $0x58] sm:$0xff]
  %v131 = vld [vmem:[#allocation2 + $0x60] sm:$0xff]
  %v132 = vld [vmem:[#allocation2 + $0x68] sm:$0xff]
  %v133 = vld [vmem:[#allocation2 + $0x70] sm:$0xff]
  %v134 = vld [vmem:[#allocation2 + $0x78] sm:$0xff]
  %v135 = vld [vmem:[#allocation2 + $0x80] sm:$0xff]
  %v136 = vld [vmem:[#allocation2 + $0x88] sm:$0xff]
  %v137 = vld [vmem:[#allocation2 + $0x90] sm:$0xff]
  %v138 = vld [vmem:[#allocation2 + $0x98] sm:$0xff]
  %v139 = vld [vmem:[#allocation2 + $0xa0] sm:$0xff]
  %v140 = vld [vmem:[#allocation2 + $0xa8] sm:$0xff]
  %v141 = vld [vmem:[#allocation2 + $0xb0] sm:$0xff]
  %v142 = vld [vmem:[#allocation2 + $0xb8] sm:$0xff]
  %v143 = vld [vmem:[#allocation2 + $0xc0] sm:$0xff]
  %v144 = vld [vmem:[#allocation2 + $0xc8] sm:$0xff]
  %v145 = vld [vmem:[#allocation2 + $0xd0] sm:$0xff]
  %v146 = vld [vmem:[#allocation2 + $0xd8] sm:$0xff]
  %v147 = vld [vmem:[#allocation2 + $0xe0] sm:$0xff]
  %v148 = vld [vmem:[#allocation2 + $0xe8] sm:$0xff]
  %v149 = vld [vmem:[#allocation2 + $0xf0] sm:$0xff]
  %v150 = vld [vmem:[#allocation2 + $0xf8] sm:$0xff]
  %v151 = vld [vmem:[%s1] sm:$0xf]
  %v152 = vld [vmem:[%s1 + $0x4] sm:$0xf]
  %v153 = vld [vmem:[%s1 + $0x8] sm:$0xf]
  %v154 = vld [vmem:[%s1 + $0xc] sm:$0xf]
  %v155 = vld [vmem:[%s1 + $0x10] sm:$0xf]
  %v156 = vld [vmem:[%s1 + $0x14] sm:$0xf]
  %v157 = vld [vmem:[%s1 + $0x18] sm:$0xf]
  %v158 = vld [vmem:[%s1 + $0x1c] sm:$0xf]
  %v159 = vld [vmem:[%s1 + $0x20] sm:$0xf]
  %v160 = vld [vmem:[%s1 + $0x24] sm:$0xf]
  %v161 = vld [vmem:[%s1 + $0x28] sm:$0xf]
  %v162 = vld [vmem:[%s1 + $0x2c] sm:$0xf]
  %v163 = vld [vmem:[%s1 + $0x30] sm:$0xf]
  %v164 = vld [vmem:[%s1 + $0x34] sm:$0xf]
  %v165 = vld [vmem:[%s1 + $0x38] sm:$0xf]
  %v166 = vld [vmem:[%s1 + $0x3c] sm:$0xf]
  %v199 = vunpack.c.l.b16 %v87
  %v200 = vunpack.c.l.b16 %v88
  %v201 = vunpack.c.l.b16 %v89
  %v202 = vunpack.c.l.b16 %v90
  %v203 = vunpack.c.l.b16 %v91
  %v204 = vunpack.c.l.b16 %v92
  %v205 = vunpack.c.l.b16 %v93
  %v206 = vunpack.c.l.b16 %v94
  %v207 = vunpack.c.l.b16 %v95
  %v208 = vunpack.c.l.b16 %v96
  %v209 = vunpack.c.l.b16 %v97
  %v210 = vunpack.c.l.b16 %v98
  %v211 = vunpack.c.l.b16 %v99
  %v212 = vunpack.c.l.b16 %v100
  %v213 = vunpack.c.l.b16 %v101
  %v214 = vunpack.c.l.b16 %v102
  %v215 = vunpack.c.l.b16 %v103
  %v216 = vunpack.c.l.b16 %v104
  %v217 = vunpack.c.l.b16 %v105
  %v218 = vunpack.c.l.b16 %v106
  %v219 = vunpack.c.l.b16 %v107
  %v220 = vunpack.c.l.b16 %v108
  %v221 = vunpack.c.l.b16 %v109
  %v222 = vunpack.c.l.b16 %v110
  %v223 = vunpack.c.l.b16 %v111
  %v224 = vunpack.c.l.b16 %v112
  %v225 = vunpack.c.l.b16 %v113
  %v226 = vunpack.c.l.b16 %v114
  %v227 = vunpack.c.l.b16 %v115
  %v228 = vunpack.c.l.b16 %v116
  %v229 = vunpack.c.l.b16 %v117
  %v230 = vunpack.c.l.b16 %v118
  %v231 = vpack.c.b16 %v200, %v199
  %v232 = vpack.c.b16 %v202, %v201
  %v233 = vpack.c.b16 %v204, %v203
  %v234 = vpack.c.b16 %v206, %v205
  %v235 = vpack.c.b16 %v208, %v207
  %v236 = vpack.c.b16 %v210, %v209
  %v237 = vpack.c.b16 %v212, %v211
  %v238 = vpack.c.b16 %v214, %v213
  %v239 = vpack.c.b16 %v216, %v215
  %v240 = vpack.c.b16 %v218, %v217
  %v241 = vpack.c.b16 %v220, %v219
  %v242 = vpack.c.b16 %v222, %v221
  %v243 = vpack.c.b16 %v224, %v223
  %v244 = vpack.c.b16 %v226, %v225
  %v245 = vpack.c.b16 %v228, %v227
  %v246 = vpack.c.b16 %v230, %v229
  %v279 = vunpack.c.l.b16 %v151
  %v280 = vunpack.c.l.b16 %v152
  %v281 = vunpack.c.l.b16 %v153
  %v282 = vunpack.c.l.b16 %v154
  %v283 = vunpack.c.l.b16 %v155
  %v284 = vunpack.c.l.b16 %v156
  %v285 = vunpack.c.l.b16 %v157
  %v286 = vunpack.c.l.b16 %v158
  %v287 = vunpack.c.l.b16 %v159
  %v288 = vunpack.c.l.b16 %v160
  %v289 = vunpack.c.l.b16 %v161
  %v290 = vunpack.c.l.b16 %v162
  %v291 = vunpack.c.l.b16 %v163
  %v292 = vunpack.c.l.b16 %v164
  %v293 = vunpack.c.l.b16 %v165
  %v294 = vunpack.c.l.b16 %v166
  %v295 = vpack.c.b16 %v280, %v279
  %v296 = vpack.c.b16 %v282, %v281
  %v297 = vpack.c.b16 %v284, %v283
  %v298 = vpack.c.b16 %v286, %v285
  %v299 = vpack.c.b16 %v288, %v287
  %v300 = vpack.c.b16 %v290, %v289
  %v301 = vpack.c.b16 %v292, %v291
  %v302 = vpack.c.b16 %v294, %v293
  %311 = vmatpush.bf16.msra.mxu0 %v302
  %312 = vmatpush.bf16.msra.mxu0 %v301
  %313 = vmatpush.bf16.msra.mxu0 %v300
  %314 = vmatpush.bf16.msra.mxu0 %v299
  %315 = vmatpush.bf16.msra.mxu0 %v298
  %316 = vmatpush.bf16.msra.mxu0 %v297
  %317 = vmatpush.bf16.msra.mxu0 %v296
  %318 = vmatpush.bf16.msra.mxu0 %v295
  %319 = vmatmul.bf16.gmra.mxu0 %v231
  %v320 = vpop.f32.mrf.mxu0
  %v321 = vadd.f32 0.0, %v320
  %v322 = vpop.f32.mrf.mxu0
  %v323 = vadd.f32 0.0, %v322
  %324 = vmatmul.bf16.gmra.mxu0 %v232
  %v325 = vpop.f32.mrf.mxu0
  %v326 = vadd.f32 0.0, %v325
  %v327 = vpop.f32.mrf.mxu0
  %v328 = vadd.f32 0.0, %v327
  %329 = vmatmul.bf16.gmra.mxu0 %v233
  %v330 = vpop.f32.mrf.mxu0
  %v331 = vadd.f32 0.0, %v330
  %v332 = vpop.f32.mrf.mxu0
  %v333 = vadd.f32 0.0, %v332
  %334 = vmatmul.bf16.gmra.mxu0 %v234
  %v335 = vpop.f32.mrf.mxu0
  %v336 = vadd.f32 0.0, %v335
  %v337 = vpop.f32.mrf.mxu0
  %v338 = vadd.f32 0.0, %v337
  %339 = vmatmul.bf16.gmra.mxu0 %v235
  %v340 = vpop.f32.mrf.mxu0
  %v341 = vadd.f32 0.0, %v340
  %v342 = vpop.f32.mrf.mxu0
  %v343 = vadd.f32 0.0, %v342
  %344 = vmatmul.bf16.gmra.mxu0 %v236
  %v345 = vpop.f32.mrf.mxu0
  %v346 = vadd.f32 0.0, %v345
  %v347 = vpop.f32.mrf.mxu0
  %v348 = vadd.f32 0.0, %v347
  %349 = vmatmul.bf16.gmra.mxu0 %v237
  %v350 = vpop.f32.mrf.mxu0
  %v351 = vadd.f32 0.0, %v350
  %v352 = vpop.f32.mrf.mxu0
  %v353 = vadd.f32 0.0, %v352
  %354 = vmatmul.bf16.gmra.mxu0 %v238
  %v355 = vpop.f32.mrf.mxu0
  %v356 = vadd.f32 0.0, %v355
  %v357 = vpop.f32.mrf.mxu0
  %v358 = vadd.f32 0.0, %v357
  %359 = vmatmul.bf16.gmra.mxu0 %v239
  %v360 = vpop.f32.mrf.mxu0
  %v361 = vadd.f32 0.0, %v360
  %v362 = vpop.f32.mrf.mxu0
  %v363 = vadd.f32 0.0, %v362
  %364 = vmatmul.bf16.gmra.mxu0 %v240
  %v365 = vpop.f32.mrf.mxu0
  %v366 = vadd.f32 0.0, %v365
  %v367 = vpop.f32.mrf.mxu0
  %v368 = vadd.f32 0.0, %v367
  %369 = vmatmul.bf16.gmra.mxu0 %v241
  %v370 = vpop.f32.mrf.mxu0
  %v371 = vadd.f32 0.0, %v370
  %v372 = vpop.f32.mrf.mxu0
  %v373 = vadd.f32 0.0, %v372
  %374 = vmatmul.bf16.gmra.mxu0 %v242
  %v375 = vpop.f32.mrf.mxu0
  %v376 = vadd.f32 0.0, %v375
  %v377 = vpop.f32.mrf.mxu0
  %v378 = vadd.f32 0.0, %v377
  %379 = vmatmul.bf16.gmra.mxu0 %v243
  %v380 = vpop.f32.mrf.mxu0
  %v381 = vadd.f32 0.0, %v380
  %v382 = vpop.f32.mrf.mxu0
  %v383 = vadd.f32 0.0, %v382
  %384 = vmatmul.bf16.gmra.mxu0 %v244
  %v385 = vpop.f32.mrf.mxu0
  %v386 = vadd.f32 0.0, %v385
  %v387 = vpop.f32.mrf.mxu0
  %v388 = vadd.f32 0.0, %v387
  %389 = vmatmul.bf16.gmra.mxu0 %v245
  %v390 = vpop.f32.mrf.mxu0
  %v391 = vadd.f32 0.0, %v390
  %v392 = vpop.f32.mrf.mxu0
  %v393 = vadd.f32 0.0, %v392
  %394 = vmatmul.bf16.gmra.mxu0 %v246
  %v395 = vpop.f32.mrf.mxu0
  %v396 = vadd.f32 0.0, %v395
  %v397 = vpop.f32.mrf.mxu0
  %v398 = vadd.f32 0.0, %v397
  %399 = vdwg.mxu0
  %v400 = vadd.f32 %v119, %v321
  %v401 = vadd.f32 %v120, %v323
  %v402 = vadd.f32 %v121, %v326
  %v403 = vadd.f32 %v122, %v328
  %v404 = vadd.f32 %v123, %v331
  %v405 = vadd.f32 %v124, %v333
  %v406 = vadd.f32 %v125, %v336
  %v407 = vadd.f32 %v126, %v338
  %v408 = vadd.f32 %v127, %v341
  %v409 = vadd.f32 %v128, %v343
  %v410 = vadd.f32 %v129, %v346
  %v411 = vadd.f32 %v130, %v348
  %v412 = vadd.f32 %v131, %v351
  %v413 = vadd.f32 %v132, %v353
  %v414 = vadd.f32 %v133, %v356
  %v415 = vadd.f32 %v134, %v358
  %v416 = vadd.f32 %v135, %v361
  %v417 = vadd.f32 %v136, %v363
  %v418 = vadd.f32 %v137, %v366
  %v419 = vadd.f32 %v138, %v368
  %v420 = vadd.f32 %v139, %v371
  %v421 = vadd.f32 %v140, %v373
  %v422 = vadd.f32 %v141, %v376
  %v423 = vadd.f32 %v142, %v378
  %v424 = vadd.f32 %v143, %v381
  %v425 = vadd.f32 %v144, %v383
  %v426 = vadd.f32 %v145, %v386
  %v427 = vadd.f32 %v146, %v388
  %v428 = vadd.f32 %v147, %v391
  %v429 = vadd.f32 %v148, %v393
  %v430 = vadd.f32 %v149, %v396
  %v431 = vadd.f32 %v150, %v398
  %432 = vst [vmem:[#allocation2] sm:$0xff] %v400
  %433 = vst [vmem:[#allocation2 + $0x8] sm:$0xff] %v401
  %434 = vst [vmem:[#allocation2 + $0x10] sm:$0xff] %v402
  %435 = vst [vmem:[#allocation2 + $0x18] sm:$0xff] %v403
  %436 = vst [vmem:[#allocation2 + $0x20] sm:$0xff] %v404
  %437 = vst [vmem:[#allocation2 + $0x28] sm:$0xff] %v405
  %438 = vst [vmem:[#allocation2 + $0x30] sm:$0xff] %v406
  %439 = vst [vmem:[#allocation2 + $0x38] sm:$0xff] %v407
  %440 = vst [vmem:[#allocation2 + $0x40] sm:$0xff] %v408
  %441 = vst [vmem:[#allocation2 + $0x48] sm:$0xff] %v409
  %442 = vst [vmem:[#allocation2 + $0x50] sm:$0xff] %v410
  %443 = vst [vmem:[#allocation2 + $0x58] sm:$0xff] %v411
  %444 = vst [vmem:[#allocation2 + $0x60] sm:$0xff] %v412
  %445 = vst [vmem:[#allocation2 + $0x68] sm:$0xff] %v413
  %446 = vst [vmem:[#allocation2 + $0x70] sm:$0xff] %v414
  %447 = vst [vmem:[#allocation2 + $0x78] sm:$0xff] %v415
  %448 = vst [vmem:[#allocation2 + $0x80] sm:$0xff] %v416
  %449 = vst [vmem:[#allocation2 + $0x88] sm:$0xff] %v417
  %450 = vst [vmem:[#allocation2 + $0x90] sm:$0xff] %v418
  %451 = vst [vmem:[#allocation2 + $0x98] sm:$0xff] %v419
  %452 = vst [vmem:[#allocation2 + $0xa0] sm:$0xff] %v420
  %453 = vst [vmem:[#allocation2 + $0xa8] sm:$0xff] %v421
  %454 = vst [vmem:[#allocation2 + $0xb0] sm:$0xff] %v422
  %455 = vst [vmem:[#allocation2 + $0xb8] sm:$0xff] %v423
  %456 = vst [vmem:[#allocation2 + $0xc0] sm:$0xff] %v424
  %457 = vst [vmem:[#allocation2 + $0xc8] sm:$0xff] %v425
  %458 = vst [vmem:[#allocation2 + $0xd0] sm:$0xff] %v426
  %459 = vst [vmem:[#allocation2 + $0xd8] sm:$0xff] %v427
  %460 = vst [vmem:[#allocation2 + $0xe0] sm:$0xff] %v428
  %461 = vst [vmem:[#allocation2 + $0xe8] sm:$0xff] %v429
  %462 = vst [vmem:[#allocation2 + $0xf0] sm:$0xff] %v430
  %463 = vst [vmem:[#allocation2 + $0xf8] sm:$0xff] %v431
  %v464 = vld [vmem:[#allocation3] sm:$0xff]
  %v465 = vld [vmem:[#allocation3 + $0x8] sm:$0xff]
  %v466 = vld [vmem:[#allocation3 + $0x10] sm:$0xff]
  %v467 = vld [vmem:[#allocation3 + $0x18] sm:$0xff]
  %v468 = vld [vmem:[#allocation3 + $0x20] sm:$0xff]
  %v469 = vld [vmem:[#allocation3 + $0x28] sm:$0xff]
  %v470 = vld [vmem:[#allocation3 + $0x30] sm:$0xff]
  %v471 = vld [vmem:[#allocation3 + $0x38] sm:$0xff]
  %v472 = vld [vmem:[#allocation3 + $0x40] sm:$0xff]
  %v473 = vld [vmem:[#allocation3 + $0x48] sm:$0xff]
  %v474 = vld [vmem:[#allocation3 + $0x50] sm:$0xff]
  %v475 = vld [vmem:[#allocation3 + $0x58] sm:$0xff]
  %v476 = vld [vmem:[#allocation3 + $0x60] sm:$0xff]
  %v477 = vld [vmem:[#allocation3 + $0x68] sm:$0xff]
  %v478 = vld [vmem:[#allocation3 + $0x70] sm:$0xff]
  %v479 = vld [vmem:[#allocation3 + $0x78] sm:$0xff]
  %v480 = vld [vmem:[#allocation3 + $0x80] sm:$0xff]
  %v481 = vld [vmem:[#allocation3 + $0x88] sm:$0xff]
  %v482 = vld [vmem:[#allocation3 + $0x90] sm:$0xff]
  %v483 = vld [vmem:[#allocation3 + $0x98] sm:$0xff]
  %v484 = vld [vmem:[#allocation3 + $0xa0] sm:$0xff]
  %v485 = vld [vmem:[#allocation3 + $0xa8] sm:$0xff]
  %v486 = vld [vmem:[#allocation3 + $0xb0] sm:$0xff]
  %v487 = vld [vmem:[#allocation3 + $0xb8] sm:$0xff]
  %v488 = vld [vmem:[#allocation3 + $0xc0] sm:$0xff]
  %v489 = vld [vmem:[#allocation3 + $0xc8] sm:$0xff]
  %v490 = vld [vmem:[#allocation3 + $0xd0] sm:$0xff]
  %v491 = vld [vmem:[#allocation3 + $0xd8] sm:$0xff]
  %v492 = vld [vmem:[#allocation3 + $0xe0] sm:$0xff]
  %v493 = vld [vmem:[#allocation3 + $0xe8] sm:$0xff]
  %v494 = vld [vmem:[#allocation3 + $0xf0] sm:$0xff]
  %v495 = vld [vmem:[#allocation3 + $0xf8] sm:$0xff]
  %v496 = vld [vmem:[%s2] sm:$0xf]
  %v497 = vld [vmem:[%s2 + $0x4] sm:$0xf]
  %v498 = vld [vmem:[%s2 + $0x8] sm:$0xf]
  %v499 = vld [vmem:[%s2 + $0xc] sm:$0xf]
  %v500 = vld [vmem:[%s2 + $0x10] sm:$0xf]
  %v501 = vld [vmem:[%s2 + $0x14] sm:$0xf]
  %v502 = vld [vmem:[%s2 + $0x18] sm:$0xf]
  %v503 = vld [vmem:[%s2 + $0x1c] sm:$0xf]
  %v504 = vld [vmem:[%s2 + $0x20] sm:$0xf]
  %v505 = vld [vmem:[%s2 + $0x24] sm:$0xf]
  %v506 = vld [vmem:[%s2 + $0x28] sm:$0xf]
  %v507 = vld [vmem:[%s2 + $0x2c] sm:$0xf]
  %v508 = vld [vmem:[%s2 + $0x30] sm:$0xf]
  %v509 = vld [vmem:[%s2 + $0x34] sm:$0xf]
  %v510 = vld [vmem:[%s2 + $0x38] sm:$0xf]
  %v511 = vld [vmem:[%s2 + $0x3c] sm:$0xf]
  %v528 = vunpack.c.l.b16 %v496
  %v529 = vunpack.c.l.b16 %v497
  %v530 = vunpack.c.l.b16 %v498
  %v531 = vunpack.c.l.b16 %v499
  %v532 = vunpack.c.l.b16 %v500
  %v533 = vunpack.c.l.b16 %v501
  %v534 = vunpack.c.l.b16 %v502
  %v535 = vunpack.c.l.b16 %v503
  %v536 = vunpack.c.l.b16 %v504
  %v537 = vunpack.c.l.b16 %v505
  %v538 = vunpack.c.l.b16 %v506
  %v539 = vunpack.c.l.b16 %v507
  %v540 = vunpack.c.l.b16 %v508
  %v541 = vunpack.c.l.b16 %v509
  %v542 = vunpack.c.l.b16 %v510
  %v543 = vunpack.c.l.b16 %v511
  %v544 = vpack.c.b16 %v529, %v528
  %v545 = vpack.c.b16 %v531, %v530
  %v546 = vpack.c.b16 %v533, %v532
  %v547 = vpack.c.b16 %v535, %v534
  %v548 = vpack.c.b16 %v537, %v536
  %v549 = vpack.c.b16 %v539, %v538
  %v550 = vpack.c.b16 %v541, %v540
  %v551 = vpack.c.b16 %v543, %v542
  %560 = vmatpush.bf16.msra.mxu0 %v551
  %561 = vmatpush.bf16.msra.mxu0 %v550
  %562 = vmatpush.bf16.msra.mxu0 %v549
  %563 = vmatpush.bf16.msra.mxu0 %v548
  %564 = vmatpush.bf16.msra.mxu0 %v547
  %565 = vmatpush.bf16.msra.mxu0 %v546
  %566 = vmatpush.bf16.msra.mxu0 %v545
  %567 = vmatpush.bf16.msra.mxu0 %v544
  %568 = vmatmul.bf16.gmra.mxu0 %v231
  %v569 = vpop.f32.mrf.mxu0
  %v570 = vadd.f32 0.0, %v569
  %v571 = vpop.f32.mrf.mxu0
  %v572 = vadd.f32 0.0, %v571
  %573 = vmatmul.bf16.gmra.mxu0 %v232
  %v574 = vpop.f32.mrf.mxu0
  %v575 = vadd.f32 0.0, %v574
  %v576 = vpop.f32.mrf.mxu0
  %v577 = vadd.f32 0.0, %v576
  %578 = vmatmul.bf16.gmra.mxu0 %v233
  %v579 = vpop.f32.mrf.mxu0
  %v580 = vadd.f32 0.0, %v579
  %v581 = vpop.f32.mrf.mxu0
  %v582 = vadd.f32 0.0, %v581
  %583 = vmatmul.bf16.gmra.mxu0 %v234
  %v584 = vpop.f32.mrf.mxu0
  %v585 = vadd.f32 0.0, %v584
  %v586 = vpop.f32.mrf.mxu0
  %v587 = vadd.f32 0.0, %v586
  %588 = vmatmul.bf16.gmra.mxu0 %v235
  %v589 = vpop.f32.mrf.mxu0
  %v590 = vadd.f32 0.0, %v589
  %v591 = vpop.f32.mrf.mxu0
  %v592 = vadd.f32 0.0, %v591
  %593 = vmatmul.bf16.gmra.mxu0 %v236
  %v594 = vpop.f32.mrf.mxu0
  %v595 = vadd.f32 0.0, %v594
  %v596 = vpop.f32.mrf.mxu0
  %v597 = vadd.f32 0.0, %v596
  %598 = vmatmul.bf16.gmra.mxu0 %v237
  %v599 = vpop.f32.mrf.mxu0
  %v600 = vadd.f32 0.0, %v599
  %v601 = vpop.f32.mrf.mxu0
  %v602 = vadd.f32 0.0, %v601
  %603 = vmatmul.bf16.gmra.mxu0 %v238
  %v604 = vpop.f32.mrf.mxu0
  %v605 = vadd.f32 0.0, %v604
  %v606 = vpop.f32.mrf.mxu0
  %v607 = vadd.f32 0.0, %v606
  %608 = vmatmul.bf16.gmra.mxu0 %v239
  %v609 = vpop.f32.mrf.mxu0
  %v610 = vadd.f32 0.0, %v609
  %v611 = vpop.f32.mrf.mxu0
  %v612 = vadd.f32 0.0, %v611
  %613 = vmatmul.bf16.gmra.mxu0 %v240
  %v614 = vpop.f32.mrf.mxu0
  %v615 = vadd.f32 0.0, %v614
  %v616 = vpop.f32.mrf.mxu0
  %v617 = vadd.f32 0.0, %v616
  %618 = vmatmul.bf16.gmra.mxu0 %v241
  %v619 = vpop.f32.mrf.mxu0
  %v620 = vadd.f32 0.0, %v619
  %v621 = vpop.f32.mrf.mxu0
  %v622 = vadd.f32 0.0, %v621
  %623 = vmatmul.bf16.gmra.mxu0 %v242
  %v624 = vpop.f32.mrf.mxu0
  %v625 = vadd.f32 0.0, %v624
  %v626 = vpop.f32.mrf.mxu0
  %v627 = vadd.f32 0.0, %v626
  %628 = vmatmul.bf16.gmra.mxu0 %v243
  %v629 = vpop.f32.mrf.mxu0
  %v630 = vadd.f32 0.0, %v629
  %v631 = vpop.f32.mrf.mxu0
  %v632 = vadd.f32 0.0, %v631
  %633 = vmatmul.bf16.gmra.mxu0 %v244
  %v634 = vpop.f32.mrf.mxu0
  %v635 = vadd.f32 0.0, %v634
  %v636 = vpop.f32.mrf.mxu0
  %v637 = vadd.f32 0.0, %v636
  %638 = vmatmul.bf16.gmra.mxu0 %v245
  %v639 = vpop.f32.mrf.mxu0
  %v640 = vadd.f32 0.0, %v639
  %v641 = vpop.f32.mrf.mxu0
  %v642 = vadd.f32 0.0, %v641
  %643 = vmatmul.bf16.gmra.mxu0 %v246
  %v644 = vpop.f32.mrf.mxu0
  %v645 = vadd.f32 0.0, %v644
  %v646 = vpop.f32.mrf.mxu0
  %v647 = vadd.f32 0.0, %v646
  %648 = vdwg.mxu0
  %v649 = vadd.f32 %v464, %v570
  %v650 = vadd.f32 %v465, %v572
  %v651 = vadd.f32 %v466, %v575
  %v652 = vadd.f32 %v467, %v577
  %v653 = vadd.f32 %v468, %v580
  %v654 = vadd.f32 %v469, %v582
  %v655 = vadd.f32 %v470, %v585
  %v656 = vadd.f32 %v471, %v587
  %v657 = vadd.f32 %v472, %v590
  %v658 = vadd.f32 %v473, %v592
  %v659 = vadd.f32 %v474, %v595
  %v660 = vadd.f32 %v475, %v597
  %v661 = vadd.f32 %v476, %v600
  %v662 = vadd.f32 %v477, %v602
  %v663 = vadd.f32 %v478, %v605
  %v664 = vadd.f32 %v479, %v607
  %v665 = vadd.f32 %v480, %v610
  %v666 = vadd.f32 %v481, %v612
  %v667 = vadd.f32 %v482, %v615
  %v668 = vadd.f32 %v483, %v617
  %v669 = vadd.f32 %v484, %v620
  %v670 = vadd.f32 %v485, %v622
  %v671 = vadd.f32 %v486, %v625
  %v672 = vadd.f32 %v487, %v627
  %v673 = vadd.f32 %v488, %v630
  %v674 = vadd.f32 %v489, %v632
  %v675 = vadd.f32 %v490, %v635
  %v676 = vadd.f32 %v491, %v637
  %v677 = vadd.f32 %v492, %v640
  %v678 = vadd.f32 %v493, %v642
  %v679 = vadd.f32 %v494, %v645
  %v680 = vadd.f32 %v495, %v647
  %681 = vst [vmem:[#allocation3] sm:$0xff] %v649
  %682 = vst [vmem:[#allocation3 + $0x8] sm:$0xff] %v650
  %683 = vst [vmem:[#allocation3 + $0x10] sm:$0xff] %v651
  %684 = vst [vmem:[#allocation3 + $0x18] sm:$0xff] %v652
  %685 = vst [vmem:[#allocation3 + $0x20] sm:$0xff] %v653
  %686 = vst [vmem:[#allocation3 + $0x28] sm:$0xff] %v654
  %687 = vst [vmem:[#allocation3 + $0x30] sm:$0xff] %v655
  %688 = vst [vmem:[#allocation3 + $0x38] sm:$0xff] %v656
  %689 = vst [vmem:[#allocation3 + $0x40] sm:$0xff] %v657
  %690 = vst [vmem:[#allocation3 + $0x48] sm:$0xff] %v658
  %691 = vst [vmem:[#allocation3 + $0x50] sm:$0xff] %v659
  %692 = vst [vmem:[#allocation3 + $0x58] sm:$0xff] %v660
  %693 = vst [vmem:[#allocation3 + $0x60] sm:$0xff] %v661
  %694 = vst [vmem:[#allocation3 + $0x68] sm:$0xff] %v662
  %695 = vst [vmem:[#allocation3 + $0x70] sm:$0xff] %v663
  %696 = vst [vmem:[#allocation3 + $0x78] sm:$0xff] %v664
  %697 = vst [vmem:[#allocation3 + $0x80] sm:$0xff] %v665
  %698 = vst [vmem:[#allocation3 + $0x88] sm:$0xff] %v666
  %699 = vst [vmem:[#allocation3 + $0x90] sm:$0xff] %v667
  %700 = vst [vmem:[#allocation3 + $0x98] sm:$0xff] %v668
  %701 = vst [vmem:[#allocation3 + $0xa0] sm:$0xff] %v669
  %702 = vst [vmem:[#allocation3 + $0xa8] sm:$0xff] %v670
  %703 = vst [vmem:[#allocation3 + $0xb0] sm:$0xff] %v671
  %704 = vst [vmem:[#allocation3 + $0xb8] sm:$0xff] %v672
  %705 = vst [vmem:[#allocation3 + $0xc0] sm:$0xff] %v673
  %706 = vst [vmem:[#allocation3 + $0xc8] sm:$0xff] %v674
  %707 = vst [vmem:[#allocation3 + $0xd0] sm:$0xff] %v675
  %708 = vst [vmem:[#allocation3 + $0xd8] sm:$0xff] %v676
  %709 = vst [vmem:[#allocation3 + $0xe0] sm:$0xff] %v677
  %710 = vst [vmem:[#allocation3 + $0xe8] sm:$0xff] %v678
  %711 = vst [vmem:[#allocation3 + $0xf0] sm:$0xff] %v679
  %712 = vst [vmem:[#allocation3 + $0xf8] sm:$0xff] %v680
  // Predicated region
  $region22: #{nifty_forward.3} parent=0 // pred_check
    %p713 = pneg %p19
  $region23: #{nifty_forward.3} parent=0 // pred_check_branch
    %715 = sbr.rel (%p713) target = $region25
  $region24: #{nifty_forward.3} parent=0 // pred_region
    %v716 = vld [vmem:[#allocation2] sm:$0xff]
    %v717 = vld [vmem:[#allocation2 + $0x8] sm:$0xff]
    %v718 = vld [vmem:[#allocation2 + $0x10] sm:$0xff]
    %v719 = vld [vmem:[#allocation2 + $0x18] sm:$0xff]
    %v720 = vld [vmem:[#allocation2 + $0x20] sm:$0xff]
    %v721 = vld [vmem:[#allocation2 + $0x28] sm:$0xff]
    %v722 = vld [vmem:[#allocation2 + $0x30] sm:$0xff]
    %v723 = vld [vmem:[#allocation2 + $0x38] sm:$0xff]
    %v724 = vld [vmem:[#allocation2 + $0x40] sm:$0xff]
    %v725 = vld [vmem:[#allocation2 + $0x48] sm:$0xff]
    %v726 = vld [vmem:[#allocation2 + $0x50] sm:$0xff]
    %v727 = vld [vmem:[#allocation2 + $0x58] sm:$0xff]
    %v728 = vld [vmem:[#allocation2 + $0x60] sm:$0xff]
    %v729 = vld [vmem:[#allocation2 + $0x68] sm:$0xff]
    %v730 = vld [vmem:[#allocation2 + $0x70] sm:$0xff]
    %v731 = vld [vmem:[#allocation2 + $0x78] sm:$0xff]
    %v732 = vld [vmem:[#allocation2 + $0x80] sm:$0xff]
    %v733 = vld [vmem:[#allocation2 + $0x88] sm:$0xff]
    %v734 = vld [vmem:[#allocation2 + $0x90] sm:$0xff]
    %v735 = vld [vmem:[#allocation2 + $0x98] sm:$0xff]
    %v736 = vld [vmem:[#allocation2 + $0xa0] sm:$0xff]
    %v737 = vld [vmem:[#allocation2 + $0xa8] sm:$0xff]
    %v738 = vld [vmem:[#allocation2 + $0xb0] sm:$0xff]
    %v739 = vld [vmem:[#allocation2 + $0xb8] sm:$0xff]
    %v740 = vld [vmem:[#allocation2 + $0xc0] sm:$0xff]
    %v741 = vld [vmem:[#allocation2 + $0xc8] sm:$0xff]
    %v742 = vld [vmem:[#allocation2 + $0xd0] sm:$0xff]
    %v743 = vld [vmem:[#allocation2 + $0xd8] sm:$0xff]
    %v744 = vld [vmem:[#allocation2 + $0xe0] sm:$0xff]
    %v745 = vld [vmem:[#allocation2 + $0xe8] sm:$0xff]
    %v746 = vld [vmem:[#allocation2 + $0xf0] sm:$0xff]
    %v747 = vld [vmem:[#allocation2 + $0xf8] sm:$0xff]
    %v748 = vpack.c.bf16 %v716, %v716
    %v749 = vpack.c.bf16 %v717, %v717
    %v750 = vpack.c.bf16 %v718, %v718
    %v751 = vpack.c.bf16 %v719, %v719
    %v752 = vpack.c.bf16 %v720, %v720
    %v753 = vpack.c.bf16 %v721, %v721
    %v754 = vpack.c.bf16 %v722, %v722
    %v755 = vpack.c.bf16 %v723, %v723
    %v756 = vpack.c.bf16 %v724, %v724
    %v757 = vpack.c.bf16 %v725, %v725
    %v758 = vpack.c.bf16 %v726, %v726
    %v759 = vpack.c.bf16 %v727, %v727
    %v760 = vpack.c.bf16 %v728, %v728
    %v761 = vpack.c.bf16 %v729, %v729
    %v762 = vpack.c.bf16 %v730, %v730
    %v763 = vpack.c.bf16 %v731, %v731
    %v764 = vpack.c.bf16 %v732, %v732
    %v765 = vpack.c.bf16 %v733, %v733
    %v766 = vpack.c.bf16 %v734, %v734
    %v767 = vpack.c.bf16 %v735, %v735
    %v768 = vpack.c.bf16 %v736, %v736
    %v769 = vpack.c.bf16 %v737, %v737
    %v770 = vpack.c.bf16 %v738, %v738
    %v771 = vpack.c.bf16 %v739, %v739
    %v772 = vpack.c.bf16 %v740, %v740
    %v773 = vpack.c.bf16 %v741, %v741
    %v774 = vpack.c.bf16 %v742, %v742
    %v775 = vpack.c.bf16 %v743, %v743
    %v776 = vpack.c.bf16 %v744, %v744
    %v777 = vpack.c.bf16 %v745, %v745
    %v778 = vpack.c.bf16 %v746, %v746
    %v779 = vpack.c.bf16 %v747, %v747
    %780 = vst [vmem:[%s4] sm:$0xf] %v748
    %781 = vst [vmem:[%s4 + $0x4] sm:$0xf] %v749
    %782 = vst [vmem:[%s4 + $0x8] sm:$0xf] %v750
    %783 = vst [vmem:[%s4 + $0xc] sm:$0xf] %v751
    %784 = vst [vmem:[%s4 + $0x10] sm:$0xf] %v752
    %785 = vst [vmem:[%s4 + $0x14] sm:$0xf] %v753
    %786 = vst [vmem:[%s4 + $0x18] sm:$0xf] %v754
    %787 = vst [vmem:[%s4 + $0x1c] sm:$0xf] %v755
    %788 = vst [vmem:[%s4 + $0x20] sm:$0xf] %v756
    %789 = vst [vmem:[%s4 + $0x24] sm:$0xf] %v757
    %790 = vst [vmem:[%s4 + $0x28] sm:$0xf] %v758
    %791 = vst [vmem:[%s4 + $0x2c] sm:$0xf] %v759
    %792 = vst [vmem:[%s4 + $0x30] sm:$0xf] %v760
    %793 = vst [vmem:[%s4 + $0x34] sm:$0xf] %v761
    %794 = vst [vmem:[%s4 + $0x38] sm:$0xf] %v762
    %795 = vst [vmem:[%s4 + $0x3c] sm:$0xf] %v763
    %796 = vst [vmem:[%s4 + $0x40] sm:$0xf] %v764
    %797 = vst [vmem:[%s4 + $0x44] sm:$0xf] %v765
    %798 = vst [vmem:[%s4 + $0x48] sm:$0xf] %v766
    %799 = vst [vmem:[%s4 + $0x4c] sm:$0xf] %v767
    %800 = vst [vmem:[%s4 + $0x50] sm:$0xf] %v768
    %801 = vst [vmem:[%s4 + $0x54] sm:$0xf] %v769
    %802 = vst [vmem:[%s4 + $0x58] sm:$0xf] %v770
    %803 = vst [vmem:[%s4 + $0x5c] sm:$0xf] %v771
    %804 = vst [vmem:[%s4 + $0x60] sm:$0xf] %v772
    %805 = vst [vmem:[%s4 + $0x64] sm:$0xf] %v773
    %806 = vst [vmem:[%s4 + $0x68] sm:$0xf] %v774
    %807 = vst [vmem:[%s4 + $0x6c] sm:$0xf] %v775
    %808 = vst [vmem:[%s4 + $0x70] sm:$0xf] %v776
    %809 = vst [vmem:[%s4 + $0x74] sm:$0xf] %v777
    %810 = vst [vmem:[%s4 + $0x78] sm:$0xf] %v778
    %811 = vst [vmem:[%s4 + $0x7c] sm:$0xf] %v779
    %v812 = vld [vmem:[#allocation3] sm:$0xff]
    %v813 = vld [vmem:[#allocation3 + $0x8] sm:$0xff]
    %v814 = vld [vmem:[#allocation3 + $0x10] sm:$0xff]
    %v815 = vld [vmem:[#allocation3 + $0x18] sm:$0xff]
    %v816 = vld [vmem:[#allocation3 + $0x20] sm:$0xff]
    %v817 = vld [vmem:[#allocation3 + $0x28] sm:$0xff]
    %v818 = vld [vmem:[#allocation3 + $0x30] sm:$0xff]
    %v819 = vld [vmem:[#allocation3 + $0x38] sm:$0xff]
    %v820 = vld [vmem:[#allocation3 + $0x40] sm:$0xff]
    %v821 = vld [vmem:[#allocation3 + $0x48] sm:$0xff]
    %v822 = vld [vmem:[#allocation3 + $0x50] sm:$0xff]
    %v823 = vld [vmem:[#allocation3 + $0x58] sm:$0xff]
    %v824 = vld [vmem:[#allocation3 + $0x60] sm:$0xff]
    %v825 = vld [vmem:[#allocation3 + $0x68] sm:$0xff]
    %v826 = vld [vmem:[#allocation3 + $0x70] sm:$0xff]
    %v827 = vld [vmem:[#allocation3 + $0x78] sm:$0xff]
    %v828 = vld [vmem:[#allocation3 + $0x80] sm:$0xff]
    %v829 = vld [vmem:[#allocation3 + $0x88] sm:$0xff]
    %v830 = vld [vmem:[#allocation3 + $0x90] sm:$0xff]
    %v831 = vld [vmem:[#allocation3 + $0x98] sm:$0xff]
    %v832 = vld [vmem:[#allocation3 + $0xa0] sm:$0xff]
    %v833 = vld [vmem:[#allocation3 + $0xa8] sm:$0xff]
    %v834 = vld [vmem:[#allocation3 + $0xb0] sm:$0xff]
    %v835 = vld [vmem:[#allocation3 + $0xb8] sm:$0xff]
    %v836 = vld [vmem:[#allocation3 + $0xc0] sm:$0xff]
    %v837 = vld [vmem:[#allocation3 + $0xc8] sm:$0xff]
    %v838 = vld [vmem:[#allocation3 + $0xd0] sm:$0xff]
    %v839 = vld [vmem:[#allocation3 + $0xd8] sm:$0xff]
    %v840 = vld [vmem:[#allocation3 + $0xe0] sm:$0xff]
    %v841 = vld [vmem:[#allocation3 + $0xe8] sm:$0xff]
    %v842 = vld [vmem:[#allocation3 + $0xf0] sm:$0xff]
    %v843 = vld [vmem:[#allocation3 + $0xf8] sm:$0xff]
    %v844 = vld [vmem:[%s3] sm:$0x1]
    %v846 = vperm.slane %v844, 0
    %v848 = vadd.f32 %v812, %v846
    %v849 = vadd.f32 %v813, %v846
    %v850 = vadd.f32 %v814, %v846
    %v851 = vadd.f32 %v815, %v846
    %v852 = vadd.f32 %v816, %v846
    %v853 = vadd.f32 %v817, %v846
    %v854 = vadd.f32 %v818, %v846
    %v855 = vadd.f32 %v819, %v846
    %v856 = vadd.f32 %v820, %v846
    %v857 = vadd.f32 %v821, %v846
    %v858 = vadd.f32 %v822, %v846
    %v859 = vadd.f32 %v823, %v846
    %v860 = vadd.f32 %v824, %v846
    %v861 = vadd.f32 %v825, %v846
    %v862 = vadd.f32 %v826, %v846
    %v863 = vadd.f32 %v827, %v846
    %v864 = vadd.f32 %v828, %v846
    %v865 = vadd.f32 %v829, %v846
    %v866 = vadd.f32 %v830, %v846
    %v867 = vadd.f32 %v831, %v846
    %v868 = vadd.f32 %v832, %v846
    %v869 = vadd.f32 %v833, %v846
    %v870 = vadd.f32 %v834, %v846
    %v871 = vadd.f32 %v835, %v846
    %v872 = vadd.f32 %v836, %v846
    %v873 = vadd.f32 %v837, %v846
    %v874 = vadd.f32 %v838, %v846
    %v875 = vadd.f32 %v839, %v846
    %v876 = vadd.f32 %v840, %v846
    %v877 = vadd.f32 %v841, %v846
    %v878 = vadd.f32 %v842, %v846
    %v879 = vadd.f32 %v843, %v846
    %v880 = vpack.c.bf16 %v848, %v848
    %v881 = vpack.c.bf16 %v849, %v849
    %v882 = vpack.c.bf16 %v850, %v850
    %v883 = vpack.c.bf16 %v851, %v851
    %v884 = vpack.c.bf16 %v852, %v852
    %v885 = vpack.c.bf16 %v853, %v853
    %v886 = vpack.c.bf16 %v854, %v854
    %v887 = vpack.c.bf16 %v855, %v855
    %v888 = vpack.c.bf16 %v856, %v856
    %v889 = vpack.c.bf16 %v857, %v857
    %v890 = vpack.c.bf16 %v858, %v858
    %v891 = vpack.c.bf16 %v859, %v859
    %v892 = vpack.c.bf16 %v860, %v860
    %v893 = vpack.c.bf16 %v861, %v861
    %v894 = vpack.c.bf16 %v862, %v862
    %v895 = vpack.c.bf16 %v863, %v863
    %v896 = vpack.c.bf16 %v864, %v864
    %v897 = vpack.c.bf16 %v865, %v865
    %v898 = vpack.c.bf16 %v866, %v866
    %v899 = vpack.c.bf16 %v867, %v867
    %v900 = vpack.c.bf16 %v868, %v868
    %v901 = vpack.c.bf16 %v869, %v869
    %v902 = vpack.c.bf16 %v870, %v870
    %v903 = vpack.c.bf16 %v871, %v871
    %v904 = vpack.c.bf16 %v872, %v872
    %v905 = vpack.c.bf16 %v873, %v873
    %v906 = vpack.c.bf16 %v874, %v874
    %v907 = vpack.c.bf16 %v875, %v875
    %v908 = vpack.c.bf16 %v876, %v876
    %v909 = vpack.c.bf16 %v877, %v877
    %v910 = vpack.c.bf16 %v878, %v878
    %v911 = vpack.c.bf16 %v879, %v879
    %912 = vst [vmem:[%s5] sm:$0xf] %v880
    %913 = vst [vmem:[%s5 + $0x4] sm:$0xf] %v881
    %914 = vst [vmem:[%s5 + $0x8] sm:$0xf] %v882
    %915 = vst [vmem:[%s5 + $0xc] sm:$0xf] %v883
    %916 = vst [vmem:[%s5 + $0x10] sm:$0xf] %v884
    %917 = vst [vmem:[%s5 + $0x14] sm:$0xf] %v885
    %918 = vst [vmem:[%s5 + $0x18] sm:$0xf] %v886
    %919 = vst [vmem:[%s5 + $0x1c] sm:$0xf] %v887
    %920 = vst [vmem:[%s5 + $0x20] sm:$0xf] %v888
    %921 = vst [vmem:[%s5 + $0x24] sm:$0xf] %v889
    %922 = vst [vmem:[%s5 + $0x28] sm:$0xf] %v890
    %923 = vst [vmem:[%s5 + $0x2c] sm:$0xf] %v891
    %924 = vst [vmem:[%s5 + $0x30] sm:$0xf] %v892
    %925 = vst [vmem:[%s5 + $0x34] sm:$0xf] %v893
    %926 = vst [vmem:[%s5 + $0x38] sm:$0xf] %v894
    %927 = vst [vmem:[%s5 + $0x3c] sm:$0xf] %v895
    %928 = vst [vmem:[%s5 + $0x40] sm:$0xf] %v896
    %929 = vst [vmem:[%s5 + $0x44] sm:$0xf] %v897
    %930 = vst [vmem:[%s5 + $0x48] sm:$0xf] %v898
    %931 = vst [vmem:[%s5 + $0x4c] sm:$0xf] %v899
    %932 = vst [vmem:[%s5 + $0x50] sm:$0xf] %v900
    %933 = vst [vmem:[%s5 + $0x54] sm:$0xf] %v901
    %934 = vst [vmem:[%s5 + $0x58] sm:$0xf] %v902
    %935 = vst [vmem:[%s5 + $0x5c] sm:$0xf] %v903
    %936 = vst [vmem:[%s5 + $0x60] sm:$0xf] %v904
    %937 = vst [vmem:[%s5 + $0x64] sm:$0xf] %v905
    %938 = vst [vmem:[%s5 + $0x68] sm:$0xf] %v906
    %939 = vst [vmem:[%s5 + $0x6c] sm:$0xf] %v907
    %940 = vst [vmem:[%s5 + $0x70] sm:$0xf] %v908
    %941 = vst [vmem:[%s5 + $0x74] sm:$0xf] %v909
    %942 = vst [vmem:[%s5 + $0x78] sm:$0xf] %v910
    %943 = vst [vmem:[%s5 + $0x7c] sm:$0xf] %v911
  $region25: #{nifty_forward.3} parent=0 // pred_fallthru
    _
  // Predicated region
  $region26: #{nifty_forward.3} parent=0 // pred_check
    _
  $region27: #{nifty_forward.3} parent=0 // pred_check_branch
    %945 = sbr.rel (0) target = $region29
  $region28: #{nifty_forward.3} parent=0 // pred_region
    _
  $region29: #{nifty_forward.3} parent=0 // pred_fallthru
    _
  // Predicated region
  $region30: #{nifty_forward.3} parent=0 // pred_check
    _
  $region31: #{nifty_forward.3} parent=0 // pred_check_branch
    %947 = sbr.rel (0) target = $region33
  $region32: #{nifty_forward.3} parent=0 // pred_region
    _
  $region33: #{nifty_forward.3} parent=0 // pred_fallthru
    _
  // Predicated region
  $region34: #{nifty_forward.3} parent=0 // pred_check
    _
  $region35: #{nifty_forward.3} parent=0 // pred_check_branch
    %949 = sbr.rel (0) target = $region37
  $region36: #{nifty_forward.3} parent=0 // pred_region
    _
  $region37: #{nifty_forward.3} parent=0 // pred_fallthru
    _
  // Predicated region
  $region38: #{nifty_forward.3} parent=0 // pred_check
    _
  $region39: #{nifty_forward.3} parent=0 // pred_check_branch
    %951 = sbr.rel (0) target = $region41
  $region40: #{nifty_forward.3} parent=0 // pred_region
    _
  $region41: #{nifty_forward.3} parent=0 // pred_fallthru
    _

// kernel: nifty_forward.5
$region0: #{nifty_forward.5}
  #allocation0 [shape = 'u32[]', space=smem, size = 0x4, offset = 0x4, fixed_abs, tag = 'smem constant byte address 0x4 - core index']
  #allocation1 [shape = 'u32[72,128]{1,0:T(1,128)}', space=vmem, size = 0x9000, scoped, tag = 'internal scratch']
  #allocation2 [shape = 'f32[256,128]{1,0:T(8,128)}', space=vmem, size = 0x20000, scoped, tag = 'scratch operand']
  %s0 = inlined_call_operand.vmem [shape: s8[256,256], index: 0, kind: input, shape index: {}]
  %s1 = inlined_call_operand.vmem [shape: bf16[256,128], index: 1, kind: input, shape index: {}]
  %s2 = inlined_call_operand.vmem [shape: bf16[256,128], index: 2, kind: input, shape index: {}]
  %s3 = inlined_call_operand.vmem [shape: f32[256,1], index: 3, kind: input, shape index: {}]
  %s4 = inlined_call_operand.vmem [shape: f32[256,128], index: 4, kind: output, shape index: {}]
  %s5 = sld [smem:[#allocation0]]
  $region34: #{nifty_forward.5} parent=0
    _
  %s7 = ssub.s32 1, %s5
  %s8 = scalar_select 0, %s7, %s5
  // Predicated region
  $region2: #{nifty_forward.5} parent=0 // pred_check
    _
  $region3: #{nifty_forward.5} parent=0 // pred_check_branch
    %10 = sbr.rel (0) target = $region5
  $region4: #{nifty_forward.5} parent=0 // pred_region
    _
  $region5: #{nifty_forward.5} parent=0 // pred_fallthru
    _
  // Predicated region
  $region6: #{nifty_forward.5} parent=0 // pred_check
    _
  $region7: #{nifty_forward.5} parent=0 // pred_check_branch
    %12 = sbr.rel (0) target = $region9
  $region8: #{nifty_forward.5} parent=0 // pred_region
    _
  $region9: #{nifty_forward.5} parent=0 // pred_fallthru
    _
  // Predicated region
  $region10: #{nifty_forward.5} parent=0 // pred_check
    _
  $region11: #{nifty_forward.5} parent=0 // pred_check_branch
    %14 = sbr.rel (0) target = $region13
  $region12: #{nifty_forward.5} parent=0 // pred_region
    _
  $region13: #{nifty_forward.5} parent=0 // pred_fallthru
    _
  // Predicated region
  $region14: #{nifty_forward.5} parent=0 // pred_check
    _
  $region15: #{nifty_forward.5} parent=0 // pred_check_branch
    %16 = sbr.rel (0) target = $region17
  $region16: #{nifty_forward.5} parent=0 // pred_region
    _
  $region17: #{nifty_forward.5} parent=0 // pred_fallthru
    _
  %p17 = scmp.eq.s32.totalorder 0, 0
  // Predicated region
  $region18: #{nifty_forward.5} parent=0 // pred_check
    %p18 = pneg %p17
  $region19: #{nifty_forward.5} parent=0 // pred_check_branch
    %20 = sbr.rel (%p18) target = $region21
  $region20: #{nifty_forward.5} parent=0 // pred_region
    %21 = vst [vmem:[#allocation2] sm:$0xff] 0.0
    %22 = vst [vmem:[#allocation2 + $0x8] sm:$0xff] 0.0
    %23 = vst [vmem:[#allocation2 + $0x10] sm:$0xff] 0.0
    %24 = vst [vmem:[#allocation2 + $0x18] sm:$0xff] 0.0
    %25 = vst [vmem:[#allocation2 + $0x20] sm:$0xff] 0.0
    %26 = vst [vmem:[#allocation2 + $0x28] sm:$0xff] 0.0
    %27 = vst [vmem:[#allocation2 + $0x30] sm:$0xff] 0.0
    %28 = vst [vmem:[#allocation2 + $0x38] sm:$0xff] 0.0
    %29 = vst [vmem:[#allocation2 + $0x40] sm:$0xff] 0.0
    %30 = vst [vmem:[#allocation2 + $0x48] sm:$0xff] 0.0
    %31 = vst [vmem:[#allocation2 + $0x50] sm:$0xff] 0.0
    %32 = vst [vmem:[#allocation2 + $0x58] sm:$0xff] 0.0
    %33 = vst [vmem:[#allocation2 + $0x60] sm:$0xff] 0.0
    %34 = vst [vmem:[#allocation2 + $0x68] sm:$0xff] 0.0
    %35 = vst [vmem:[#allocation2 + $0x70] sm:$0xff] 0.0
    %36 = vst [vmem:[#allocation2 + $0x78] sm:$0xff] 0.0
    %37 = vst [vmem:[#allocation2 + $0x80] sm:$0xff] 0.0
    %38 = vst [vmem:[#allocation2 + $0x88] sm:$0xff] 0.0
    %39 = vst [vmem:[#allocation2 + $0x90] sm:$0xff] 0.0
    %40 = vst [vmem:[#allocation2 + $0x98] sm:$0xff] 0.0
    %41 = vst [vmem:[#allocation2 + $0xa0] sm:$0xff] 0.0
    %42 = vst [vmem:[#allocation2 + $0xa8] sm:$0xff] 0.0
    %43 = vst [vmem:[#allocation2 + $0xb0] sm:$0xff] 0.0
    %44 = vst [vmem:[#allocation2 + $0xb8] sm:$0xff] 0.0
    %45 = vst [vmem:[#allocation2 + $0xc0] sm:$0xff] 0.0
    %46 = vst [vmem:[#allocation2 + $0xc8] sm:$0xff] 0.0
    %47 = vst [vmem:[#allocation2 + $0xd0] sm:$0xff] 0.0
    %48 = vst [vmem:[#allocation2 + $0xd8] sm:$0xff] 0.0
    %49 = vst [vmem:[#allocation2 + $0xe0] sm:$0xff] 0.0
    %50 = vst [vmem:[#allocation2 + $0xe8] sm:$0xff] 0.0
    %51 = vst [vmem:[#allocation2 + $0xf0] sm:$0xff] 0.0
    %52 = vst [vmem:[#allocation2 + $0xf8] sm:$0xff] 0.0
  $region21: #{nifty_forward.5} parent=0 // pred_fallthru
    _
  %v53 = vld [vmem:[#allocation2] sm:$0xff]
  %v54 = vld [vmem:[#allocation2 + $0x8] sm:$0xff]
  %v55 = vld [vmem:[#allocation2 + $0x10] sm:$0xff]
  %v56 = vld [vmem:[#allocation2 + $0x18] sm:$0xff]
  %v57 = vld [vmem:[#allocation2 + $0x20] sm:$0xff]
  %v58 = vld [vmem:[#allocation2 + $0x28] sm:$0xff]
  %v59 = vld [vmem:[#allocation2 + $0x30] sm:$0xff]
  %v60 = vld [vmem:[#allocation2 + $0x38] sm:$0xff]
  %v61 = vld [vmem:[#allocation2 + $0x40] sm:$0xff]
  %v62 = vld [vmem:[#allocation2 + $0x48] sm:$0xff]
  %v63 = vld [vmem:[#allocation2 + $0x50] sm:$0xff]
  %v64 = vld [vmem:[#allocation2 + $0x58] sm:$0xff]
  %v65 = vld [vmem:[#allocation2 + $0x60] sm:$0xff]
  %v66 = vld [vmem:[#allocation2 + $0x68] sm:$0xff]
  %v67 = vld [vmem:[#allocation2 + $0x70] sm:$0xff]
  %v68 = vld [vmem:[#allocation2 + $0x78] sm:$0xff]
  %v69 = vld [vmem:[#allocation2 + $0x80] sm:$0xff]
  %v70 = vld [vmem:[#allocation2 + $0x88] sm:$0xff]
  %v71 = vld [vmem:[#allocation2 + $0x90] sm:$0xff]
  %v72 = vld [vmem:[#allocation2 + $0x98] sm:$0xff]
  %v73 = vld [vmem:[#allocation2 + $0xa0] sm:$0xff]
  %v74 = vld [vmem:[#allocation2 + $0xa8] sm:$0xff]
  %v75 = vld [vmem:[#allocation2 + $0xb0] sm:$0xff]
  %v76 = vld [vmem:[#allocation2 + $0xb8] sm:$0xff]
  %v77 = vld [vmem:[#allocation2 + $0xc0] sm:$0xff]
  %v78 = vld [vmem:[#allocation2 + $0xc8] sm:$0xff]
  %v79 = vld [vmem:[#allocation2 + $0xd0] sm:$0xff]
  %v80 = vld [vmem:[#allocation2 + $0xd8] sm:$0xff]
  %v81 = vld [vmem:[#allocation2 + $0xe0] sm:$0xff]
  %v82 = vld [vmem:[#allocation2 + $0xe8] sm:$0xff]
  %v83 = vld [vmem:[#allocation2 + $0xf0] sm:$0xff]
  %v84 = vld [vmem:[#allocation2 + $0xf8] sm:$0xff]
  %v85 = vld [vmem:[%s0] sm:$0xf]
  %v86 = vld [vmem:[%s0 + $0x4] sm:$0xf]
  %v87 = vld [vmem:[%s0 + $0x8] sm:$0xf]
  %v88 = vld [vmem:[%s0 + $0xc] sm:$0xf]
  %v89 = vld [vmem:[%s0 + $0x10] sm:$0xf]
  %v90 = vld [vmem:[%s0 + $0x14] sm:$0xf]
  %v91 = vld [vmem:[%s0 + $0x18] sm:$0xf]
  %v92 = vld [vmem:[%s0 + $0x1c] sm:$0xf]
  %v93 = vld [vmem:[%s0 + $0x20] sm:$0xf]
  %v94 = vld [vmem:[%s0 + $0x24] sm:$0xf]
  %v95 = vld [vmem:[%s0 + $0x28] sm:$0xf]
  %v96 = vld [vmem:[%s0 + $0x2c] sm:$0xf]
  %v97 = vld [vmem:[%s0 + $0x30] sm:$0xf]
  %v98 = vld [vmem:[%s0 + $0x34] sm:$0xf]
  %v99 = vld [vmem:[%s0 + $0x38] sm:$0xf]
  %v100 = vld [vmem:[%s0 + $0x3c] sm:$0xf]
  %v101 = vld [vmem:[%s0 + $0x40] sm:$0xf]
  %v102 = vld [vmem:[%s0 + $0x44] sm:$0xf]
  %v103 = vld [vmem:[%s0 + $0x48] sm:$0xf]
  %v104 = vld [vmem:[%s0 + $0x4c] sm:$0xf]
  %v105 = vld [vmem:[%s0 + $0x50] sm:$0xf]
  %v106 = vld [vmem:[%s0 + $0x54] sm:$0xf]
  %v107 = vld [vmem:[%s0 + $0x58] sm:$0xf]
  %v108 = vld [vmem:[%s0 + $0x5c] sm:$0xf]
  %v109 = vld [vmem:[%s0 + $0x60] sm:$0xf]
  %v110 = vld [vmem:[%s0 + $0x64] sm:$0xf]
  %v111 = vld [vmem:[%s0 + $0x68] sm:$0xf]
  %v112 = vld [vmem:[%s0 + $0x6c] sm:$0xf]
  %v113 = vld [vmem:[%s0 + $0x70] sm:$0xf]
  %v114 = vld [vmem:[%s0 + $0x74] sm:$0xf]
  %v115 = vld [vmem:[%s0 + $0x78] sm:$0xf]
  %v116 = vld [vmem:[%s0 + $0x7c] sm:$0xf]
  %v117 = vunpack.c.0.s8 %v85
  %v118 = vunpack.c.1.s8 %v85
  %v119 = vunpack.c.0.s8 %v86
  %v120 = vunpack.c.1.s8 %v86
  %v121 = vunpack.c.0.s8 %v87
  %v122 = vunpack.c.1.s8 %v87
  %v123 = vunpack.c.0.s8 %v88
  %v124 = vunpack.c.1.s8 %v88
  %v125 = vunpack.c.0.s8 %v89
  %v126 = vunpack.c.1.s8 %v89
  %v127 = vunpack.c.0.s8 %v90
  %v128 = vunpack.c.1.s8 %v90
  %v129 = vunpack.c.0.s8 %v91
  %v130 = vunpack.c.1.s8 %v91
  %v131 = vunpack.c.0.s8 %v92
  %v132 = vunpack.c.1.s8 %v92
  %v133 = vunpack.c.0.s8 %v93
  %v134 = vunpack.c.1.s8 %v93
  %v135 = vunpack.c.0.s8 %v94
  %v136 = vunpack.c.1.s8 %v94
  %v137 = vunpack.c.0.s8 %v95
  %v138 = vunpack.c.1.s8 %v95
  %v139 = vunpack.c.0.s8 %v96
  %v140 = vunpack.c.1.s8 %v96
  %v141 = vunpack.c.0.s8 %v97
  %v142 = vunpack.c.1.s8 %v97
  %v143 = vunpack.c.0.s8 %v98
  %v144 = vunpack.c.1.s8 %v98
  %v145 = vunpack.c.0.s8 %v99
  %v146 = vunpack.c.1.s8 %v99
  %v147 = vunpack.c.0.s8 %v100
  %v148 = vunpack.c.1.s8 %v100
  %v149 = vunpack.c.0.s8 %v101
  %v150 = vunpack.c.1.s8 %v101
  %v151 = vunpack.c.0.s8 %v102
  %v152 = vunpack.c.1.s8 %v102
  %v153 = vunpack.c.0.s8 %v103
  %v154 = vunpack.c.1.s8 %v103
  %v155 = vunpack.c.0.s8 %v104
  %v156 = vunpack.c.1.s8 %v104
  %v157 = vunpack.c.0.s8 %v105
  %v158 = vunpack.c.1.s8 %v105
  %v159 = vunpack.c.0.s8 %v106
  %v160 = vunpack.c.1.s8 %v106
  %v161 = vunpack.c.0.s8 %v107
  %v162 = vunpack.c.1.s8 %v107
  %v163 = vunpack.c.0.s8 %v108
  %v164 = vunpack.c.1.s8 %v108
  %v165 = vunpack.c.0.s8 %v109
  %v166 = vunpack.c.1.s8 %v109
  %v167 = vunpack.c.0.s8 %v110
  %v168 = vunpack.c.1.s8 %v110
  %v169 = vunpack.c.0.s8 %v111
  %v170 = vunpack.c.1.s8 %v111
  %v171 = vunpack.c.0.s8 %v112
  %v172 = vunpack.c.1.s8 %v112
  %v173 = vunpack.c.0.s8 %v113
  %v174 = vunpack.c.1.s8 %v113
  %v175 = vunpack.c.0.s8 %v114
  %v176 = vunpack.c.1.s8 %v114
  %v177 = vunpack.c.0.s8 %v115
  %v178 = vunpack.c.1.s8 %v115
  %v179 = vunpack.c.0.s8 %v116
  %v180 = vunpack.c.1.s8 %v116
  %v181 = vcvt.s32.f32 %v117
  %v182 = vcvt.s32.f32 %v118
  %v183 = vcvt.s32.f32 %v119
  %v184 = vcvt.s32.f32 %v120
  %v185 = vcvt.s32.f32 %v121
  %v186 = vcvt.s32.f32 %v122
  %v187 = vcvt.s32.f32 %v123
  %v188 = vcvt.s32.f32 %v124
  %v189 = vcvt.s32.f32 %v125
  %v190 = vcvt.s32.f32 %v126
  %v191 = vcvt.s32.f32 %v127
  %v192 = vcvt.s32.f32 %v128
  %v193 = vcvt.s32.f32 %v129
  %v194 = vcvt.s32.f32 %v130
  %v195 = vcvt.s32.f32 %v131
  %v196 = vcvt.s32.f32 %v132
  %v197 = vcvt.s32.f32 %v133
  %v198 = vcvt.s32.f32 %v134
  %v199 = vcvt.s32.f32 %v135
  %v200 = vcvt.s32.f32 %v136
  %v201 = vcvt.s32.f32 %v137
  %v202 = vcvt.s32.f32 %v138
  %v203 = vcvt.s32.f32 %v139
  %v204 = vcvt.s32.f32 %v140
  %v205 = vcvt.s32.f32 %v141
  %v206 = vcvt.s32.f32 %v142
  %v207 = vcvt.s32.f32 %v143
  %v208 = vcvt.s32.f32 %v144
  %v209 = vcvt.s32.f32 %v145
  %v210 = vcvt.s32.f32 %v146
  %v211 = vcvt.s32.f32 %v147
  %v212 = vcvt.s32.f32 %v148
  %v213 = vcvt.s32.f32 %v149
  %v214 = vcvt.s32.f32 %v150
  %v215 = vcvt.s32.f32 %v151
  %v216 = vcvt.s32.f32 %v152
  %v217 = vcvt.s32.f32 %v153
  %v218 = vcvt.s32.f32 %v154
  %v219 = vcvt.s32.f32 %v155
  %v220 = vcvt.s32.f32 %v156
  %v221 = vcvt.s32.f32 %v157
  %v222 = vcvt.s32.f32 %v158
  %v223 = vcvt.s32.f32 %v159
  %v224 = vcvt.s32.f32 %v160
  %v225 = vcvt.s32.f32 %v161
  %v226 = vcvt.s32.f32 %v162
  %v227 = vcvt.s32.f32 %v163
  %v228 = vcvt.s32.f32 %v164
  %v229 = vcvt.s32.f32 %v165
  %v230 = vcvt.s32.f32 %v166
  %v231 = vcvt.s32.f32 %v167
  %v232 = vcvt.s32.f32 %v168
  %v233 = vcvt.s32.f32 %v169
  %v234 = vcvt.s32.f32 %v170
  %v235 = vcvt.s32.f32 %v171
  %v236 = vcvt.s32.f32 %v172
  %v237 = vcvt.s32.f32 %v173
  %v238 = vcvt.s32.f32 %v174
  %v239 = vcvt.s32.f32 %v175
  %v240 = vcvt.s32.f32 %v176
  %v241 = vcvt.s32.f32 %v177
  %v242 = vcvt.s32.f32 %v178
  %v243 = vcvt.s32.f32 %v179
  %v244 = vcvt.s32.f32 %v180
  %v245 = vpack.c.bf16 %v183, %v181
  %v246 = vpack.c.bf16 %v184, %v182
  %v247 = vpack.c.bf16 %v187, %v185
  %v248 = vpack.c.bf16 %v188, %v186
  %v249 = vpack.c.bf16 %v191, %v189
  %v250 = vpack.c.bf16 %v192, %v190
  %v251 = vpack.c.bf16 %v195, %v193
  %v252 = vpack.c.bf16 %v196, %v194
  %v253 = vpack.c.bf16 %v199, %v197
  %v254 = vpack.c.bf16 %v200, %v198
  %v255 = vpack.c.bf16 %v203, %v201
  %v256 = vpack.c.bf16 %v204, %v202
  %v257 = vpack.c.bf16 %v207, %v205
  %v258 = vpack.c.bf16 %v208, %v206
  %v259 = vpack.c.bf16 %v211, %v209
  %v260 = vpack.c.bf16 %v212, %v210
  %v261 = vpack.c.bf16 %v215, %v213
  %v262 = vpack.c.bf16 %v216, %v214
  %v263 = vpack.c.bf16 %v219, %v217
  %v264 = vpack.c.bf16 %v220, %v218
  %v265 = vpack.c.bf16 %v223, %v221
  %v266 = vpack.c.bf16 %v224, %v222
  %v267 = vpack.c.bf16 %v227, %v225
  %v268 = vpack.c.bf16 %v228, %v226
  %v269 = vpack.c.bf16 %v231, %v229
  %v270 = vpack.c.bf16 %v232, %v230
  %v271 = vpack.c.bf16 %v235, %v233
  %v272 = vpack.c.bf16 %v236, %v234
  %v273 = vpack.c.bf16 %v239, %v237
  %v274 = vpack.c.bf16 %v240, %v238
  %v275 = vpack.c.bf16 %v243, %v241
  %v276 = vpack.c.bf16 %v244, %v242
  %v277 = vld [vmem:[%s1] sm:$0xf]
  %v278 = vld [vmem:[%s1 + $0x4] sm:$0xf]
  %v279 = vld [vmem:[%s1 + $0x8] sm:$0xf]
  %v280 = vld [vmem:[%s1 + $0xc] sm:$0xf]
  %v281 = vld [vmem:[%s1 + $0x10] sm:$0xf]
  %v282 = vld [vmem:[%s1 + $0x14] sm:$0xf]
  %v283 = vld [vmem:[%s1 + $0x18] sm:$0xf]
  %v284 = vld [vmem:[%s1 + $0x1c] sm:$0xf]
  %v285 = vld [vmem:[%s1 + $0x20] sm:$0xf]
  %v286 = vld [vmem:[%s1 + $0x24] sm:$0xf]
  %v287 = vld [vmem:[%s1 + $0x28] sm:$0xf]
  %v288 = vld [vmem:[%s1 + $0x2c] sm:$0xf]
  %v289 = vld [vmem:[%s1 + $0x30] sm:$0xf]
  %v290 = vld [vmem:[%s1 + $0x34] sm:$0xf]
  %v291 = vld [vmem:[%s1 + $0x38] sm:$0xf]
  %v292 = vld [vmem:[%s1 + $0x3c] sm:$0xf]
  %v293 = vld [vmem:[%s1 + $0x40] sm:$0xf]
  %v294 = vld [vmem:[%s1 + $0x44] sm:$0xf]
  %v295 = vld [vmem:[%s1 + $0x48] sm:$0xf]
  %v296 = vld [vmem:[%s1 + $0x4c] sm:$0xf]
  %v297 = vld [vmem:[%s1 + $0x50] sm:$0xf]
  %v298 = vld [vmem:[%s1 + $0x54] sm:$0xf]
  %v299 = vld [vmem:[%s1 + $0x58] sm:$0xf]
  %v300 = vld [vmem:[%s1 + $0x5c] sm:$0xf]
  %v301 = vld [vmem:[%s1 + $0x60] sm:$0xf]
  %v302 = vld [vmem:[%s1 + $0x64] sm:$0xf]
  %v303 = vld [vmem:[%s1 + $0x68] sm:$0xf]
  %v304 = vld [vmem:[%s1 + $0x6c] sm:$0xf]
  %v305 = vld [vmem:[%s1 + $0x70] sm:$0xf]
  %v306 = vld [vmem:[%s1 + $0x74] sm:$0xf]
  %v307 = vld [vmem:[%s1 + $0x78] sm:$0xf]
  %v308 = vld [vmem:[%s1 + $0x7c] sm:$0xf]
  %v341 = vunpack.c.l.b16 %v277
  %v342 = vunpack.c.l.b16 %v278
  %v343 = vunpack.c.l.b16 %v279
  %v344 = vunpack.c.l.b16 %v280
  %v345 = vunpack.c.l.b16 %v281
  %v346 = vunpack.c.l.b16 %v282
  %v347 = vunpack.c.l.b16 %v283
  %v348 = vunpack.c.l.b16 %v284
  %v349 = vunpack.c.l.b16 %v285
  %v350 = vunpack.c.l.b16 %v286
  %v351 = vunpack.c.l.b16 %v287
  %v352 = vunpack.c.l.b16 %v288
  %v353 = vunpack.c.l.b16 %v289
  %v354 = vunpack.c.l.b16 %v290
  %v355 = vunpack.c.l.b16 %v291
  %v356 = vunpack.c.l.b16 %v292
  %v357 = vunpack.c.l.b16 %v293
  %v358 = vunpack.c.l.b16 %v294
  %v359 = vunpack.c.l.b16 %v295
  %v360 = vunpack.c.l.b16 %v296
  %v361 = vunpack.c.l.b16 %v297
  %v362 = vunpack.c.l.b16 %v298
  %v363 = vunpack.c.l.b16 %v299
  %v364 = vunpack.c.l.b16 %v300
  %v365 = vunpack.c.l.b16 %v301
  %v366 = vunpack.c.l.b16 %v302
  %v367 = vunpack.c.l.b16 %v303
  %v368 = vunpack.c.l.b16 %v304
  %v369 = vunpack.c.l.b16 %v305
  %v370 = vunpack.c.l.b16 %v306
  %v371 = vunpack.c.l.b16 %v307
  %v372 = vunpack.c.l.b16 %v308
  %v373 = vpack.c.b16 %v342, %v341
  %v374 = vpack.c.b16 %v344, %v343
  %v375 = vpack.c.b16 %v346, %v345
  %v376 = vpack.c.b16 %v348, %v347
  %v377 = vpack.c.b16 %v350, %v349
  %v378 = vpack.c.b16 %v352, %v351
  %v379 = vpack.c.b16 %v354, %v353
  %v380 = vpack.c.b16 %v356, %v355
  %v381 = vpack.c.b16 %v358, %v357
  %v382 = vpack.c.b16 %v360, %v359
  %v383 = vpack.c.b16 %v362, %v361
  %v384 = vpack.c.b16 %v364, %v363
  %v385 = vpack.c.b16 %v366, %v365
  %v386 = vpack.c.b16 %v368, %v367
  %v387 = vpack.c.b16 %v370, %v369
  %v388 = vpack.c.b16 %v372, %v371
  %405 = vmatpush.bf16.msra.mxu0 %v380
  %406 = vmatpush.bf16.msra.mxu0 %v379
  %407 = vmatpush.bf16.msra.mxu0 %v378
  %408 = vmatpush.bf16.msra.mxu0 %v377
  %409 = vmatpush.bf16.msra.mxu0 %v376
  %410 = vmatpush.bf16.msra.mxu0 %v375
  %411 = vmatpush.bf16.msra.mxu0 %v374
  %412 = vmatpush.bf16.msra.mxu0 %v373
  %413 = vmatmul.bf16.gmra.mxu0 %v245
  %v414 = vpop.f32.mrf.mxu0
  %v415 = vadd.f32 0.0, %v414
  %v416 = vpop.f32.mrf.mxu0
  %v417 = vadd.f32 0.0, %v416
  %418 = vmatmul.bf16.gmra.mxu0 %v247
  %v419 = vpop.f32.mrf.mxu0
  %v420 = vadd.f32 0.0, %v419
  %v421 = vpop.f32.mrf.mxu0
  %v422 = vadd.f32 0.0, %v421
  %423 = vmatmul.bf16.gmra.mxu0 %v249
  %v424 = vpop.f32.mrf.mxu0
  %v425 = vadd.f32 0.0, %v424
  %v426 = vpop.f32.mrf.mxu0
  %v427 = vadd.f32 0.0, %v426
  %428 = vmatmul.bf16.gmra.mxu0 %v251
  %v429 = vpop.f32.mrf.mxu0
  %v430 = vadd.f32 0.0, %v429
  %v431 = vpop.f32.mrf.mxu0
  %v432 = vadd.f32 0.0, %v431
  %433 = vmatmul.bf16.gmra.mxu0 %v253
  %v434 = vpop.f32.mrf.mxu0
  %v435 = vadd.f32 0.0, %v434
  %v436 = vpop.f32.mrf.mxu0
  %v437 = vadd.f32 0.0, %v436
  %438 = vmatmul.bf16.gmra.mxu0 %v255
  %v439 = vpop.f32.mrf.mxu0
  %v440 = vadd.f32 0.0, %v439
  %v441 = vpop.f32.mrf.mxu0
  %v442 = vadd.f32 0.0, %v441
  %443 = vmatmul.bf16.gmra.mxu0 %v257
  %v444 = vpop.f32.mrf.mxu0
  %v445 = vadd.f32 0.0, %v444
  %v446 = vpop.f32.mrf.mxu0
  %v447 = vadd.f32 0.0, %v446
  %448 = vmatmul.bf16.gmra.mxu0 %v259
  %v449 = vpop.f32.mrf.mxu0
  %v450 = vadd.f32 0.0, %v449
  %v451 = vpop.f32.mrf.mxu0
  %v452 = vadd.f32 0.0, %v451
  %453 = vmatmul.bf16.gmra.mxu0 %v261
  %v454 = vpop.f32.mrf.mxu0
  %v455 = vadd.f32 0.0, %v454
  %v456 = vpop.f32.mrf.mxu0
  %v457 = vadd.f32 0.0, %v456
  %458 = vmatmul.bf16.gmra.mxu0 %v263
  %v459 = vpop.f32.mrf.mxu0
  %v460 = vadd.f32 0.0, %v459
  %v461 = vpop.f32.mrf.mxu0
  %v462 = vadd.f32 0.0, %v461
  %463 = vmatmul.bf16.gmra.mxu0 %v265
  %v464 = vpop.f32.mrf.mxu0
  %v465 = vadd.f32 0.0, %v464
  %v466 = vpop.f32.mrf.mxu0
  %v467 = vadd.f32 0.0, %v466
  %468 = vmatmul.bf16.gmra.mxu0 %v267
  %v469 = vpop.f32.mrf.mxu0
  %v470 = vadd.f32 0.0, %v469
  %v471 = vpop.f32.mrf.mxu0
  %v472 = vadd.f32 0.0, %v471
  %473 = vmatmul.bf16.gmra.mxu0 %v269
  %v474 = vpop.f32.mrf.mxu0
  %v475 = vadd.f32 0.0, %v474
  %v476 = vpop.f32.mrf.mxu0
  %v477 = vadd.f32 0.0, %v476
  %478 = vmatmul.bf16.gmra.mxu0 %v271
  %v479 = vpop.f32.mrf.mxu0
  %v480 = vadd.f32 0.0, %v479
  %v481 = vpop.f32.mrf.mxu0
  %v482 = vadd.f32 0.0, %v481
  %483 = vmatmul.bf16.gmra.mxu0 %v273
  %v484 = vpop.f32.mrf.mxu0
  %v485 = vadd.f32 0.0, %v484
  %v486 = vpop.f32.mrf.mxu0
  %v487 = vadd.f32 0.0, %v486
  %488 = vmatmul.bf16.gmra.mxu0 %v275
  %v489 = vpop.f32.mrf.mxu0
  %v490 = vadd.f32 0.0, %v489
  %v491 = vpop.f32.mrf.mxu0
  %v492 = vadd.f32 0.0, %v491
  %493 = vdwg.mxu0
  %494 = vmatpush.bf16.msra.mxu0 %v388
  %495 = vmatpush.bf16.msra.mxu0 %v387
  %496 = vmatpush.bf16.msra.mxu0 %v386
  %497 = vmatpush.bf16.msra.mxu0 %v385
  %498 = vmatpush.bf16.msra.mxu0 %v384
  %499 = vmatpush.bf16.msra.mxu0 %v383
  %500 = vmatpush.bf16.msra.mxu0 %v382
  %501 = vmatpush.bf16.msra.mxu0 %v381
  %502 = vmatmul.bf16.gmra.mxu0 %v246
  %v503 = vpop.f32.mrf.mxu0
  %v504 = vadd.f32 %v415, %v503
  %v505 = vpop.f32.mrf.mxu0
  %v506 = vadd.f32 %v417, %v505
  %507 = vmatmul.bf16.gmra.mxu0 %v248
  %v508 = vpop.f32.mrf.mxu0
  %v509 = vadd.f32 %v420, %v508
  %v510 = vpop.f32.mrf.mxu0
  %v511 = vadd.f32 %v422, %v510
  %512 = vmatmul.bf16.gmra.mxu0 %v250
  %v513 = vpop.f32.mrf.mxu0
  %v514 = vadd.f32 %v425, %v513
  %v515 = vpop.f32.mrf.mxu0
  %v516 = vadd.f32 %v427, %v515
  %517 = vmatmul.bf16.gmra.mxu0 %v252
  %v518 = vpop.f32.mrf.mxu0
  %v519 = vadd.f32 %v430, %v518
  %v520 = vpop.f32.mrf.mxu0
  %v521 = vadd.f32 %v432, %v520
  %522 = vmatmul.bf16.gmra.mxu0 %v254
  %v523 = vpop.f32.mrf.mxu0
  %v524 = vadd.f32 %v435, %v523
  %v525 = vpop.f32.mrf.mxu0
  %v526 = vadd.f32 %v437, %v525
  %527 = vmatmul.bf16.gmra.mxu0 %v256
  %v528 = vpop.f32.mrf.mxu0
  %v529 = vadd.f32 %v440, %v528
  %v530 = vpop.f32.mrf.mxu0
  %v531 = vadd.f32 %v442, %v530
  %532 = vmatmul.bf16.gmra.mxu0 %v258
  %v533 = vpop.f32.mrf.mxu0
  %v534 = vadd.f32 %v445, %v533
  %v535 = vpop.f32.mrf.mxu0
  %v536 = vadd.f32 %v447, %v535
  %537 = vmatmul.bf16.gmra.mxu0 %v260
  %v538 = vpop.f32.mrf.mxu0
  %v539 = vadd.f32 %v450, %v538
  %v540 = vpop.f32.mrf.mxu0
  %v541 = vadd.f32 %v452, %v540
  %542 = vmatmul.bf16.gmra.mxu0 %v262
  %v543 = vpop.f32.mrf.mxu0
  %v544 = vadd.f32 %v455, %v543
  %v545 = vpop.f32.mrf.mxu0
  %v546 = vadd.f32 %v457, %v545
  %547 = vmatmul.bf16.gmra.mxu0 %v264
  %v548 = vpop.f32.mrf.mxu0
  %v549 = vadd.f32 %v460, %v548
  %v550 = vpop.f32.mrf.mxu0
  %v551 = vadd.f32 %v462, %v550
  %552 = vmatmul.bf16.gmra.mxu0 %v266
  %v553 = vpop.f32.mrf.mxu0
  %v554 = vadd.f32 %v465, %v553
  %v555 = vpop.f32.mrf.mxu0
  %v556 = vadd.f32 %v467, %v555
  %557 = vmatmul.bf16.gmra.mxu0 %v268
  %v558 = vpop.f32.mrf.mxu0
  %v559 = vadd.f32 %v470, %v558
  %v560 = vpop.f32.mrf.mxu0
  %v561 = vadd.f32 %v472, %v560
  %562 = vmatmul.bf16.gmra.mxu0 %v270
  %v563 = vpop.f32.mrf.mxu0
  %v564 = vadd.f32 %v475, %v563
  %v565 = vpop.f32.mrf.mxu0
  %v566 = vadd.f32 %v477, %v565
  %567 = vmatmul.bf16.gmra.mxu0 %v272
  %v568 = vpop.f32.mrf.mxu0
  %v569 = vadd.f32 %v480, %v568
  %v570 = vpop.f32.mrf.mxu0
  %v571 = vadd.f32 %v482, %v570
  %572 = vmatmul.bf16.gmra.mxu0 %v274
  %v573 = vpop.f32.mrf.mxu0
  %v574 = vadd.f32 %v485, %v573
  %v575 = vpop.f32.mrf.mxu0
  %v576 = vadd.f32 %v487, %v575
  %577 = vmatmul.bf16.gmra.mxu0 %v276
  %v578 = vpop.f32.mrf.mxu0
  %v579 = vadd.f32 %v490, %v578
  %v580 = vpop.f32.mrf.mxu0
  %v581 = vadd.f32 %v492, %v580
  %582 = vdwg.mxu0
  %v583 = vadd.f32 %v53, %v504
  %v584 = vadd.f32 %v54, %v506
  %v585 = vadd.f32 %v55, %v509
  %v586 = vadd.f32 %v56, %v511
  %v587 = vadd.f32 %v57, %v514
  %v588 = vadd.f32 %v58, %v516
  %v589 = vadd.f32 %v59, %v519
  %v590 = vadd.f32 %v60, %v521
  %v591 = vadd.f32 %v61, %v524
  %v592 = vadd.f32 %v62, %v526
  %v593 = vadd.f32 %v63, %v529
  %v594 = vadd.f32 %v64, %v531
  %v595 = vadd.f32 %v65, %v534
  %v596 = vadd.f32 %v66, %v536
  %v597 = vadd.f32 %v67, %v539
  %v598 = vadd.f32 %v68, %v541
  %v599 = vadd.f32 %v69, %v544
  %v600 = vadd.f32 %v70, %v546
  %v601 = vadd.f32 %v71, %v549
  %v602 = vadd.f32 %v72, %v551
  %v603 = vadd.f32 %v73, %v554
  %v604 = vadd.f32 %v74, %v556
  %v605 = vadd.f32 %v75, %v559
  %v606 = vadd.f32 %v76, %v561
  %v607 = vadd.f32 %v77, %v564
  %v608 = vadd.f32 %v78, %v566
  %v609 = vadd.f32 %v79, %v569
  %v610 = vadd.f32 %v80, %v571
  %v611 = vadd.f32 %v81, %v574
  %v612 = vadd.f32 %v82, %v576
  %v613 = vadd.f32 %v83, %v579
  %v614 = vadd.f32 %v84, %v581
  %615 = vst [vmem:[#allocation2] sm:$0xff] %v583
  %616 = vst [vmem:[#allocation2 + $0x8] sm:$0xff] %v584
  %617 = vst [vmem:[#allocation2 + $0x10] sm:$0xff] %v585
  %618 = vst [vmem:[#allocation2 + $0x18] sm:$0xff] %v586
  %619 = vst [vmem:[#allocation2 + $0x20] sm:$0xff] %v587
  %620 = vst [vmem:[#allocation2 + $0x28] sm:$0xff] %v588
  %621 = vst [vmem:[#allocation2 + $0x30] sm:$0xff] %v589
  %622 = vst [vmem:[#allocation2 + $0x38] sm:$0xff] %v590
  %623 = vst [vmem:[#allocation2 + $0x40] sm:$0xff] %v591
  %624 = vst [vmem:[#allocation2 + $0x48] sm:$0xff] %v592
  %625 = vst [vmem:[#allocation2 + $0x50] sm:$0xff] %v593
  %626 = vst [vmem:[#allocation2 + $0x58] sm:$0xff] %v594
  %627 = vst [vmem:[#allocation2 + $0x60] sm:$0xff] %v595
  %628 = vst [vmem:[#allocation2 + $0x68] sm:$0xff] %v596
  %629 = vst [vmem:[#allocation2 + $0x70] sm:$0xff] %v597
  %630 = vst [vmem:[#allocation2 + $0x78] sm:$0xff] %v598
  %631 = vst [vmem:[#allocation2 + $0x80] sm:$0xff] %v599
  %632 = vst [vmem:[#allocation2 + $0x88] sm:$0xff] %v600
  %633 = vst [vmem:[#allocation2 + $0x90] sm:$0xff] %v601
  %634 = vst [vmem:[#allocation2 + $0x98] sm:$0xff] %v602
  %635 = vst [vmem:[#allocation2 + $0xa0] sm:$0xff] %v603
  %636 = vst [vmem:[#allocation2 + $0xa8] sm:$0xff] %v604
  %637 = vst [vmem:[#allocation2 + $0xb0] sm:$0xff] %v605
  %638 = vst [vmem:[#allocation2 + $0xb8] sm:$0xff] %v606
  %639 = vst [vmem:[#allocation2 + $0xc0] sm:$0xff] %v607
  %640 = vst [vmem:[#allocation2 + $0xc8] sm:$0xff] %v608
  %641 = vst [vmem:[#allocation2 + $0xd0] sm:$0xff] %v609
  %642 = vst [vmem:[#allocation2 + $0xd8] sm:$0xff] %v610
  %643 = vst [vmem:[#allocation2 + $0xe0] sm:$0xff] %v611
  %644 = vst [vmem:[#allocation2 + $0xe8] sm:$0xff] %v612
  %645 = vst [vmem:[#allocation2 + $0xf0] sm:$0xff] %v613
  %646 = vst [vmem:[#allocation2 + $0xf8] sm:$0xff] %v614
  // Predicated region
  $region22: #{nifty_forward.5} parent=0 // pred_check
    %p647 = pneg %p17
  $region23: #{nifty_forward.5} parent=0 // pred_check_branch
    %649 = sbr.rel (%p647) target = $region25
  $region24: #{nifty_forward.5} parent=0 // pred_region
    %v650 = vld [vmem:[%s2] sm:$0xf]
    %v651 = vld [vmem:[%s2 + $0x4] sm:$0xf]
    %v652 = vld [vmem:[%s2 + $0x8] sm:$0xf]
    %v653 = vld [vmem:[%s2 + $0xc] sm:$0xf]
    %v654 = vld [vmem:[%s2 + $0x10] sm:$0xf]
    %v655 = vld [vmem:[%s2 + $0x14] sm:$0xf]
    %v656 = vld [vmem:[%s2 + $0x18] sm:$0xf]
    %v657 = vld [vmem:[%s2 + $0x1c] sm:$0xf]
    %v658 = vld [vmem:[%s2 + $0x20] sm:$0xf]
    %v659 = vld [vmem:[%s2 + $0x24] sm:$0xf]
    %v660 = vld [vmem:[%s2 + $0x28] sm:$0xf]
    %v661 = vld [vmem:[%s2 + $0x2c] sm:$0xf]
    %v662 = vld [vmem:[%s2 + $0x30] sm:$0xf]
    %v663 = vld [vmem:[%s2 + $0x34] sm:$0xf]
    %v664 = vld [vmem:[%s2 + $0x38] sm:$0xf]
    %v665 = vld [vmem:[%s2 + $0x3c] sm:$0xf]
    %v666 = vld [vmem:[%s2 + $0x40] sm:$0xf]
    %v667 = vld [vmem:[%s2 + $0x44] sm:$0xf]
    %v668 = vld [vmem:[%s2 + $0x48] sm:$0xf]
    %v669 = vld [vmem:[%s2 + $0x4c] sm:$0xf]
    %v670 = vld [vmem:[%s2 + $0x50] sm:$0xf]
    %v671 = vld [vmem:[%s2 + $0x54] sm:$0xf]
    %v672 = vld [vmem:[%s2 + $0x58] sm:$0xf]
    %v673 = vld [vmem:[%s2 + $0x5c] sm:$0xf]
    %v674 = vld [vmem:[%s2 + $0x60] sm:$0xf]
    %v675 = vld [vmem:[%s2 + $0x64] sm:$0xf]
    %v676 = vld [vmem:[%s2 + $0x68] sm:$0xf]
    %v677 = vld [vmem:[%s2 + $0x6c] sm:$0xf]
    %v678 = vld [vmem:[%s2 + $0x70] sm:$0xf]
    %v679 = vld [vmem:[%s2 + $0x74] sm:$0xf]
    %v680 = vld [vmem:[%s2 + $0x78] sm:$0xf]
    %v681 = vld [vmem:[%s2 + $0x7c] sm:$0xf]
    %v682 = vunpack.c.l.bf16 %v650
    %v683 = vunpack.c.l.bf16 %v651
    %v684 = vunpack.c.l.bf16 %v652
    %v685 = vunpack.c.l.bf16 %v653
    %v686 = vunpack.c.l.bf16 %v654
    %v687 = vunpack.c.l.bf16 %v655
    %v688 = vunpack.c.l.bf16 %v656
    %v689 = vunpack.c.l.bf16 %v657
    %v690 = vunpack.c.l.bf16 %v658
    %v691 = vunpack.c.l.bf16 %v659
    %v692 = vunpack.c.l.bf16 %v660
    %v693 = vunpack.c.l.bf16 %v661
    %v694 = vunpack.c.l.bf16 %v662
    %v695 = vunpack.c.l.bf16 %v663
    %v696 = vunpack.c.l.bf16 %v664
    %v697 = vunpack.c.l.bf16 %v665
    %v698 = vunpack.c.l.bf16 %v666
    %v699 = vunpack.c.l.bf16 %v667
    %v700 = vunpack.c.l.bf16 %v668
    %v701 = vunpack.c.l.bf16 %v669
    %v702 = vunpack.c.l.bf16 %v670
    %v703 = vunpack.c.l.bf16 %v671
    %v704 = vunpack.c.l.bf16 %v672
    %v705 = vunpack.c.l.bf16 %v673
    %v706 = vunpack.c.l.bf16 %v674
    %v707 = vunpack.c.l.bf16 %v675
    %v708 = vunpack.c.l.bf16 %v676
    %v709 = vunpack.c.l.bf16 %v677
    %v710 = vunpack.c.l.bf16 %v678
    %v711 = vunpack.c.l.bf16 %v679
    %v712 = vunpack.c.l.bf16 %v680
    %v713 = vunpack.c.l.bf16 %v681
    %v714 = vld [vmem:[%s3] sm:$0xff]
    %v715 = vld [vmem:[%s3 + $0x8] sm:$0xff]
    %v716 = vld [vmem:[%s3 + $0x10] sm:$0xff]
    %v717 = vld [vmem:[%s3 + $0x18] sm:$0xff]
    %v718 = vld [vmem:[%s3 + $0x20] sm:$0xff]
    %v719 = vld [vmem:[%s3 + $0x28] sm:$0xff]
    %v720 = vld [vmem:[%s3 + $0x30] sm:$0xff]
    %v721 = vld [vmem:[%s3 + $0x38] sm:$0xff]
    %v722 = vld [vmem:[%s3 + $0x40] sm:$0xff]
    %v723 = vld [vmem:[%s3 + $0x48] sm:$0xff]
    %v724 = vld [vmem:[%s3 + $0x50] sm:$0xff]
    %v725 = vld [vmem:[%s3 + $0x58] sm:$0xff]
    %v726 = vld [vmem:[%s3 + $0x60] sm:$0xff]
    %v727 = vld [vmem:[%s3 + $0x68] sm:$0xff]
    %v728 = vld [vmem:[%s3 + $0x70] sm:$0xff]
    %v729 = vld [vmem:[%s3 + $0x78] sm:$0xff]
    %v730 = vld [vmem:[%s3 + $0x80] sm:$0xff]
    %v731 = vld [vmem:[%s3 + $0x88] sm:$0xff]
    %v732 = vld [vmem:[%s3 + $0x90] sm:$0xff]
    %v733 = vld [vmem:[%s3 + $0x98] sm:$0xff]
    %v734 = vld [vmem:[%s3 + $0xa0] sm:$0xff]
    %v735 = vld [vmem:[%s3 + $0xa8] sm:$0xff]
    %v736 = vld [vmem:[%s3 + $0xb0] sm:$0xff]
    %v737 = vld [vmem:[%s3 + $0xb8] sm:$0xff]
    %v738 = vld [vmem:[%s3 + $0xc0] sm:$0xff]
    %v739 = vld [vmem:[%s3 + $0xc8] sm:$0xff]
    %v740 = vld [vmem:[%s3 + $0xd0] sm:$0xff]
    %v741 = vld [vmem:[%s3 + $0xd8] sm:$0xff]
    %v742 = vld [vmem:[%s3 + $0xe0] sm:$0xff]
    %v743 = vld [vmem:[%s3 + $0xe8] sm:$0xff]
    %v744 = vld [vmem:[%s3 + $0xf0] sm:$0xff]
    %v745 = vld [vmem:[%s3 + $0xf8] sm:$0xff]
    %v746 = vld [vmem:[#allocation2] sm:$0xff]
    %v747 = vld [vmem:[#allocation2 + $0x8] sm:$0xff]
    %v748 = vld [vmem:[#allocation2 + $0x10] sm:$0xff]
    %v749 = vld [vmem:[#allocation2 + $0x18] sm:$0xff]
    %v750 = vld [vmem:[#allocation2 + $0x20] sm:$0xff]
    %v751 = vld [vmem:[#allocation2 + $0x28] sm:$0xff]
    %v752 = vld [vmem:[#allocation2 + $0x30] sm:$0xff]
    %v753 = vld [vmem:[#allocation2 + $0x38] sm:$0xff]
    %v754 = vld [vmem:[#allocation2 + $0x40] sm:$0xff]
    %v755 = vld [vmem:[#allocation2 + $0x48] sm:$0xff]
    %v756 = vld [vmem:[#allocation2 + $0x50] sm:$0xff]
    %v757 = vld [vmem:[#allocation2 + $0x58] sm:$0xff]
    %v758 = vld [vmem:[#allocation2 + $0x60] sm:$0xff]
    %v759 = vld [vmem:[#allocation2 + $0x68] sm:$0xff]
    %v760 = vld [vmem:[#allocation2 + $0x70] sm:$0xff]
    %v761 = vld [vmem:[#allocation2 + $0x78] sm:$0xff]
    %v762 = vld [vmem:[#allocation2 + $0x80] sm:$0xff]
    %v763 = vld [vmem:[#allocation2 + $0x88] sm:$0xff]
    %v764 = vld [vmem:[#allocation2 + $0x90] sm:$0xff]
    %v765 = vld [vmem:[#allocation2 + $0x98] sm:$0xff]
    %v766 = vld [vmem:[#allocation2 + $0xa0] sm:$0xff]
    %v767 = vld [vmem:[#allocation2 + $0xa8] sm:$0xff]
    %v768 = vld [vmem:[#allocation2 + $0xb0] sm:$0xff]
    %v769 = vld [vmem:[#allocation2 + $0xb8] sm:$0xff]
    %v770 = vld [vmem:[#allocation2 + $0xc0] sm:$0xff]
    %v771 = vld [vmem:[#allocation2 + $0xc8] sm:$0xff]
    %v772 = vld [vmem:[#allocation2 + $0xd0] sm:$0xff]
    %v773 = vld [vmem:[#allocation2 + $0xd8] sm:$0xff]
    %v774 = vld [vmem:[#allocation2 + $0xe0] sm:$0xff]
    %v775 = vld [vmem:[#allocation2 + $0xe8] sm:$0xff]
    %v776 = vld [vmem:[#allocation2 + $0xf0] sm:$0xff]
    %v777 = vld [vmem:[#allocation2 + $0xf8] sm:$0xff]
    %779 = vset.pattern.permute.xlu0 0
    %780 = vperm.xlu0 %779, %v714
    %v781 = vpop.permute.xlu0 %780
    %784 = vset.pattern.permute.xlu0 0
    %785 = vperm.xlu0 %784, %v715
    %v786 = vpop.permute.xlu0 %785
    %789 = vset.pattern.permute.xlu0 0
    %790 = vperm.xlu0 %789, %v716
    %v791 = vpop.permute.xlu0 %790
    %794 = vset.pattern.permute.xlu0 0
    %795 = vperm.xlu0 %794, %v717
    %v796 = vpop.permute.xlu0 %795
    %799 = vset.pattern.permute.xlu0 0
    %800 = vperm.xlu0 %799, %v718
    %v801 = vpop.permute.xlu0 %800
    %804 = vset.pattern.permute.xlu0 0
    %805 = vperm.xlu0 %804, %v719
    %v806 = vpop.permute.xlu0 %805
    %809 = vset.pattern.permute.xlu0 0
    %810 = vperm.xlu0 %809, %v720
    %v811 = vpop.permute.xlu0 %810
    %814 = vset.pattern.permute.xlu0 0
    %815 = vperm.xlu0 %814, %v721
    %v816 = vpop.permute.xlu0 %815
    %819 = vset.pattern.permute.xlu0 0
    %820 = vperm.xlu0 %819, %v722
    %v821 = vpop.permute.xlu0 %820
    %824 = vset.pattern.permute.xlu0 0
    %825 = vperm.xlu0 %824, %v723
    %v826 = vpop.permute.xlu0 %825
    %829 = vset.pattern.permute.xlu0 0
    %830 = vperm.xlu0 %829, %v724
    %v831 = vpop.permute.xlu0 %830
    %834 = vset.pattern.permute.xlu0 0
    %835 = vperm.xlu0 %834, %v725
    %v836 = vpop.permute.xlu0 %835
    %839 = vset.pattern.permute.xlu0 0
    %840 = vperm.xlu0 %839, %v726
    %v841 = vpop.permute.xlu0 %840
    %844 = vset.pattern.permute.xlu0 0
    %845 = vperm.xlu0 %844, %v727
    %v846 = vpop.permute.xlu0 %845
    %849 = vset.pattern.permute.xlu0 0
    %850 = vperm.xlu0 %849, %v728
    %v851 = vpop.permute.xlu0 %850
    %854 = vset.pattern.permute.xlu0 0
    %855 = vperm.xlu0 %854, %v729
    %v856 = vpop.permute.xlu0 %855
    %859 = vset.pattern.permute.xlu0 0
    %860 = vperm.xlu0 %859, %v730
    %v861 = vpop.permute.xlu0 %860
    %864 = vset.pattern.permute.xlu0 0
    %865 = vperm.xlu0 %864, %v731
    %v866 = vpop.permute.xlu0 %865
    %869 = vset.pattern.permute.xlu0 0
    %870 = vperm.xlu0 %869, %v732
    %v871 = vpop.permute.xlu0 %870
    %874 = vset.pattern.permute.xlu0 0
    %875 = vperm.xlu0 %874, %v733
    %v876 = vpop.permute.xlu0 %875
    %879 = vset.pattern.permute.xlu0 0
    %880 = vperm.xlu0 %879, %v734
    %v881 = vpop.permute.xlu0 %880
    %884 = vset.pattern.permute.xlu0 0
    %885 = vperm.xlu0 %884, %v735
    %v886 = vpop.permute.xlu0 %885
    %889 = vset.pattern.permute.xlu0 0
    %890 = vperm.xlu0 %889, %v736
    %v891 = vpop.permute.xlu0 %890
    %894 = vset.pattern.permute.xlu0 0
    %895 = vperm.xlu0 %894, %v737
    %v896 = vpop.permute.xlu0 %895
    %899 = vset.pattern.permute.xlu0 0
    %900 = vperm.xlu0 %899, %v738
    %v901 = vpop.permute.xlu0 %900
    %904 = vset.pattern.permute.xlu0 0
    %905 = vperm.xlu0 %904, %v739
    %v906 = vpop.permute.xlu0 %905
    %909 = vset.pattern.permute.xlu0 0
    %910 = vperm.xlu0 %909, %v740
    %v911 = vpop.permute.xlu0 %910
    %914 = vset.pattern.permute.xlu0 0
    %915 = vperm.xlu0 %914, %v741
    %v916 = vpop.permute.xlu0 %915
    %919 = vset.pattern.permute.xlu0 0
    %920 = vperm.xlu0 %919, %v742
    %v921 = vpop.permute.xlu0 %920
    %924 = vset.pattern.permute.xlu0 0
    %925 = vperm.xlu0 %924, %v743
    %v926 = vpop.permute.xlu0 %925
    %929 = vset.pattern.permute.xlu0 0
    %930 = vperm.xlu0 %929, %v744
    %v931 = vpop.permute.xlu0 %930
    %934 = vset.pattern.permute.xlu0 0
    %935 = vperm.xlu0 %934, %v745
    %v936 = vpop.permute.xlu0 %935
    %v938 = vmul.f32 %v781, %v746
    %v939 = vmul.f32 %v786, %v747
    %v940 = vmul.f32 %v791, %v748
    %v941 = vmul.f32 %v796, %v749
    %v942 = vmul.f32 %v801, %v750
    %v943 = vmul.f32 %v806, %v751
    %v944 = vmul.f32 %v811, %v752
    %v945 = vmul.f32 %v816, %v753
    %v946 = vmul.f32 %v821, %v754
    %v947 = vmul.f32 %v826, %v755
    %v948 = vmul.f32 %v831, %v756
    %v949 = vmul.f32 %v836, %v757
    %v950 = vmul.f32 %v841, %v758
    %v951 = vmul.f32 %v846, %v759
    %v952 = vmul.f32 %v851, %v760
    %v953 = vmul.f32 %v856, %v761
    %v954 = vmul.f32 %v861, %v762
    %v955 = vmul.f32 %v866, %v763
    %v956 = vmul.f32 %v871, %v764
    %v957 = vmul.f32 %v876, %v765
    %v958 = vmul.f32 %v881, %v766
    %v959 = vmul.f32 %v886, %v767
    %v960 = vmul.f32 %v891, %v768
    %v961 = vmul.f32 %v896, %v769
    %v962 = vmul.f32 %v901, %v770
    %v963 = vmul.f32 %v906, %v771
    %v964 = vmul.f32 %v911, %v772
    %v965 = vmul.f32 %v916, %v773
    %v966 = vmul.f32 %v921, %v774
    %v967 = vmul.f32 %v926, %v775
    %v968 = vmul.f32 %v931, %v776
    %v969 = vmul.f32 %v936, %v777
    %v970 = vadd.f32 %v682, %v938
    %v971 = vadd.f32 %v683, %v939
    %v972 = vadd.f32 %v684, %v940
    %v973 = vadd.f32 %v685, %v941
    %v974 = vadd.f32 %v686, %v942
    %v975 = vadd.f32 %v687, %v943
    %v976 = vadd.f32 %v688, %v944
    %v977 = vadd.f32 %v689, %v945
    %v978 = vadd.f32 %v690, %v946
    %v979 = vadd.f32 %v691, %v947
    %v980 = vadd.f32 %v692, %v948
    %v981 = vadd.f32 %v693, %v949
    %v982 = vadd.f32 %v694, %v950
    %v983 = vadd.f32 %v695, %v951
    %v984 = vadd.f32 %v696, %v952
    %v985 = vadd.f32 %v697, %v953
    %v986 = vadd.f32 %v698, %v954
    %v987 = vadd.f32 %v699, %v955
    %v988 = vadd.f32 %v700, %v956
    %v989 = vadd.f32 %v701, %v957
    %v990 = vadd.f32 %v702, %v958
    %v991 = vadd.f32 %v703, %v959
    %v992 = vadd.f32 %v704, %v960
    %v993 = vadd.f32 %v705, %v961
    %v994 = vadd.f32 %v706, %v962
    %v995 = vadd.f32 %v707, %v963
    %v996 = vadd.f32 %v708, %v964
    %v997 = vadd.f32 %v709, %v965
    %v998 = vadd.f32 %v710, %v966
    %v999 = vadd.f32 %v711, %v967
    %v1000 = vadd.f32 %v712, %v968
    %v1001 = vadd.f32 %v713, %v969
    %v1002 = vmul.f32 %v970, %v970
    %v1003 = vmul.f32 %v971, %v971
    %v1004 = vmul.f32 %v972, %v972
    %v1005 = vmul.f32 %v973, %v973
    %v1006 = vmul.f32 %v974, %v974
    %v1007 = vmul.f32 %v975, %v975
    %v1008 = vmul.f32 %v976, %v976
    %v1009 = vmul.f32 %v977, %v977
    %v1010 = vmul.f32 %v978, %v978
    %v1011 = vmul.f32 %v979, %v979
    %v1012 = vmul.f32 %v980, %v980
    %v1013 = vmul.f32 %v981, %v981
    %v1014 = vmul.f32 %v982, %v982
    %v1015 = vmul.f32 %v983, %v983
    %v1016 = vmul.f32 %v984, %v984
    %v1017 = vmul.f32 %v985, %v985
    %v1018 = vmul.f32 %v986, %v986
    %v1019 = vmul.f32 %v987, %v987
    %v1020 = vmul.f32 %v988, %v988
    %v1021 = vmul.f32 %v989, %v989
    %v1022 = vmul.f32 %v990, %v990
    %v1023 = vmul.f32 %v991, %v991
    %v1024 = vmul.f32 %v992, %v992
    %v1025 = vmul.f32 %v993, %v993
    %v1026 = vmul.f32 %v994, %v994
    %v1027 = vmul.f32 %v995, %v995
    %v1028 = vmul.f32 %v996, %v996
    %v1029 = vmul.f32 %v997, %v997
    %v1030 = vmul.f32 %v998, %v998
    %v1031 = vmul.f32 %v999, %v999
    %v1032 = vmul.f32 %v1000, %v1000
    %v1033 = vmul.f32 %v1001, %v1001
    %1034 = vadd.xlane.f32.xlu0 %v1002
    %v1035 = vpop.xlane.xlu0 %1034
    %1036 = vadd.xlane.f32.xlu0 %v1003
    %v1037 = vpop.xlane.xlu0 %1036
    %1038 = vadd.xlane.f32.xlu0 %v1004
    %v1039 = vpop.xlane.xlu0 %1038
    %1040 = vadd.xlane.f32.xlu0 %v1005
    %v1041 = vpop.xlane.xlu0 %1040
    %1042 = vadd.xlane.f32.xlu0 %v1006
    %v1043 = vpop.xlane.xlu0 %1042
    %1044 = vadd.xlane.f32.xlu0 %v1007
    %v1045 = vpop.xlane.xlu0 %1044
    %1046 = vadd.xlane.f32.xlu0 %v1008
    %v1047 = vpop.xlane.xlu0 %1046
    %1048 = vadd.xlane.f32.xlu0 %v1009
    %v1049 = vpop.xlane.xlu0 %1048
    %1050 = vadd.xlane.f32.xlu0 %v1010
    %v1051 = vpop.xlane.xlu0 %1050
    %1052 = vadd.xlane.f32.xlu0 %v1011
    %v1053 = vpop.xlane.xlu0 %1052
    %1054 = vadd.xlane.f32.xlu0 %v1012
    %v1055 = vpop.xlane.xlu0 %1054
    %1056 = vadd.xlane.f32.xlu0 %v1013
    %v1057 = vpop.xlane.xlu0 %1056
    %1058 = vadd.xlane.f32.xlu0 %v1014
    %v1059 = vpop.xlane.xlu0 %1058
    %1060 = vadd.xlane.f32.xlu0 %v1015
    %v1061 = vpop.xlane.xlu0 %1060
    %1062 = vadd.xlane.f32.xlu0 %v1016
    %v1063 = vpop.xlane.xlu0 %1062
    %1064 = vadd.xlane.f32.xlu0 %v1017
    %v1065 = vpop.xlane.xlu0 %1064
    %1066 = vadd.xlane.f32.xlu0 %v1018
    %v1067 = vpop.xlane.xlu0 %1066
    %1068 = vadd.xlane.f32.xlu0 %v1019
    %v1069 = vpop.xlane.xlu0 %1068
    %1070 = vadd.xlane.f32.xlu0 %v1020
    %v1071 = vpop.xlane.xlu0 %1070
    %1072 = vadd.xlane.f32.xlu0 %v1021
    %v1073 = vpop.xlane.xlu0 %1072
    %1074 = vadd.xlane.f32.xlu0 %v1022
    %v1075 = vpop.xlane.xlu0 %1074
    %1076 = vadd.xlane.f32.xlu0 %v1023
    %v1077 = vpop.xlane.xlu0 %1076
    %1078 = vadd.xlane.f32.xlu0 %v1024
    %v1079 = vpop.xlane.xlu0 %1078
    %1080 = vadd.xlane.f32.xlu0 %v1025
    %v1081 = vpop.xlane.xlu0 %1080
    %1082 = vadd.xlane.f32.xlu0 %v1026
    %v1083 = vpop.xlane.xlu0 %1082
    %1084 = vadd.xlane.f32.xlu0 %v1027
    %v1085 = vpop.xlane.xlu0 %1084
    %1086 = vadd.xlane.f32.xlu0 %v1028
    %v1087 = vpop.xlane.xlu0 %1086
    %1088 = vadd.xlane.f32.xlu0 %v1029
    %v1089 = vpop.xlane.xlu0 %1088
    %1090 = vadd.xlane.f32.xlu0 %v1030
    %v1091 = vpop.xlane.xlu0 %1090
    %1092 = vadd.xlane.f32.xlu0 %v1031
    %v1093 = vpop.xlane.xlu0 %1092
    %1094 = vadd.xlane.f32.xlu0 %v1032
    %v1095 = vpop.xlane.xlu0 %1094
    %1096 = vadd.xlane.f32.xlu0 %v1033
    %v1097 = vpop.xlane.xlu0 %1096
    %v1098 = vmax.f32 %v1035, 1e-24
    %v1099 = vmax.f32 %v1037, 1e-24
    %v1100 = vmax.f32 %v1039, 1e-24
    %v1101 = vmax.f32 %v1041, 1e-24
    %v1102 = vmax.f32 %v1043, 1e-24
    %v1103 = vmax.f32 %v1045, 1e-24
    %v1104 = vmax.f32 %v1047, 1e-24
    %v1105 = vmax.f32 %v1049, 1e-24
    %v1106 = vmax.f32 %v1051, 1e-24
    %v1107 = vmax.f32 %v1053, 1e-24
    %v1108 = vmax.f32 %v1055, 1e-24
    %v1109 = vmax.f32 %v1057, 1e-24
    %v1110 = vmax.f32 %v1059, 1e-24
    %v1111 = vmax.f32 %v1061, 1e-24
    %v1112 = vmax.f32 %v1063, 1e-24
    %v1113 = vmax.f32 %v1065, 1e-24
    %v1114 = vmax.f32 %v1067, 1e-24
    %v1115 = vmax.f32 %v1069, 1e-24
    %v1116 = vmax.f32 %v1071, 1e-24
    %v1117 = vmax.f32 %v1073, 1e-24
    %v1118 = vmax.f32 %v1075, 1e-24
    %v1119 = vmax.f32 %v1077, 1e-24
    %v1120 = vmax.f32 %v1079, 1e-24
    %v1121 = vmax.f32 %v1081, 1e-24
    %v1122 = vmax.f32 %v1083, 1e-24
    %v1123 = vmax.f32 %v1085, 1e-24
    %v1124 = vmax.f32 %v1087, 1e-24
    %v1125 = vmax.f32 %v1089, 1e-24
    %v1126 = vmax.f32 %v1091, 1e-24
    %v1127 = vmax.f32 %v1093, 1e-24
    %v1128 = vmax.f32 %v1095, 1e-24
    %v1129 = vmax.f32 %v1097, 1e-24
    %v1130 = vrsqrt.pop %v1098
    %v1131 = vmul.f32 %v1130, %v1098
    %v1132 = vmul.f32 %v1131, %v1130
    %v1133 = vmul.f32 0.5, %v1132
    %v1134 = vsub.f32 1.5, %v1133
    %v1135 = vmul.f32 %v1130, %v1134
    %vm1136 = vweird.f32 %v1098
    %vm1137 = vweird.f32 %v1130
    %vm1138 = vmor %vm1136, %vm1137
    %v1139 = vsel %vm1138, %v1130, %v1135
    %v1140 = vrsqrt.pop %v1099
    %v1141 = vmul.f32 %v1140, %v1099
    %v1142 = vmul.f32 %v1141, %v1140
    %v1143 = vmul.f32 0.5, %v1142
    %v1144 = vsub.f32 1.5, %v1143
    %v1145 = vmul.f32 %v1140, %v1144
    %vm1146 = vweird.f32 %v1099
    %vm1147 = vweird.f32 %v1140
    %vm1148 = vmor %vm1146, %vm1147
    %v1149 = vsel %vm1148, %v1140, %v1145
    %v1150 = vrsqrt.pop %v1100
    %v1151 = vmul.f32 %v1150, %v1100
    %v1152 = vmul.f32 %v1151, %v1150
    %v1153 = vmul.f32 0.5, %v1152
    %v1154 = vsub.f32 1.5, %v1153
    %v1155 = vmul.f32 %v1150, %v1154
    %vm1156 = vweird.f32 %v1100
    %vm1157 = vweird.f32 %v1150
    %vm1158 = vmor %vm1156, %vm1157
    %v1159 = vsel %vm1158, %v1150, %v1155
    %v1160 = vrsqrt.pop %v1101
    %v1161 = vmul.f32 %v1160, %v1101
    %v1162 = vmul.f32 %v1161, %v1160
    %v1163 = vmul.f32 0.5, %v1162
    %v1164 = vsub.f32 1.5, %v1163
    %v1165 = vmul.f32 %v1160, %v1164
    %vm1166 = vweird.f32 %v1101
    %vm1167 = vweird.f32 %v1160
    %vm1168 = vmor %vm1166, %vm1167
    %v1169 = vsel %vm1168, %v1160, %v1165
    %v1170 = vrsqrt.pop %v1102
    %v1171 = vmul.f32 %v1170, %v1102
    %v1172 = vmul.f32 %v1171, %v1170
    %v1173 = vmul.f32 0.5, %v1172
    %v1174 = vsub.f32 1.5, %v1173
    %v1175 = vmul.f32 %v1170, %v1174
    %vm1176 = vweird.f32 %v1102
    %vm1177 = vweird.f32 %v1170
    %vm1178 = vmor %vm1176, %vm1177
    %v1179 = vsel %vm1178, %v1170, %v1175
    %v1180 = vrsqrt.pop %v1103
    %v1181 = vmul.f32 %v1180, %v1103
    %v1182 = vmul.f32 %v1181, %v1180
    %v1183 = vmul.f32 0.5, %v1182
    %v1184 = vsub.f32 1.5, %v1183
    %v1185 = vmul.f32 %v1180, %v1184
    %vm1186 = vweird.f32 %v1103
    %vm1187 = vweird.f32 %v1180
    %vm1188 = vmor %vm1186, %vm1187
    %v1189 = vsel %vm1188, %v1180, %v1185
    %v1190 = vrsqrt.pop %v1104
    %v1191 = vmul.f32 %v1190, %v1104
    %v1192 = vmul.f32 %v1191, %v1190
    %v1193 = vmul.f32 0.5, %v1192
    %v1194 = vsub.f32 1.5, %v1193
    %v1195 = vmul.f32 %v1190, %v1194
    %vm1196 = vweird.f32 %v1104
    %vm1197 = vweird.f32 %v1190
    %vm1198 = vmor %vm1196, %vm1197
    %v1199 = vsel %vm1198, %v1190, %v1195
    %v1200 = vrsqrt.pop %v1105
    %v1201 = vmul.f32 %v1200, %v1105
    %v1202 = vmul.f32 %v1201, %v1200
    %v1203 = vmul.f32 0.5, %v1202
    %v1204 = vsub.f32 1.5, %v1203
    %v1205 = vmul.f32 %v1200, %v1204
    %vm1206 = vweird.f32 %v1105
    %vm1207 = vweird.f32 %v1200
    %vm1208 = vmor %vm1206, %vm1207
    %v1209 = vsel %vm1208, %v1200, %v1205
    %v1210 = vrsqrt.pop %v1106
    %v1211 = vmul.f32 %v1210, %v1106
    %v1212 = vmul.f32 %v1211, %v1210
    %v1213 = vmul.f32 0.5, %v1212
    %v1214 = vsub.f32 1.5, %v1213
    %v1215 = vmul.f32 %v1210, %v1214
    %vm1216 = vweird.f32 %v1106
    %vm1217 = vweird.f32 %v1210
    %vm1218 = vmor %vm1216, %vm1217
    %v1219 = vsel %vm1218, %v1210, %v1215
    %v1220 = vrsqrt.pop %v1107
    %v1221 = vmul.f32 %v1220, %v1107
    %v1222 = vmul.f32 %v1221, %v1220
    %v1223 = vmul.f32 0.5, %v1222
    %v1224 = vsub.f32 1.5, %v1223
    %v1225 = vmul.f32 %v1220, %v1224
    %vm1226 = vweird.f32 %v1107
    %vm1227 = vweird.f32 %v1220
    %vm1228 = vmor %vm1226, %vm1227
    %v1229 = vsel %vm1228, %v1220, %v1225
    %v1230 = vrsqrt.pop %v1108
    %v1231 = vmul.f32 %v1230, %v1108
    %v1232 = vmul.f32 %v1231, %v1230
    %v1233 = vmul.f32 0.5, %v1232
    %v1234 = vsub.f32 1.5, %v1233
    %v1235 = vmul.f32 %v1230, %v1234
    %vm1236 = vweird.f32 %v1108
    %vm1237 = vweird.f32 %v1230
    %vm1238 = vmor %vm1236, %vm1237
    %v1239 = vsel %vm1238, %v1230, %v1235
    %v1240 = vrsqrt.pop %v1109
    %v1241 = vmul.f32 %v1240, %v1109
    %v1242 = vmul.f32 %v1241, %v1240
    %v1243 = vmul.f32 0.5, %v1242
    %v1244 = vsub.f32 1.5, %v1243
    %v1245 = vmul.f32 %v1240, %v1244
    %vm1246 = vweird.f32 %v1109
    %vm1247 = vweird.f32 %v1240
    %vm1248 = vmor %vm1246, %vm1247
    %v1249 = vsel %vm1248, %v1240, %v1245
    %v1250 = vrsqrt.pop %v1110
    %v1251 = vmul.f32 %v1250, %v1110
    %v1252 = vmul.f32 %v1251, %v1250
    %v1253 = vmul.f32 0.5, %v1252
    %v1254 = vsub.f32 1.5, %v1253
    %v1255 = vmul.f32 %v1250, %v1254
    %vm1256 = vweird.f32 %v1110
    %vm1257 = vweird.f32 %v1250
    %vm1258 = vmor %vm1256, %vm1257
    %v1259 = vsel %vm1258, %v1250, %v1255
    %v1260 = vrsqrt.pop %v1111
    %v1261 = vmul.f32 %v1260, %v1111
    %v1262 = vmul.f32 %v1261, %v1260
    %v1263 = vmul.f32 0.5, %v1262
    %v1264 = vsub.f32 1.5, %v1263
    %v1265 = vmul.f32 %v1260, %v1264
    %vm1266 = vweird.f32 %v1111
    %vm1267 = vweird.f32 %v1260
    %vm1268 = vmor %vm1266, %vm1267
    %v1269 = vsel %vm1268, %v1260, %v1265
    %v1270 = vrsqrt.pop %v1112
    %v1271 = vmul.f32 %v1270, %v1112
    %v1272 = vmul.f32 %v1271, %v1270
    %v1273 = vmul.f32 0.5, %v1272
    %v1274 = vsub.f32 1.5, %v1273
    %v1275 = vmul.f32 %v1270, %v1274
    %vm1276 = vweird.f32 %v1112
    %vm1277 = vweird.f32 %v1270
    %vm1278 = vmor %vm1276, %vm1277
    %v1279 = vsel %vm1278, %v1270, %v1275
    %v1280 = vrsqrt.pop %v1113
    %v1281 = vmul.f32 %v1280, %v1113
    %v1282 = vmul.f32 %v1281, %v1280
    %v1283 = vmul.f32 0.5, %v1282
    %v1284 = vsub.f32 1.5, %v1283
    %v1285 = vmul.f32 %v1280, %v1284
    %vm1286 = vweird.f32 %v1113
    %vm1287 = vweird.f32 %v1280
    %vm1288 = vmor %vm1286, %vm1287
    %v1289 = vsel %vm1288, %v1280, %v1285
    %v1290 = vrsqrt.pop %v1114
    %v1291 = vmul.f32 %v1290, %v1114
    %v1292 = vmul.f32 %v1291, %v1290
    %v1293 = vmul.f32 0.5, %v1292
    %v1294 = vsub.f32 1.5, %v1293
    %v1295 = vmul.f32 %v1290, %v1294
    %vm1296 = vweird.f32 %v1114
    %vm1297 = vweird.f32 %v1290
    %vm1298 = vmor %vm1296, %vm1297
    %v1299 = vsel %vm1298, %v1290, %v1295
    %v1300 = vrsqrt.pop %v1115
    %v1301 = vmul.f32 %v1300, %v1115
    %v1302 = vmul.f32 %v1301, %v1300
    %v1303 = vmul.f32 0.5, %v1302
    %v1304 = vsub.f32 1.5, %v1303
    %v1305 = vmul.f32 %v1300, %v1304
    %vm1306 = vweird.f32 %v1115
    %vm1307 = vweird.f32 %v1300
    %vm1308 = vmor %vm1306, %vm1307
    %v1309 = vsel %vm1308, %v1300, %v1305
    %v1310 = vrsqrt.pop %v1116
    %v1311 = vmul.f32 %v1310, %v1116
    %v1312 = vmul.f32 %v1311, %v1310
    %v1313 = vmul.f32 0.5, %v1312
    %v1314 = vsub.f32 1.5, %v1313
    %v1315 = vmul.f32 %v1310, %v1314
    %vm1316 = vweird.f32 %v1116
    %vm1317 = vweird.f32 %v1310
    %vm1318 = vmor %vm1316, %vm1317
    %v1319 = vsel %vm1318, %v1310, %v1315
    %v1320 = vrsqrt.pop %v1117
    %v1321 = vmul.f32 %v1320, %v1117
    %v1322 = vmul.f32 %v1321, %v1320
    %v1323 = vmul.f32 0.5, %v1322
    %v1324 = vsub.f32 1.5, %v1323
    %v1325 = vmul.f32 %v1320, %v1324
    %vm1326 = vweird.f32 %v1117
    %vm1327 = vweird.f32 %v1320
    %vm1328 = vmor %vm1326, %vm1327
    %v1329 = vsel %vm1328, %v1320, %v1325
    %v1330 = vrsqrt.pop %v1118
    %v1331 = vmul.f32 %v1330, %v1118
    %v1332 = vmul.f32 %v1331, %v1330
    %v1333 = vmul.f32 0.5, %v1332
    %v1334 = vsub.f32 1.5, %v1333
    %v1335 = vmul.f32 %v1330, %v1334
    %vm1336 = vweird.f32 %v1118
    %vm1337 = vweird.f32 %v1330
    %vm1338 = vmor %vm1336, %vm1337
    %v1339 = vsel %vm1338, %v1330, %v1335
    %v1340 = vrsqrt.pop %v1119
    %v1341 = vmul.f32 %v1340, %v1119
    %v1342 = vmul.f32 %v1341, %v1340
    %v1343 = vmul.f32 0.5, %v1342
    %v1344 = vsub.f32 1.5, %v1343
    %v1345 = vmul.f32 %v1340, %v1344
    %vm1346 = vweird.f32 %v1119
    %vm1347 = vweird.f32 %v1340
    %vm1348 = vmor %vm1346, %vm1347
    %v1349 = vsel %vm1348, %v1340, %v1345
    %v1350 = vrsqrt.pop %v1120
    %v1351 = vmul.f32 %v1350, %v1120
    %v1352 = vmul.f32 %v1351, %v1350
    %v1353 = vmul.f32 0.5, %v1352
    %v1354 = vsub.f32 1.5, %v1353
    %v1355 = vmul.f32 %v1350, %v1354
    %vm1356 = vweird.f32 %v1120
    %vm1357 = vweird.f32 %v1350
    %vm1358 = vmor %vm1356, %vm1357
    %v1359 = vsel %vm1358, %v1350, %v1355
    %v1360 = vrsqrt.pop %v1121
    %v1361 = vmul.f32 %v1360, %v1121
    %v1362 = vmul.f32 %v1361, %v1360
    %v1363 = vmul.f32 0.5, %v1362
    %v1364 = vsub.f32 1.5, %v1363
    %v1365 = vmul.f32 %v1360, %v1364
    %vm1366 = vweird.f32 %v1121
    %vm1367 = vweird.f32 %v1360
    %vm1368 = vmor %vm1366, %vm1367
    %v1369 = vsel %vm1368, %v1360, %v1365
    %v1370 = vrsqrt.pop %v1122
    %v1371 = vmul.f32 %v1370, %v1122
    %v1372 = vmul.f32 %v1371, %v1370
    %v1373 = vmul.f32 0.5, %v1372
    %v1374 = vsub.f32 1.5, %v1373
    %v1375 = vmul.f32 %v1370, %v1374
    %vm1376 = vweird.f32 %v1122
    %vm1377 = vweird.f32 %v1370
    %vm1378 = vmor %vm1376, %vm1377
    %v1379 = vsel %vm1378, %v1370, %v1375
    %v1380 = vrsqrt.pop %v1123
    %v1381 = vmul.f32 %v1380, %v1123
    %v1382 = vmul.f32 %v1381, %v1380
    %v1383 = vmul.f32 0.5, %v1382
    %v1384 = vsub.f32 1.5, %v1383
    %v1385 = vmul.f32 %v1380, %v1384
    %vm1386 = vweird.f32 %v1123
    %vm1387 = vweird.f32 %v1380
    %vm1388 = vmor %vm1386, %vm1387
    %v1389 = vsel %vm1388, %v1380, %v1385
    %v1390 = vrsqrt.pop %v1124
    %v1391 = vmul.f32 %v1390, %v1124
    %v1392 = vmul.f32 %v1391, %v1390
    %v1393 = vmul.f32 0.5, %v1392
    %v1394 = vsub.f32 1.5, %v1393
    %v1395 = vmul.f32 %v1390, %v1394
    %vm1396 = vweird.f32 %v1124
    %vm1397 = vweird.f32 %v1390
    %vm1398 = vmor %vm1396, %vm1397
    %v1399 = vsel %vm1398, %v1390, %v1395
    %v1400 = vrsqrt.pop %v1125
    %v1401 = vmul.f32 %v1400, %v1125
    %v1402 = vmul.f32 %v1401, %v1400
    %v1403 = vmul.f32 0.5, %v1402
    %v1404 = vsub.f32 1.5, %v1403
    %v1405 = vmul.f32 %v1400, %v1404
    %vm1406 = vweird.f32 %v1125
    %vm1407 = vweird.f32 %v1400
    %vm1408 = vmor %vm1406, %vm1407
    %v1409 = vsel %vm1408, %v1400, %v1405
    %v1410 = vrsqrt.pop %v1126
    %v1411 = vmul.f32 %v1410, %v1126
    %v1412 = vmul.f32 %v1411, %v1410
    %v1413 = vmul.f32 0.5, %v1412
    %v1414 = vsub.f32 1.5, %v1413
    %v1415 = vmul.f32 %v1410, %v1414
    %vm1416 = vweird.f32 %v1126
    %vm1417 = vweird.f32 %v1410
    %vm1418 = vmor %vm1416, %vm1417
    %v1419 = vsel %vm1418, %v1410, %v1415
    %v1420 = vrsqrt.pop %v1127
    %v1421 = vmul.f32 %v1420, %v1127
    %v1422 = vmul.f32 %v1421, %v1420
    %v1423 = vmul.f32 0.5, %v1422
    %v1424 = vsub.f32 1.5, %v1423
    %v1425 = vmul.f32 %v1420, %v1424
    %vm1426 = vweird.f32 %v1127
    %vm1427 = vweird.f32 %v1420
    %vm1428 = vmor %vm1426, %vm1427
    %v1429 = vsel %vm1428, %v1420, %v1425
    %v1430 = vrsqrt.pop %v1128
    %v1431 = vmul.f32 %v1430, %v1128
    %v1432 = vmul.f32 %v1431, %v1430
    %v1433 = vmul.f32 0.5, %v1432
    %v1434 = vsub.f32 1.5, %v1433
    %v1435 = vmul.f32 %v1430, %v1434
    %vm1436 = vweird.f32 %v1128
    %vm1437 = vweird.f32 %v1430
    %vm1438 = vmor %vm1436, %vm1437
    %v1439 = vsel %vm1438, %v1430, %v1435
    %v1440 = vrsqrt.pop %v1129
    %v1441 = vmul.f32 %v1440, %v1129
    %v1442 = vmul.f32 %v1441, %v1440
    %v1443 = vmul.f32 0.5, %v1442
    %v1444 = vsub.f32 1.5, %v1443
    %v1445 = vmul.f32 %v1440, %v1444
    %vm1446 = vweird.f32 %v1129
    %vm1447 = vweird.f32 %v1440
    %vm1448 = vmor %vm1446, %vm1447
    %v1449 = vsel %vm1448, %v1440, %v1445
    %v1450 = vmul.f32 %v970, %v1139
    %v1451 = vmul.f32 %v971, %v1149
    %v1452 = vmul.f32 %v972, %v1159
    %v1453 = vmul.f32 %v973, %v1169
    %v1454 = vmul.f32 %v974, %v1179
    %v1455 = vmul.f32 %v975, %v1189
    %v1456 = vmul.f32 %v976, %v1199
    %v1457 = vmul.f32 %v977, %v1209
    %v1458 = vmul.f32 %v978, %v1219
    %v1459 = vmul.f32 %v979, %v1229
    %v1460 = vmul.f32 %v980, %v1239
    %v1461 = vmul.f32 %v981, %v1249
    %v1462 = vmul.f32 %v982, %v1259
    %v1463 = vmul.f32 %v983, %v1269
    %v1464 = vmul.f32 %v984, %v1279
    %v1465 = vmul.f32 %v985, %v1289
    %v1466 = vmul.f32 %v986, %v1299
    %v1467 = vmul.f32 %v987, %v1309
    %v1468 = vmul.f32 %v988, %v1319
    %v1469 = vmul.f32 %v989, %v1329
    %v1470 = vmul.f32 %v990, %v1339
    %v1471 = vmul.f32 %v991, %v1349
    %v1472 = vmul.f32 %v992, %v1359
    %v1473 = vmul.f32 %v993, %v1369
    %v1474 = vmul.f32 %v994, %v1379
    %v1475 = vmul.f32 %v995, %v1389
    %v1476 = vmul.f32 %v996, %v1399
    %v1477 = vmul.f32 %v997, %v1409
    %v1478 = vmul.f32 %v998, %v1419
    %v1479 = vmul.f32 %v999, %v1429
    %v1480 = vmul.f32 %v1000, %v1439
    %v1481 = vmul.f32 %v1001, %v1449
    %1482 = vst [vmem:[%s4] sm:$0xff] %v1450
    %1483 = vst [vmem:[%s4 + $0x8] sm:$0xff] %v1451
    %1484 = vst [vmem:[%s4 + $0x10] sm:$0xff] %v1452
    %1485 = vst [vmem:[%s4 + $0x18] sm:$0xff] %v1453
    %1486 = vst [vmem:[%s4 + $0x20] sm:$0xff] %v1454
    %1487 = vst [vmem:[%s4 + $0x28] sm:$0xff] %v1455
    %1488 = vst [vmem:[%s4 + $0x30] sm:$0xff] %v1456
    %1489 = vst [vmem:[%s4 + $0x38] sm:$0xff] %v1457
    %1490 = vst [vmem:[%s4 + $0x40] sm:$0xff] %v1458
    %1491 = vst [vmem:[%s4 + $0x48] sm:$0xff] %v1459
    %1492 = vst [vmem:[%s4 + $0x50] sm:$0xff] %v1460
    %1493 = vst [vmem:[%s4 + $0x58] sm:$0xff] %v1461
    %1494 = vst [vmem:[%s4 + $0x60] sm:$0xff] %v1462
    %1495 = vst [vmem:[%s4 + $0x68] sm:$0xff] %v1463
    %1496 = vst [vmem:[%s4 + $0x70] sm:$0xff] %v1464
    %1497 = vst [vmem:[%s4 + $0x78] sm:$0xff] %v1465
    %1498 = vst [vmem:[%s4 + $0x80] sm:$0xff] %v1466
    %1499 = vst [vmem:[%s4 + $0x88] sm:$0xff] %v1467
    %1500 = vst [vmem:[%s4 + $0x90] sm:$0xff] %v1468
    %1501 = vst [vmem:[%s4 + $0x98] sm:$0xff] %v1469
    %1502 = vst [vmem:[%s4 + $0xa0] sm:$0xff] %v1470
    %1503 = vst [vmem:[%s4 + $0xa8] sm:$0xff] %v1471
    %1504 = vst [vmem:[%s4 + $0xb0] sm:$0xff] %v1472
    %1505 = vst [vmem:[%s4 + $0xb8] sm:$0xff] %v1473
    %1506 = vst [vmem:[%s4 + $0xc0] sm:$0xff] %v1474
    %1507 = vst [vmem:[%s4 + $0xc8] sm:$0xff] %v1475
    %1508 = vst [vmem:[%s4 + $0xd0] sm:$0xff] %v1476
    %1509 = vst [vmem:[%s4 + $0xd8] sm:$0xff] %v1477
    %1510 = vst [vmem:[%s4 + $0xe0] sm:$0xff] %v1478
    %1511 = vst [vmem:[%s4 + $0xe8] sm:$0xff] %v1479
    %1512 = vst [vmem:[%s4 + $0xf0] sm:$0xff] %v1480
    %1513 = vst [vmem:[%s4 + $0xf8] sm:$0xff] %v1481
  $region25: #{nifty_forward.5} parent=0 // pred_fallthru
    _
  // Predicated region
  $region26: #{nifty_forward.5} parent=0 // pred_check
    _
  $region27: #{nifty_forward.5} parent=0 // pred_check_branch
    %1515 = sbr.rel (0) target = $region29
  $region28: #{nifty_forward.5} parent=0 // pred_region
    _
  $region29: #{nifty_forward.5} parent=0 // pred_fallthru
    _
  // Predicated region
  $region30: #{nifty_forward.5} parent=0 // pred_check
    _
  $region31: #{nifty_forward.5} parent=0 // pred_check_branch
    %1517 = sbr.rel (0) target = $region33
  $region32: #{nifty_forward.5} parent=0 // pred_region
    _
  $region33: #{nifty_forward.5} parent=0 // pred_fallthru
    _

// kernel: nifty_forward.4
$region0: #{nifty_forward.4}
  #allocation0 [shape = 'u32[]', space=smem, size = 0x4, offset = 0x4, fixed_abs, tag = 'smem constant byte address 0x4 - core index']
  #allocation1 [shape = 'u32[72,128]{1,0:T(1,128)}', space=vmem, size = 0x9000, scoped, tag = 'internal scratch']
  #allocation2 [shape = 'f32[256,128]{1,0:T(8,128)}', space=vmem, size = 0x20000, scoped, tag = 'scratch operand']
  %s0 = inlined_call_operand.vmem [shape: s8[256,256], index: 0, kind: input, shape index: {}]
  %s1 = inlined_call_operand.vmem [shape: bf16[256,128], index: 1, kind: input, shape index: {}]
  %s2 = inlined_call_operand.vmem [shape: bf16[256,128], index: 2, kind: input, shape index: {}]
  %s3 = inlined_call_operand.vmem [shape: f32[256,1], index: 3, kind: input, shape index: {}]
  %s4 = inlined_call_operand.vmem [shape: f32[1,128], index: 4, kind: input, shape index: {}]
  %s5 = inlined_call_operand.vmem [shape: f32[1,128], index: 5, kind: input, shape index: {}]
  %s6 = inlined_call_operand.vmem [shape: bf16[128,128], index: 6, kind: input, shape index: {}]
  %s7 = inlined_call_operand.vmem [shape: bf16[128,128], index: 7, kind: input, shape index: {}]
  %s8 = inlined_call_operand.vmem [shape: f32[1,128], index: 8, kind: input, shape index: {}]
  %s9 = inlined_call_operand.vmem [shape: bf16[256,128], index: 9, kind: output, shape index: {0}]
  %s10 = inlined_call_operand.vmem [shape: bf16[256,128], index: 10, kind: output, shape index: {1}]
  %11 = xla_tuple %s9, %s10
  %s12 = sld [smem:[#allocation0]]
  $region62: #{nifty_forward.4} parent=0
    _
  %s14 = ssub.s32 1, %s12
  %s15 = scalar_select 0, %s14, %s12
  // Predicated region
  $region2: #{nifty_forward.4} parent=0 // pred_check
    _
  $region3: #{nifty_forward.4} parent=0 // pred_check_branch
    %17 = sbr.rel (0) target = $region5
  $region4: #{nifty_forward.4} parent=0 // pred_region
    _
  $region5: #{nifty_forward.4} parent=0 // pred_fallthru
    _
  // Predicated region
  $region6: #{nifty_forward.4} parent=0 // pred_check
    _
  $region7: #{nifty_forward.4} parent=0 // pred_check_branch
    %19 = sbr.rel (0) target = $region9
  $region8: #{nifty_forward.4} parent=0 // pred_region
    _
  $region9: #{nifty_forward.4} parent=0 // pred_fallthru
    _
  // Predicated region
  $region10: #{nifty_forward.4} parent=0 // pred_check
    _
  $region11: #{nifty_forward.4} parent=0 // pred_check_branch
    %21 = sbr.rel (0) target = $region13
  $region12: #{nifty_forward.4} parent=0 // pred_region
    _
  $region13: #{nifty_forward.4} parent=0 // pred_fallthru
    _
  // Predicated region
  $region14: #{nifty_forward.4} parent=0 // pred_check
    _
  $region15: #{nifty_forward.4} parent=0 // pred_check_branch
    %23 = sbr.rel (0) target = $region17
  $region16: #{nifty_forward.4} parent=0 // pred_region
    _
  $region17: #{nifty_forward.4} parent=0 // pred_fallthru
    _
  // Predicated region
  $region18: #{nifty_forward.4} parent=0 // pred_check
    _
  $region19: #{nifty_forward.4} parent=0 // pred_check_branch
    %25 = sbr.rel (0) target = $region21
  $region20: #{nifty_forward.4} parent=0 // pred_region
    _
  $region21: #{nifty_forward.4} parent=0 // pred_fallthru
    _
  // Predicated region
  $region22: #{nifty_forward.4} parent=0 // pred_check
    _
  $region23: #{nifty_forward.4} parent=0 // pred_check_branch
    %27 = sbr.rel (0) target = $region25
  $region24: #{nifty_forward.4} parent=0 // pred_region
    _
  $region25: #{nifty_forward.4} parent=0 // pred_fallthru
    _
  // Predicated region
  $region26: #{nifty_forward.4} parent=0 // pred_check
    _
  $region27: #{nifty_forward.4} parent=0 // pred_check_branch
    %29 = sbr.rel (0) target = $region29
  $region28: #{nifty_forward.4} parent=0 // pred_region
    _
  $region29: #{nifty_forward.4} parent=0 // pred_fallthru
    _
  // Predicated region
  $region30: #{nifty_forward.4} parent=0 // pred_check
    _
  $region31: #{nifty_forward.4} parent=0 // pred_check_branch
    %31 = sbr.rel (0) target = $region33
  $region32: #{nifty_forward.4} parent=0 // pred_region
    _
  $region33: #{nifty_forward.4} parent=0 // pred_fallthru
    _
  // Predicated region
  $region34: #{nifty_forward.4} parent=0 // pred_check
    _
  $region35: #{nifty_forward.4} parent=0 // pred_check_branch
    %33 = sbr.rel (0) target = $region37
  $region36: #{nifty_forward.4} parent=0 // pred_region
    _
  $region37: #{nifty_forward.4} parent=0 // pred_fallthru
    _
  %p34 = scmp.eq.s32.totalorder 0, 0
  // Predicated region
  $region38: #{nifty_forward.4} parent=0 // pred_check
    %p35 = pneg %p34
  $region39: #{nifty_forward.4} parent=0 // pred_check_branch
    %37 = sbr.rel (%p35) target = $region41
  $region40: #{nifty_forward.4} parent=0 // pred_region
    %38 = vst [vmem:[#allocation2] sm:$0xff] 0.0
    %39 = vst [vmem:[#allocation2 + $0x8] sm:$0xff] 0.0
    %40 = vst [vmem:[#allocation2 + $0x10] sm:$0xff] 0.0
    %41 = vst [vmem:[#allocation2 + $0x18] sm:$0xff] 0.0
    %42 = vst [vmem:[#allocation2 + $0x20] sm:$0xff] 0.0
    %43 = vst [vmem:[#allocation2 + $0x28] sm:$0xff] 0.0
    %44 = vst [vmem:[#allocation2 + $0x30] sm:$0xff] 0.0
    %45 = vst [vmem:[#allocation2 + $0x38] sm:$0xff] 0.0
    %46 = vst [vmem:[#allocation2 + $0x40] sm:$0xff] 0.0
    %47 = vst [vmem:[#allocation2 + $0x48] sm:$0xff] 0.0
    %48 = vst [vmem:[#allocation2 + $0x50] sm:$0xff] 0.0
    %49 = vst [vmem:[#allocation2 + $0x58] sm:$0xff] 0.0
    %50 = vst [vmem:[#allocation2 + $0x60] sm:$0xff] 0.0
    %51 = vst [vmem:[#allocation2 + $0x68] sm:$0xff] 0.0
    %52 = vst [vmem:[#allocation2 + $0x70] sm:$0xff] 0.0
    %53 = vst [vmem:[#allocation2 + $0x78] sm:$0xff] 0.0
    %54 = vst [vmem:[#allocation2 + $0x80] sm:$0xff] 0.0
    %55 = vst [vmem:[#allocation2 + $0x88] sm:$0xff] 0.0
    %56 = vst [vmem:[#allocation2 + $0x90] sm:$0xff] 0.0
    %57 = vst [vmem:[#allocation2 + $0x98] sm:$0xff] 0.0
    %58 = vst [vmem:[#allocation2 + $0xa0] sm:$0xff] 0.0
    %59 = vst [vmem:[#allocation2 + $0xa8] sm:$0xff] 0.0
    %60 = vst [vmem:[#allocation2 + $0xb0] sm:$0xff] 0.0
    %61 = vst [vmem:[#allocation2 + $0xb8] sm:$0xff] 0.0
    %62 = vst [vmem:[#allocation2 + $0xc0] sm:$0xff] 0.0
    %63 = vst [vmem:[#allocation2 + $0xc8] sm:$0xff] 0.0
    %64 = vst [vmem:[#allocation2 + $0xd0] sm:$0xff] 0.0
    %65 = vst [vmem:[#allocation2 + $0xd8] sm:$0xff] 0.0
    %66 = vst [vmem:[#allocation2 + $0xe0] sm:$0xff] 0.0
    %67 = vst [vmem:[#allocation2 + $0xe8] sm:$0xff] 0.0
    %68 = vst [vmem:[#allocation2 + $0xf0] sm:$0xff] 0.0
    %69 = vst [vmem:[#allocation2 + $0xf8] sm:$0xff] 0.0
  $region41: #{nifty_forward.4} parent=0 // pred_fallthru
    _
  %v70 = vld [vmem:[#allocation2] sm:$0xff]
  %v71 = vld [vmem:[#allocation2 + $0x8] sm:$0xff]
  %v72 = vld [vmem:[#allocation2 + $0x10] sm:$0xff]
  %v73 = vld [vmem:[#allocation2 + $0x18] sm:$0xff]
  %v74 = vld [vmem:[#allocation2 + $0x20] sm:$0xff]
  %v75 = vld [vmem:[#allocation2 + $0x28] sm:$0xff]
  %v76 = vld [vmem:[#allocation2 + $0x30] sm:$0xff]
  %v77 = vld [vmem:[#allocation2 + $0x38] sm:$0xff]
  %v78 = vld [vmem:[#allocation2 + $0x40] sm:$0xff]
  %v79 = vld [vmem:[#allocation2 + $0x48] sm:$0xff]
  %v80 = vld [vmem:[#allocation2 + $0x50] sm:$0xff]
  %v81 = vld [vmem:[#allocation2 + $0x58] sm:$0xff]
  %v82 = vld [vmem:[#allocation2 + $0x60] sm:$0xff]
  %v83 = vld [vmem:[#allocation2 + $0x68] sm:$0xff]
  %v84 = vld [vmem:[#allocation2 + $0x70] sm:$0xff]
  %v85 = vld [vmem:[#allocation2 + $0x78] sm:$0xff]
  %v86 = vld [vmem:[#allocation2 + $0x80] sm:$0xff]
  %v87 = vld [vmem:[#allocation2 + $0x88] sm:$0xff]
  %v88 = vld [vmem:[#allocation2 + $0x90] sm:$0xff]
  %v89 = vld [vmem:[#allocation2 + $0x98] sm:$0xff]
  %v90 = vld [vmem:[#allocation2 + $0xa0] sm:$0xff]
  %v91 = vld [vmem:[#allocation2 + $0xa8] sm:$0xff]
  %v92 = vld [vmem:[#allocation2 + $0xb0] sm:$0xff]
  %v93 = vld [vmem:[#allocation2 + $0xb8] sm:$0xff]
  %v94 = vld [vmem:[#allocation2 + $0xc0] sm:$0xff]
  %v95 = vld [vmem:[#allocation2 + $0xc8] sm:$0xff]
  %v96 = vld [vmem:[#allocation2 + $0xd0] sm:$0xff]
  %v97 = vld [vmem:[#allocation2 + $0xd8] sm:$0xff]
  %v98 = vld [vmem:[#allocation2 + $0xe0] sm:$0xff]
  %v99 = vld [vmem:[#allocation2 + $0xe8] sm:$0xff]
  %v100 = vld [vmem:[#allocation2 + $0xf0] sm:$0xff]
  %v101 = vld [vmem:[#allocation2 + $0xf8] sm:$0xff]
  %v102 = vld [vmem:[%s0] sm:$0xf]
  %v103 = vld [vmem:[%s0 + $0x4] sm:$0xf]
  %v104 = vld [vmem:[%s0 + $0x8] sm:$0xf]
  %v105 = vld [vmem:[%s0 + $0xc] sm:$0xf]
  %v106 = vld [vmem:[%s0 + $0x10] sm:$0xf]
  %v107 = vld [vmem:[%s0 + $0x14] sm:$0xf]
  %v108 = vld [vmem:[%s0 + $0x18] sm:$0xf]
  %v109 = vld [vmem:[%s0 + $0x1c] sm:$0xf]
  %v110 = vld [vmem:[%s0 + $0x20] sm:$0xf]
  %v111 = vld [vmem:[%s0 + $0x24] sm:$0xf]
  %v112 = vld [vmem:[%s0 + $0x28] sm:$0xf]
  %v113 = vld [vmem:[%s0 + $0x2c] sm:$0xf]
  %v114 = vld [vmem:[%s0 + $0x30] sm:$0xf]
  %v115 = vld [vmem:[%s0 + $0x34] sm:$0xf]
  %v116 = vld [vmem:[%s0 + $0x38] sm:$0xf]
  %v117 = vld [vmem:[%s0 + $0x3c] sm:$0xf]
  %v118 = vld [vmem:[%s0 + $0x40] sm:$0xf]
  %v119 = vld [vmem:[%s0 + $0x44] sm:$0xf]
  %v120 = vld [vmem:[%s0 + $0x48] sm:$0xf]
  %v121 = vld [vmem:[%s0 + $0x4c] sm:$0xf]
  %v122 = vld [vmem:[%s0 + $0x50] sm:$0xf]
  %v123 = vld [vmem:[%s0 + $0x54] sm:$0xf]
  %v124 = vld [vmem:[%s0 + $0x58] sm:$0xf]
  %v125 = vld [vmem:[%s0 + $0x5c] sm:$0xf]
  %v126 = vld [vmem:[%s0 + $0x60] sm:$0xf]
  %v127 = vld [vmem:[%s0 + $0x64] sm:$0xf]
  %v128 = vld [vmem:[%s0 + $0x68] sm:$0xf]
  %v129 = vld [vmem:[%s0 + $0x6c] sm:$0xf]
  %v130 = vld [vmem:[%s0 + $0x70] sm:$0xf]
  %v131 = vld [vmem:[%s0 + $0x74] sm:$0xf]
  %v132 = vld [vmem:[%s0 + $0x78] sm:$0xf]
  %v133 = vld [vmem:[%s0 + $0x7c] sm:$0xf]
  %v134 = vunpack.c.0.s8 %v102
  %v135 = vunpack.c.1.s8 %v102
  %v136 = vunpack.c.0.s8 %v103
  %v137 = vunpack.c.1.s8 %v103
  %v138 = vunpack.c.0.s8 %v104
  %v139 = vunpack.c.1.s8 %v104
  %v140 = vunpack.c.0.s8 %v105
  %v141 = vunpack.c.1.s8 %v105
  %v142 = vunpack.c.0.s8 %v106
  %v143 = vunpack.c.1.s8 %v106
  %v144 = vunpack.c.0.s8 %v107
  %v145 = vunpack.c.1.s8 %v107
  %v146 = vunpack.c.0.s8 %v108
  %v147 = vunpack.c.1.s8 %v108
  %v148 = vunpack.c.0.s8 %v109
  %v149 = vunpack.c.1.s8 %v109
  %v150 = vunpack.c.0.s8 %v110
  %v151 = vunpack.c.1.s8 %v110
  %v152 = vunpack.c.0.s8 %v111
  %v153 = vunpack.c.1.s8 %v111
  %v154 = vunpack.c.0.s8 %v112
  %v155 = vunpack.c.1.s8 %v112
  %v156 = vunpack.c.0.s8 %v113
  %v157 = vunpack.c.1.s8 %v113
  %v158 = vunpack.c.0.s8 %v114
  %v159 = vunpack.c.1.s8 %v114
  %v160 = vunpack.c.0.s8 %v115
  %v161 = vunpack.c.1.s8 %v115
  %v162 = vunpack.c.0.s8 %v116
  %v163 = vunpack.c.1.s8 %v116
  %v164 = vunpack.c.0.s8 %v117
  %v165 = vunpack.c.1.s8 %v117
  %v166 = vunpack.c.0.s8 %v118
  %v167 = vunpack.c.1.s8 %v118
  %v168 = vunpack.c.0.s8 %v119
  %v169 = vunpack.c.1.s8 %v119
  %v170 = vunpack.c.0.s8 %v120
  %v171 = vunpack.c.1.s8 %v120
  %v172 = vunpack.c.0.s8 %v121
  %v173 = vunpack.c.1.s8 %v121
  %v174 = vunpack.c.0.s8 %v122
  %v175 = vunpack.c.1.s8 %v122
  %v176 = vunpack.c.0.s8 %v123
  %v177 = vunpack.c.1.s8 %v123
  %v178 = vunpack.c.0.s8 %v124
  %v179 = vunpack.c.1.s8 %v124
  %v180 = vunpack.c.0.s8 %v125
  %v181 = vunpack.c.1.s8 %v125
  %v182 = vunpack.c.0.s8 %v126
  %v183 = vunpack.c.1.s8 %v126
  %v184 = vunpack.c.0.s8 %v127
  %v185 = vunpack.c.1.s8 %v127
  %v186 = vunpack.c.0.s8 %v128
  %v187 = vunpack.c.1.s8 %v128
  %v188 = vunpack.c.0.s8 %v129
  %v189 = vunpack.c.1.s8 %v129
  %v190 = vunpack.c.0.s8 %v130
  %v191 = vunpack.c.1.s8 %v130
  %v192 = vunpack.c.0.s8 %v131
  %v193 = vunpack.c.1.s8 %v131
  %v194 = vunpack.c.0.s8 %v132
  %v195 = vunpack.c.1.s8 %v132
  %v196 = vunpack.c.0.s8 %v133
  %v197 = vunpack.c.1.s8 %v133
  %v198 = vcvt.s32.f32 %v134
  %v199 = vcvt.s32.f32 %v135
  %v200 = vcvt.s32.f32 %v136
  %v201 = vcvt.s32.f32 %v137
  %v202 = vcvt.s32.f32 %v138
  %v203 = vcvt.s32.f32 %v139
  %v204 = vcvt.s32.f32 %v140
  %v205 = vcvt.s32.f32 %v141
  %v206 = vcvt.s32.f32 %v142
  %v207 = vcvt.s32.f32 %v143
  %v208 = vcvt.s32.f32 %v144
  %v209 = vcvt.s32.f32 %v145
  %v210 = vcvt.s32.f32 %v146
  %v211 = vcvt.s32.f32 %v147
  %v212 = vcvt.s32.f32 %v148
  %v213 = vcvt.s32.f32 %v149
  %v214 = vcvt.s32.f32 %v150
  %v215 = vcvt.s32.f32 %v151
  %v216 = vcvt.s32.f32 %v152
  %v217 = vcvt.s32.f32 %v153
  %v218 = vcvt.s32.f32 %v154
  %v219 = vcvt.s32.f32 %v155
  %v220 = vcvt.s32.f32 %v156
  %v221 = vcvt.s32.f32 %v157
  %v222 = vcvt.s32.f32 %v158
  %v223 = vcvt.s32.f32 %v159
  %v224 = vcvt.s32.f32 %v160
  %v225 = vcvt.s32.f32 %v161
  %v226 = vcvt.s32.f32 %v162
  %v227 = vcvt.s32.f32 %v163
  %v228 = vcvt.s32.f32 %v164
  %v229 = vcvt.s32.f32 %v165
  %v230 = vcvt.s32.f32 %v166
  %v231 = vcvt.s32.f32 %v167
  %v232 = vcvt.s32.f32 %v168
  %v233 = vcvt.s32.f32 %v169
  %v234 = vcvt.s32.f32 %v170
  %v235 = vcvt.s32.f32 %v171
  %v236 = vcvt.s32.f32 %v172
  %v237 = vcvt.s32.f32 %v173
  %v238 = vcvt.s32.f32 %v174
  %v239 = vcvt.s32.f32 %v175
  %v240 = vcvt.s32.f32 %v176
  %v241 = vcvt.s32.f32 %v177
  %v242 = vcvt.s32.f32 %v178
  %v243 = vcvt.s32.f32 %v179
  %v244 = vcvt.s32.f32 %v180
  %v245 = vcvt.s32.f32 %v181
  %v246 = vcvt.s32.f32 %v182
  %v247 = vcvt.s32.f32 %v183
  %v248 = vcvt.s32.f32 %v184
  %v249 = vcvt.s32.f32 %v185
  %v250 = vcvt.s32.f32 %v186
  %v251 = vcvt.s32.f32 %v187
  %v252 = vcvt.s32.f32 %v188
  %v253 = vcvt.s32.f32 %v189
  %v254 = vcvt.s32.f32 %v190
  %v255 = vcvt.s32.f32 %v191
  %v256 = vcvt.s32.f32 %v192
  %v257 = vcvt.s32.f32 %v193
  %v258 = vcvt.s32.f32 %v194
  %v259 = vcvt.s32.f32 %v195
  %v260 = vcvt.s32.f32 %v196
  %v261 = vcvt.s32.f32 %v197
  %v262 = vpack.c.bf16 %v200, %v198
  %v263 = vpack.c.bf16 %v201, %v199
  %v264 = vpack.c.bf16 %v204, %v202
  %v265 = vpack.c.bf16 %v205, %v203
  %v266 = vpack.c.bf16 %v208, %v206
  %v267 = vpack.c.bf16 %v209, %v207
  %v268 = vpack.c.bf16 %v212, %v210
  %v269 = vpack.c.bf16 %v213, %v211
  %v270 = vpack.c.bf16 %v216, %v214
  %v271 = vpack.c.bf16 %v217, %v215
  %v272 = vpack.c.bf16 %v220, %v218
  %v273 = vpack.c.bf16 %v221, %v219
  %v274 = vpack.c.bf16 %v224, %v222
  %v275 = vpack.c.bf16 %v225, %v223
  %v276 = vpack.c.bf16 %v228, %v226
  %v277 = vpack.c.bf16 %v229, %v227
  %v278 = vpack.c.bf16 %v232, %v230
  %v279 = vpack.c.bf16 %v233, %v231
  %v280 = vpack.c.bf16 %v236, %v234
  %v281 = vpack.c.bf16 %v237, %v235
  %v282 = vpack.c.bf16 %v240, %v238
  %v283 = vpack.c.bf16 %v241, %v239
  %v284 = vpack.c.bf16 %v244, %v242
  %v285 = vpack.c.bf16 %v245, %v243
  %v286 = vpack.c.bf16 %v248, %v246
  %v287 = vpack.c.bf16 %v249, %v247
  %v288 = vpack.c.bf16 %v252, %v250
  %v289 = vpack.c.bf16 %v253, %v251
  %v290 = vpack.c.bf16 %v256, %v254
  %v291 = vpack.c.bf16 %v257, %v255
  %v292 = vpack.c.bf16 %v260, %v258
  %v293 = vpack.c.bf16 %v261, %v259
  %v294 = vld [vmem:[%s1] sm:$0xf]
  %v295 = vld [vmem:[%s1 + $0x4] sm:$0xf]
  %v296 = vld [vmem:[%s1 + $0x8] sm:$0xf]
  %v297 = vld [vmem:[%s1 + $0xc] sm:$0xf]
  %v298 = vld [vmem:[%s1 + $0x10] sm:$0xf]
  %v299 = vld [vmem:[%s1 + $0x14] sm:$0xf]
  %v300 = vld [vmem:[%s1 + $0x18] sm:$0xf]
  %v301 = vld [vmem:[%s1 + $0x1c] sm:$0xf]
  %v302 = vld [vmem:[%s1 + $0x20] sm:$0xf]
  %v303 = vld [vmem:[%s1 + $0x24] sm:$0xf]
  %v304 = vld [vmem:[%s1 + $0x28] sm:$0xf]
  %v305 = vld [vmem:[%s1 + $0x2c] sm:$0xf]
  %v306 = vld [vmem:[%s1 + $0x30] sm:$0xf]
  %v307 = vld [vmem:[%s1 + $0x34] sm:$0xf]
  %v308 = vld [vmem:[%s1 + $0x38] sm:$0xf]
  %v309 = vld [vmem:[%s1 + $0x3c] sm:$0xf]
  %v310 = vld [vmem:[%s1 + $0x40] sm:$0xf]
  %v311 = vld [vmem:[%s1 + $0x44] sm:$0xf]
  %v312 = vld [vmem:[%s1 + $0x48] sm:$0xf]
  %v313 = vld [vmem:[%s1 + $0x4c] sm:$0xf]
  %v314 = vld [vmem:[%s1 + $0x50] sm:$0xf]
  %v315 = vld [vmem:[%s1 + $0x54] sm:$0xf]
  %v316 = vld [vmem:[%s1 + $0x58] sm:$0xf]
  %v317 = vld [vmem:[%s1 + $0x5c] sm:$0xf]
  %v318 = vld [vmem:[%s1 + $0x60] sm:$0xf]
  %v319 = vld [vmem:[%s1 + $0x64] sm:$0xf]
  %v320 = vld [vmem:[%s1 + $0x68] sm:$0xf]
  %v321 = vld [vmem:[%s1 + $0x6c] sm:$0xf]
  %v322 = vld [vmem:[%s1 + $0x70] sm:$0xf]
  %v323 = vld [vmem:[%s1 + $0x74] sm:$0xf]
  %v324 = vld [vmem:[%s1 + $0x78] sm:$0xf]
  %v325 = vld [vmem:[%s1 + $0x7c] sm:$0xf]
  %v358 = vunpack.c.l.b16 %v294
  %v359 = vunpack.c.l.b16 %v295
  %v360 = vunpack.c.l.b16 %v296
  %v361 = vunpack.c.l.b16 %v297
  %v362 = vunpack.c.l.b16 %v298
  %v363 = vunpack.c.l.b16 %v299
  %v364 = vunpack.c.l.b16 %v300
  %v365 = vunpack.c.l.b16 %v301
  %v366 = vunpack.c.l.b16 %v302
  %v367 = vunpack.c.l.b16 %v303
  %v368 = vunpack.c.l.b16 %v304
  %v369 = vunpack.c.l.b16 %v305
  %v370 = vunpack.c.l.b16 %v306
  %v371 = vunpack.c.l.b16 %v307
  %v372 = vunpack.c.l.b16 %v308
  %v373 = vunpack.c.l.b16 %v309
  %v374 = vunpack.c.l.b16 %v310
  %v375 = vunpack.c.l.b16 %v311
  %v376 = vunpack.c.l.b16 %v312
  %v377 = vunpack.c.l.b16 %v313
  %v378 = vunpack.c.l.b16 %v314
  %v379 = vunpack.c.l.b16 %v315
  %v380 = vunpack.c.l.b16 %v316
  %v381 = vunpack.c.l.b16 %v317
  %v382 = vunpack.c.l.b16 %v318
  %v383 = vunpack.c.l.b16 %v319
  %v384 = vunpack.c.l.b16 %v320
  %v385 = vunpack.c.l.b16 %v321
  %v386 = vunpack.c.l.b16 %v322
  %v387 = vunpack.c.l.b16 %v323
  %v388 = vunpack.c.l.b16 %v324
  %v389 = vunpack.c.l.b16 %v325
  %v390 = vpack.c.b16 %v359, %v358
  %v391 = vpack.c.b16 %v361, %v360
  %v392 = vpack.c.b16 %v363, %v362
  %v393 = vpack.c.b16 %v365, %v364
  %v394 = vpack.c.b16 %v367, %v366
  %v395 = vpack.c.b16 %v369, %v368
  %v396 = vpack.c.b16 %v371, %v370
  %v397 = vpack.c.b16 %v373, %v372
  %v398 = vpack.c.b16 %v375, %v374
  %v399 = vpack.c.b16 %v377, %v376
  %v400 = vpack.c.b16 %v379, %v378
  %v401 = vpack.c.b16 %v381, %v380
  %v402 = vpack.c.b16 %v383, %v382
  %v403 = vpack.c.b16 %v385, %v384
  %v404 = vpack.c.b16 %v387, %v386
  %v405 = vpack.c.b16 %v389, %v388
  %422 = vmatpush.bf16.msra.mxu0 %v397
  %423 = vmatpush.bf16.msra.mxu0 %v396
  %424 = vmatpush.bf16.msra.mxu0 %v395
  %425 = vmatpush.bf16.msra.mxu0 %v394
  %426 = vmatpush.bf16.msra.mxu0 %v393
  %427 = vmatpush.bf16.msra.mxu0 %v392
  %428 = vmatpush.bf16.msra.mxu0 %v391
  %429 = vmatpush.bf16.msra.mxu0 %v390
  %430 = vmatmul.bf16.gmra.mxu0 %v262
  %v431 = vpop.f32.mrf.mxu0
  %v432 = vadd.f32 0.0, %v431
  %v433 = vpop.f32.mrf.mxu0
  %v434 = vadd.f32 0.0, %v433
  %435 = vmatmul.bf16.gmra.mxu0 %v264
  %v436 = vpop.f32.mrf.mxu0
  %v437 = vadd.f32 0.0, %v436
  %v438 = vpop.f32.mrf.mxu0
  %v439 = vadd.f32 0.0, %v438
  %440 = vmatmul.bf16.gmra.mxu0 %v266
  %v441 = vpop.f32.mrf.mxu0
  %v442 = vadd.f32 0.0, %v441
  %v443 = vpop.f32.mrf.mxu0
  %v444 = vadd.f32 0.0, %v443
  %445 = vmatmul.bf16.gmra.mxu0 %v268
  %v446 = vpop.f32.mrf.mxu0
  %v447 = vadd.f32 0.0, %v446
  %v448 = vpop.f32.mrf.mxu0
  %v449 = vadd.f32 0.0, %v448
  %450 = vmatmul.bf16.gmra.mxu0 %v270
  %v451 = vpop.f32.mrf.mxu0
  %v452 = vadd.f32 0.0, %v451
  %v453 = vpop.f32.mrf.mxu0
  %v454 = vadd.f32 0.0, %v453
  %455 = vmatmul.bf16.gmra.mxu0 %v272
  %v456 = vpop.f32.mrf.mxu0
  %v457 = vadd.f32 0.0, %v456
  %v458 = vpop.f32.mrf.mxu0
  %v459 = vadd.f32 0.0, %v458
  %460 = vmatmul.bf16.gmra.mxu0 %v274
  %v461 = vpop.f32.mrf.mxu0
  %v462 = vadd.f32 0.0, %v461
  %v463 = vpop.f32.mrf.mxu0
  %v464 = vadd.f32 0.0, %v463
  %465 = vmatmul.bf16.gmra.mxu0 %v276
  %v466 = vpop.f32.mrf.mxu0
  %v467 = vadd.f32 0.0, %v466
  %v468 = vpop.f32.mrf.mxu0
  %v469 = vadd.f32 0.0, %v468
  %470 = vmatmul.bf16.gmra.mxu0 %v278
  %v471 = vpop.f32.mrf.mxu0
  %v472 = vadd.f32 0.0, %v471
  %v473 = vpop.f32.mrf.mxu0
  %v474 = vadd.f32 0.0, %v473
  %475 = vmatmul.bf16.gmra.mxu0 %v280
  %v476 = vpop.f32.mrf.mxu0
  %v477 = vadd.f32 0.0, %v476
  %v478 = vpop.f32.mrf.mxu0
  %v479 = vadd.f32 0.0, %v478
  %480 = vmatmul.bf16.gmra.mxu0 %v282
  %v481 = vpop.f32.mrf.mxu0
  %v482 = vadd.f32 0.0, %v481
  %v483 = vpop.f32.mrf.mxu0
  %v484 = vadd.f32 0.0, %v483
  %485 = vmatmul.bf16.gmra.mxu0 %v284
  %v486 = vpop.f32.mrf.mxu0
  %v487 = vadd.f32 0.0, %v486
  %v488 = vpop.f32.mrf.mxu0
  %v489 = vadd.f32 0.0, %v488
  %490 = vmatmul.bf16.gmra.mxu0 %v286
  %v491 = vpop.f32.mrf.mxu0
  %v492 = vadd.f32 0.0, %v491
  %v493 = vpop.f32.mrf.mxu0
  %v494 = vadd.f32 0.0, %v493
  %495 = vmatmul.bf16.gmra.mxu0 %v288
  %v496 = vpop.f32.mrf.mxu0
  %v497 = vadd.f32 0.0, %v496
  %v498 = vpop.f32.mrf.mxu0
  %v499 = vadd.f32 0.0, %v498
  %500 = vmatmul.bf16.gmra.mxu0 %v290
  %v501 = vpop.f32.mrf.mxu0
  %v502 = vadd.f32 0.0, %v501
  %v503 = vpop.f32.mrf.mxu0
  %v504 = vadd.f32 0.0, %v503
  %505 = vmatmul.bf16.gmra.mxu0 %v292
  %v506 = vpop.f32.mrf.mxu0
  %v507 = vadd.f32 0.0, %v506
  %v508 = vpop.f32.mrf.mxu0
  %v509 = vadd.f32 0.0, %v508
  %510 = vdwg.mxu0
  %511 = vmatpush.bf16.msra.mxu0 %v405
  %512 = vmatpush.bf16.msra.mxu0 %v404
  %513 = vmatpush.bf16.msra.mxu0 %v403
  %514 = vmatpush.bf16.msra.mxu0 %v402
  %515 = vmatpush.bf16.msra.mxu0 %v401
  %516 = vmatpush.bf16.msra.mxu0 %v400
  %517 = vmatpush.bf16.msra.mxu0 %v399
  %518 = vmatpush.bf16.msra.mxu0 %v398
  %519 = vmatmul.bf16.gmra.mxu0 %v263
  %v520 = vpop.f32.mrf.mxu0
  %v521 = vadd.f32 %v432, %v520
  %v522 = vpop.f32.mrf.mxu0
  %v523 = vadd.f32 %v434, %v522
  %524 = vmatmul.bf16.gmra.mxu0 %v265
  %v525 = vpop.f32.mrf.mxu0
  %v526 = vadd.f32 %v437, %v525
  %v527 = vpop.f32.mrf.mxu0
  %v528 = vadd.f32 %v439, %v527
  %529 = vmatmul.bf16.gmra.mxu0 %v267
  %v530 = vpop.f32.mrf.mxu0
  %v531 = vadd.f32 %v442, %v530
  %v532 = vpop.f32.mrf.mxu0
  %v533 = vadd.f32 %v444, %v532
  %534 = vmatmul.bf16.gmra.mxu0 %v269
  %v535 = vpop.f32.mrf.mxu0
  %v536 = vadd.f32 %v447, %v535
  %v537 = vpop.f32.mrf.mxu0
  %v538 = vadd.f32 %v449, %v537
  %539 = vmatmul.bf16.gmra.mxu0 %v271
  %v540 = vpop.f32.mrf.mxu0
  %v541 = vadd.f32 %v452, %v540
  %v542 = vpop.f32.mrf.mxu0
  %v543 = vadd.f32 %v454, %v542
  %544 = vmatmul.bf16.gmra.mxu0 %v273
  %v545 = vpop.f32.mrf.mxu0
  %v546 = vadd.f32 %v457, %v545
  %v547 = vpop.f32.mrf.mxu0
  %v548 = vadd.f32 %v459, %v547
  %549 = vmatmul.bf16.gmra.mxu0 %v275
  %v550 = vpop.f32.mrf.mxu0
  %v551 = vadd.f32 %v462, %v550
  %v552 = vpop.f32.mrf.mxu0
  %v553 = vadd.f32 %v464, %v552
  %554 = vmatmul.bf16.gmra.mxu0 %v277
  %v555 = vpop.f32.mrf.mxu0
  %v556 = vadd.f32 %v467, %v555
  %v557 = vpop.f32.mrf.mxu0
  %v558 = vadd.f32 %v469, %v557
  %559 = vmatmul.bf16.gmra.mxu0 %v279
  %v560 = vpop.f32.mrf.mxu0
  %v561 = vadd.f32 %v472, %v560
  %v562 = vpop.f32.mrf.mxu0
  %v563 = vadd.f32 %v474, %v562
  %564 = vmatmul.bf16.gmra.mxu0 %v281
  %v565 = vpop.f32.mrf.mxu0
  %v566 = vadd.f32 %v477, %v565
  %v567 = vpop.f32.mrf.mxu0
  %v568 = vadd.f32 %v479, %v567
  %569 = vmatmul.bf16.gmra.mxu0 %v283
  %v570 = vpop.f32.mrf.mxu0
  %v571 = vadd.f32 %v482, %v570
  %v572 = vpop.f32.mrf.mxu0
  %v573 = vadd.f32 %v484, %v572
  %574 = vmatmul.bf16.gmra.mxu0 %v285
  %v575 = vpop.f32.mrf.mxu0
  %v576 = vadd.f32 %v487, %v575
  %v577 = vpop.f32.mrf.mxu0
  %v578 = vadd.f32 %v489, %v577
  %579 = vmatmul.bf16.gmra.mxu0 %v287
  %v580 = vpop.f32.mrf.mxu0
  %v581 = vadd.f32 %v492, %v580
  %v582 = vpop.f32.mrf.mxu0
  %v583 = vadd.f32 %v494, %v582
  %584 = vmatmul.bf16.gmra.mxu0 %v289
  %v585 = vpop.f32.mrf.mxu0
  %v586 = vadd.f32 %v497, %v585
  %v587 = vpop.f32.mrf.mxu0
  %v588 = vadd.f32 %v499, %v587
  %589 = vmatmul.bf16.gmra.mxu0 %v291
  %v590 = vpop.f32.mrf.mxu0
  %v591 = vadd.f32 %v502, %v590
  %v592 = vpop.f32.mrf.mxu0
  %v593 = vadd.f32 %v504, %v592
  %594 = vmatmul.bf16.gmra.mxu0 %v293
  %v595 = vpop.f32.mrf.mxu0
  %v596 = vadd.f32 %v507, %v595
  %v597 = vpop.f32.mrf.mxu0
  %v598 = vadd.f32 %v509, %v597
  %599 = vdwg.mxu0
  %v600 = vadd.f32 %v70, %v521
  %v601 = vadd.f32 %v71, %v523
  %v602 = vadd.f32 %v72, %v526
  %v603 = vadd.f32 %v73, %v528
  %v604 = vadd.f32 %v74, %v531
  %v605 = vadd.f32 %v75, %v533
  %v606 = vadd.f32 %v76, %v536
  %v607 = vadd.f32 %v77, %v538
  %v608 = vadd.f32 %v78, %v541
  %v609 = vadd.f32 %v79, %v543
  %v610 = vadd.f32 %v80, %v546
  %v611 = vadd.f32 %v81, %v548
  %v612 = vadd.f32 %v82, %v551
  %v613 = vadd.f32 %v83, %v553
  %v614 = vadd.f32 %v84, %v556
  %v615 = vadd.f32 %v85, %v558
  %v616 = vadd.f32 %v86, %v561
  %v617 = vadd.f32 %v87, %v563
  %v618 = vadd.f32 %v88, %v566
  %v619 = vadd.f32 %v89, %v568
  %v620 = vadd.f32 %v90, %v571
  %v621 = vadd.f32 %v91, %v573
  %v622 = vadd.f32 %v92, %v576
  %v623 = vadd.f32 %v93, %v578
  %v624 = vadd.f32 %v94, %v581
  %v625 = vadd.f32 %v95, %v583
  %v626 = vadd.f32 %v96, %v586
  %v627 = vadd.f32 %v97, %v588
  %v628 = vadd.f32 %v98, %v591
  %v629 = vadd.f32 %v99, %v593
  %v630 = vadd.f32 %v100, %v596
  %v631 = vadd.f32 %v101, %v598
  %632 = vst [vmem:[#allocation2] sm:$0xff] %v600
  %633 = vst [vmem:[#allocation2 + $0x8] sm:$0xff] %v601
  %634 = vst [vmem:[#allocation2 + $0x10] sm:$0xff] %v602
  %635 = vst [vmem:[#allocation2 + $0x18] sm:$0xff] %v603
  %636 = vst [vmem:[#allocation2 + $0x20] sm:$0xff] %v604
  %637 = vst [vmem:[#allocation2 + $0x28] sm:$0xff] %v605
  %638 = vst [vmem:[#allocation2 + $0x30] sm:$0xff] %v606
  %639 = vst [vmem:[#allocation2 + $0x38] sm:$0xff] %v607
  %640 = vst [vmem:[#allocation2 + $0x40] sm:$0xff] %v608
  %641 = vst [vmem:[#allocation2 + $0x48] sm:$0xff] %v609
  %642 = vst [vmem:[#allocation2 + $0x50] sm:$0xff] %v610
  %643 = vst [vmem:[#allocation2 + $0x58] sm:$0xff] %v611
  %644 = vst [vmem:[#allocation2 + $0x60] sm:$0xff] %v612
  %645 = vst [vmem:[#allocation2 + $0x68] sm:$0xff] %v613
  %646 = vst [vmem:[#allocation2 + $0x70] sm:$0xff] %v614
  %647 = vst [vmem:[#allocation2 + $0x78] sm:$0xff] %v615
  %648 = vst [vmem:[#allocation2 + $0x80] sm:$0xff] %v616
  %649 = vst [vmem:[#allocation2 + $0x88] sm:$0xff] %v617
  %650 = vst [vmem:[#allocation2 + $0x90] sm:$0xff] %v618
  %651 = vst [vmem:[#allocation2 + $0x98] sm:$0xff] %v619
  %652 = vst [vmem:[#allocation2 + $0xa0] sm:$0xff] %v620
  %653 = vst [vmem:[#allocation2 + $0xa8] sm:$0xff] %v621
  %654 = vst [vmem:[#allocation2 + $0xb0] sm:$0xff] %v622
  %655 = vst [vmem:[#allocation2 + $0xb8] sm:$0xff] %v623
  %656 = vst [vmem:[#allocation2 + $0xc0] sm:$0xff] %v624
  %657 = vst [vmem:[#allocation2 + $0xc8] sm:$0xff] %v625
  %658 = vst [vmem:[#allocation2 + $0xd0] sm:$0xff] %v626
  %659 = vst [vmem:[#allocation2 + $0xd8] sm:$0xff] %v627
  %660 = vst [vmem:[#allocation2 + $0xe0] sm:$0xff] %v628
  %661 = vst [vmem:[#allocation2 + $0xe8] sm:$0xff] %v629
  %662 = vst [vmem:[#allocation2 + $0xf0] sm:$0xff] %v630
  %663 = vst [vmem:[#allocation2 + $0xf8] sm:$0xff] %v631
  // Predicated region
  $region42: #{nifty_forward.4} parent=0 // pred_check
    %p664 = pneg %p34
  $region43: #{nifty_forward.4} parent=0 // pred_check_branch
    %666 = sbr.rel (%p664) target = $region45
  $region44: #{nifty_forward.4} parent=0 // pred_region
    %v667 = vld [vmem:[%s2] sm:$0xf]
    %v668 = vld [vmem:[%s2 + $0x4] sm:$0xf]
    %v669 = vld [vmem:[%s2 + $0x8] sm:$0xf]
    %v670 = vld [vmem:[%s2 + $0xc] sm:$0xf]
    %v671 = vld [vmem:[%s2 + $0x10] sm:$0xf]
    %v672 = vld [vmem:[%s2 + $0x14] sm:$0xf]
    %v673 = vld [vmem:[%s2 + $0x18] sm:$0xf]
    %v674 = vld [vmem:[%s2 + $0x1c] sm:$0xf]
    %v675 = vld [vmem:[%s2 + $0x20] sm:$0xf]
    %v676 = vld [vmem:[%s2 + $0x24] sm:$0xf]
    %v677 = vld [vmem:[%s2 + $0x28] sm:$0xf]
    %v678 = vld [vmem:[%s2 + $0x2c] sm:$0xf]
    %v679 = vld [vmem:[%s2 + $0x30] sm:$0xf]
    %v680 = vld [vmem:[%s2 + $0x34] sm:$0xf]
    %v681 = vld [vmem:[%s2 + $0x38] sm:$0xf]
    %v682 = vld [vmem:[%s2 + $0x3c] sm:$0xf]
    %v683 = vld [vmem:[%s2 + $0x40] sm:$0xf]
    %v684 = vld [vmem:[%s2 + $0x44] sm:$0xf]
    %v685 = vld [vmem:[%s2 + $0x48] sm:$0xf]
    %v686 = vld [vmem:[%s2 + $0x4c] sm:$0xf]
    %v687 = vld [vmem:[%s2 + $0x50] sm:$0xf]
    %v688 = vld [vmem:[%s2 + $0x54] sm:$0xf]
    %v689 = vld [vmem:[%s2 + $0x58] sm:$0xf]
    %v690 = vld [vmem:[%s2 + $0x5c] sm:$0xf]
    %v691 = vld [vmem:[%s2 + $0x60] sm:$0xf]
    %v692 = vld [vmem:[%s2 + $0x64] sm:$0xf]
    %v693 = vld [vmem:[%s2 + $0x68] sm:$0xf]
    %v694 = vld [vmem:[%s2 + $0x6c] sm:$0xf]
    %v695 = vld [vmem:[%s2 + $0x70] sm:$0xf]
    %v696 = vld [vmem:[%s2 + $0x74] sm:$0xf]
    %v697 = vld [vmem:[%s2 + $0x78] sm:$0xf]
    %v698 = vld [vmem:[%s2 + $0x7c] sm:$0xf]
    %v699 = vunpack.c.l.bf16 %v667
    %v700 = vunpack.c.l.bf16 %v668
    %v701 = vunpack.c.l.bf16 %v669
    %v702 = vunpack.c.l.bf16 %v670
    %v703 = vunpack.c.l.bf16 %v671
    %v704 = vunpack.c.l.bf16 %v672
    %v705 = vunpack.c.l.bf16 %v673
    %v706 = vunpack.c.l.bf16 %v674
    %v707 = vunpack.c.l.bf16 %v675
    %v708 = vunpack.c.l.bf16 %v676
    %v709 = vunpack.c.l.bf16 %v677
    %v710 = vunpack.c.l.bf16 %v678
    %v711 = vunpack.c.l.bf16 %v679
    %v712 = vunpack.c.l.bf16 %v680
    %v713 = vunpack.c.l.bf16 %v681
    %v714 = vunpack.c.l.bf16 %v682
    %v715 = vunpack.c.l.bf16 %v683
    %v716 = vunpack.c.l.bf16 %v684
    %v717 = vunpack.c.l.bf16 %v685
    %v718 = vunpack.c.l.bf16 %v686
    %v719 = vunpack.c.l.bf16 %v687
    %v720 = vunpack.c.l.bf16 %v688
    %v721 = vunpack.c.l.bf16 %v689
    %v722 = vunpack.c.l.bf16 %v690
    %v723 = vunpack.c.l.bf16 %v691
    %v724 = vunpack.c.l.bf16 %v692
    %v725 = vunpack.c.l.bf16 %v693
    %v726 = vunpack.c.l.bf16 %v694
    %v727 = vunpack.c.l.bf16 %v695
    %v728 = vunpack.c.l.bf16 %v696
    %v729 = vunpack.c.l.bf16 %v697
    %v730 = vunpack.c.l.bf16 %v698
    %v731 = vld [vmem:[%s3] sm:$0xff]
    %v732 = vld [vmem:[%s3 + $0x8] sm:$0xff]
    %v733 = vld [vmem:[%s3 + $0x10] sm:$0xff]
    %v734 = vld [vmem:[%s3 + $0x18] sm:$0xff]
    %v735 = vld [vmem:[%s3 + $0x20] sm:$0xff]
    %v736 = vld [vmem:[%s3 + $0x28] sm:$0xff]
    %v737 = vld [vmem:[%s3 + $0x30] sm:$0xff]
    %v738 = vld [vmem:[%s3 + $0x38] sm:$0xff]
    %v739 = vld [vmem:[%s3 + $0x40] sm:$0xff]
    %v740 = vld [vmem:[%s3 + $0x48] sm:$0xff]
    %v741 = vld [vmem:[%s3 + $0x50] sm:$0xff]
    %v742 = vld [vmem:[%s3 + $0x58] sm:$0xff]
    %v743 = vld [vmem:[%s3 + $0x60] sm:$0xff]
    %v744 = vld [vmem:[%s3 + $0x68] sm:$0xff]
    %v745 = vld [vmem:[%s3 + $0x70] sm:$0xff]
    %v746 = vld [vmem:[%s3 + $0x78] sm:$0xff]
    %v747 = vld [vmem:[%s3 + $0x80] sm:$0xff]
    %v748 = vld [vmem:[%s3 + $0x88] sm:$0xff]
    %v749 = vld [vmem:[%s3 + $0x90] sm:$0xff]
    %v750 = vld [vmem:[%s3 + $0x98] sm:$0xff]
    %v751 = vld [vmem:[%s3 + $0xa0] sm:$0xff]
    %v752 = vld [vmem:[%s3 + $0xa8] sm:$0xff]
    %v753 = vld [vmem:[%s3 + $0xb0] sm:$0xff]
    %v754 = vld [vmem:[%s3 + $0xb8] sm:$0xff]
    %v755 = vld [vmem:[%s3 + $0xc0] sm:$0xff]
    %v756 = vld [vmem:[%s3 + $0xc8] sm:$0xff]
    %v757 = vld [vmem:[%s3 + $0xd0] sm:$0xff]
    %v758 = vld [vmem:[%s3 + $0xd8] sm:$0xff]
    %v759 = vld [vmem:[%s3 + $0xe0] sm:$0xff]
    %v760 = vld [vmem:[%s3 + $0xe8] sm:$0xff]
    %v761 = vld [vmem:[%s3 + $0xf0] sm:$0xff]
    %v762 = vld [vmem:[%s3 + $0xf8] sm:$0xff]
    %v763 = vld [vmem:[#allocation2] sm:$0xff]
    %v764 = vld [vmem:[#allocation2 + $0x8] sm:$0xff]
    %v765 = vld [vmem:[#allocation2 + $0x10] sm:$0xff]
    %v766 = vld [vmem:[#allocation2 + $0x18] sm:$0xff]
    %v767 = vld [vmem:[#allocation2 + $0x20] sm:$0xff]
    %v768 = vld [vmem:[#allocation2 + $0x28] sm:$0xff]
    %v769 = vld [vmem:[#allocation2 + $0x30] sm:$0xff]
    %v770 = vld [vmem:[#allocation2 + $0x38] sm:$0xff]
    %v771 = vld [vmem:[#allocation2 + $0x40] sm:$0xff]
    %v772 = vld [vmem:[#allocation2 + $0x48] sm:$0xff]
    %v773 = vld [vmem:[#allocation2 + $0x50] sm:$0xff]
    %v774 = vld [vmem:[#allocation2 + $0x58] sm:$0xff]
    %v775 = vld [vmem:[#allocation2 + $0x60] sm:$0xff]
    %v776 = vld [vmem:[#allocation2 + $0x68] sm:$0xff]
    %v777 = vld [vmem:[#allocation2 + $0x70] sm:$0xff]
    %v778 = vld [vmem:[#allocation2 + $0x78] sm:$0xff]
    %v779 = vld [vmem:[#allocation2 + $0x80] sm:$0xff]
    %v780 = vld [vmem:[#allocation2 + $0x88] sm:$0xff]
    %v781 = vld [vmem:[#allocation2 + $0x90] sm:$0xff]
    %v782 = vld [vmem:[#allocation2 + $0x98] sm:$0xff]
    %v783 = vld [vmem:[#allocation2 + $0xa0] sm:$0xff]
    %v784 = vld [vmem:[#allocation2 + $0xa8] sm:$0xff]
    %v785 = vld [vmem:[#allocation2 + $0xb0] sm:$0xff]
    %v786 = vld [vmem:[#allocation2 + $0xb8] sm:$0xff]
    %v787 = vld [vmem:[#allocation2 + $0xc0] sm:$0xff]
    %v788 = vld [vmem:[#allocation2 + $0xc8] sm:$0xff]
    %v789 = vld [vmem:[#allocation2 + $0xd0] sm:$0xff]
    %v790 = vld [vmem:[#allocation2 + $0xd8] sm:$0xff]
    %v791 = vld [vmem:[#allocation2 + $0xe0] sm:$0xff]
    %v792 = vld [vmem:[#allocation2 + $0xe8] sm:$0xff]
    %v793 = vld [vmem:[#allocation2 + $0xf0] sm:$0xff]
    %v794 = vld [vmem:[#allocation2 + $0xf8] sm:$0xff]
    %796 = vset.pattern.permute.xlu0 0
    %797 = vperm.xlu0 %796, %v731
    %v798 = vpop.permute.xlu0 %797
    %801 = vset.pattern.permute.xlu0 0
    %802 = vperm.xlu0 %801, %v732
    %v803 = vpop.permute.xlu0 %802
    %806 = vset.pattern.permute.xlu0 0
    %807 = vperm.xlu0 %806, %v733
    %v808 = vpop.permute.xlu0 %807
    %811 = vset.pattern.permute.xlu0 0
    %812 = vperm.xlu0 %811, %v734
    %v813 = vpop.permute.xlu0 %812
    %816 = vset.pattern.permute.xlu0 0
    %817 = vperm.xlu0 %816, %v735
    %v818 = vpop.permute.xlu0 %817
    %821 = vset.pattern.permute.xlu0 0
    %822 = vperm.xlu0 %821, %v736
    %v823 = vpop.permute.xlu0 %822
    %826 = vset.pattern.permute.xlu0 0
    %827 = vperm.xlu0 %826, %v737
    %v828 = vpop.permute.xlu0 %827
    %831 = vset.pattern.permute.xlu0 0
    %832 = vperm.xlu0 %831, %v738
    %v833 = vpop.permute.xlu0 %832
    %836 = vset.pattern.permute.xlu0 0
    %837 = vperm.xlu0 %836, %v739
    %v838 = vpop.permute.xlu0 %837
    %841 = vset.pattern.permute.xlu0 0
    %842 = vperm.xlu0 %841, %v740
    %v843 = vpop.permute.xlu0 %842
    %846 = vset.pattern.permute.xlu0 0
    %847 = vperm.xlu0 %846, %v741
    %v848 = vpop.permute.xlu0 %847
    %851 = vset.pattern.permute.xlu0 0
    %852 = vperm.xlu0 %851, %v742
    %v853 = vpop.permute.xlu0 %852
    %856 = vset.pattern.permute.xlu0 0
    %857 = vperm.xlu0 %856, %v743
    %v858 = vpop.permute.xlu0 %857
    %861 = vset.pattern.permute.xlu0 0
    %862 = vperm.xlu0 %861, %v744
    %v863 = vpop.permute.xlu0 %862
    %866 = vset.pattern.permute.xlu0 0
    %867 = vperm.xlu0 %866, %v745
    %v868 = vpop.permute.xlu0 %867
    %871 = vset.pattern.permute.xlu0 0
    %872 = vperm.xlu0 %871, %v746
    %v873 = vpop.permute.xlu0 %872
    %876 = vset.pattern.permute.xlu0 0
    %877 = vperm.xlu0 %876, %v747
    %v878 = vpop.permute.xlu0 %877
    %881 = vset.pattern.permute.xlu0 0
    %882 = vperm.xlu0 %881, %v748
    %v883 = vpop.permute.xlu0 %882
    %886 = vset.pattern.permute.xlu0 0
    %887 = vperm.xlu0 %886, %v749
    %v888 = vpop.permute.xlu0 %887
    %891 = vset.pattern.permute.xlu0 0
    %892 = vperm.xlu0 %891, %v750
    %v893 = vpop.permute.xlu0 %892
    %896 = vset.pattern.permute.xlu0 0
    %897 = vperm.xlu0 %896, %v751
    %v898 = vpop.permute.xlu0 %897
    %901 = vset.pattern.permute.xlu0 0
    %902 = vperm.xlu0 %901, %v752
    %v903 = vpop.permute.xlu0 %902
    %906 = vset.pattern.permute.xlu0 0
    %907 = vperm.xlu0 %906, %v753
    %v908 = vpop.permute.xlu0 %907
    %911 = vset.pattern.permute.xlu0 0
    %912 = vperm.xlu0 %911, %v754
    %v913 = vpop.permute.xlu0 %912
    %916 = vset.pattern.permute.xlu0 0
    %917 = vperm.xlu0 %916, %v755
    %v918 = vpop.permute.xlu0 %917
    %921 = vset.pattern.permute.xlu0 0
    %922 = vperm.xlu0 %921, %v756
    %v923 = vpop.permute.xlu0 %922
    %926 = vset.pattern.permute.xlu0 0
    %927 = vperm.xlu0 %926, %v757
    %v928 = vpop.permute.xlu0 %927
    %931 = vset.pattern.permute.xlu0 0
    %932 = vperm.xlu0 %931, %v758
    %v933 = vpop.permute.xlu0 %932
    %936 = vset.pattern.permute.xlu0 0
    %937 = vperm.xlu0 %936, %v759
    %v938 = vpop.permute.xlu0 %937
    %941 = vset.pattern.permute.xlu0 0
    %942 = vperm.xlu0 %941, %v760
    %v943 = vpop.permute.xlu0 %942
    %946 = vset.pattern.permute.xlu0 0
    %947 = vperm.xlu0 %946, %v761
    %v948 = vpop.permute.xlu0 %947
    %951 = vset.pattern.permute.xlu0 0
    %952 = vperm.xlu0 %951, %v762
    %v953 = vpop.permute.xlu0 %952
    %v955 = vmul.f32 %v798, %v763
    %v956 = vmul.f32 %v803, %v764
    %v957 = vmul.f32 %v808, %v765
    %v958 = vmul.f32 %v813, %v766
    %v959 = vmul.f32 %v818, %v767
    %v960 = vmul.f32 %v823, %v768
    %v961 = vmul.f32 %v828, %v769
    %v962 = vmul.f32 %v833, %v770
    %v963 = vmul.f32 %v838, %v771
    %v964 = vmul.f32 %v843, %v772
    %v965 = vmul.f32 %v848, %v773
    %v966 = vmul.f32 %v853, %v774
    %v967 = vmul.f32 %v858, %v775
    %v968 = vmul.f32 %v863, %v776
    %v969 = vmul.f32 %v868, %v777
    %v970 = vmul.f32 %v873, %v778
    %v971 = vmul.f32 %v878, %v779
    %v972 = vmul.f32 %v883, %v780
    %v973 = vmul.f32 %v888, %v781
    %v974 = vmul.f32 %v893, %v782
    %v975 = vmul.f32 %v898, %v783
    %v976 = vmul.f32 %v903, %v784
    %v977 = vmul.f32 %v908, %v785
    %v978 = vmul.f32 %v913, %v786
    %v979 = vmul.f32 %v918, %v787
    %v980 = vmul.f32 %v923, %v788
    %v981 = vmul.f32 %v928, %v789
    %v982 = vmul.f32 %v933, %v790
    %v983 = vmul.f32 %v938, %v791
    %v984 = vmul.f32 %v943, %v792
    %v985 = vmul.f32 %v948, %v793
    %v986 = vmul.f32 %v953, %v794
    %v987 = vadd.f32 %v699, %v955
    %v988 = vadd.f32 %v700, %v956
    %v989 = vadd.f32 %v701, %v957
    %v990 = vadd.f32 %v702, %v958
    %v991 = vadd.f32 %v703, %v959
    %v992 = vadd.f32 %v704, %v960
    %v993 = vadd.f32 %v705, %v961
    %v994 = vadd.f32 %v706, %v962
    %v995 = vadd.f32 %v707, %v963
    %v996 = vadd.f32 %v708, %v964
    %v997 = vadd.f32 %v709, %v965
    %v998 = vadd.f32 %v710, %v966
    %v999 = vadd.f32 %v711, %v967
    %v1000 = vadd.f32 %v712, %v968
    %v1001 = vadd.f32 %v713, %v969
    %v1002 = vadd.f32 %v714, %v970
    %v1003 = vadd.f32 %v715, %v971
    %v1004 = vadd.f32 %v716, %v972
    %v1005 = vadd.f32 %v717, %v973
    %v1006 = vadd.f32 %v718, %v974
    %v1007 = vadd.f32 %v719, %v975
    %v1008 = vadd.f32 %v720, %v976
    %v1009 = vadd.f32 %v721, %v977
    %v1010 = vadd.f32 %v722, %v978
    %v1011 = vadd.f32 %v723, %v979
    %v1012 = vadd.f32 %v724, %v980
    %v1013 = vadd.f32 %v725, %v981
    %v1014 = vadd.f32 %v726, %v982
    %v1015 = vadd.f32 %v727, %v983
    %v1016 = vadd.f32 %v728, %v984
    %v1017 = vadd.f32 %v729, %v985
    %v1018 = vadd.f32 %v730, %v986
    %v1019 = vmul.f32 %v987, %v987
    %v1020 = vmul.f32 %v988, %v988
    %v1021 = vmul.f32 %v989, %v989
    %v1022 = vmul.f32 %v990, %v990
    %v1023 = vmul.f32 %v991, %v991
    %v1024 = vmul.f32 %v992, %v992
    %v1025 = vmul.f32 %v993, %v993
    %v1026 = vmul.f32 %v994, %v994
    %v1027 = vmul.f32 %v995, %v995
    %v1028 = vmul.f32 %v996, %v996
    %v1029 = vmul.f32 %v997, %v997
    %v1030 = vmul.f32 %v998, %v998
    %v1031 = vmul.f32 %v999, %v999
    %v1032 = vmul.f32 %v1000, %v1000
    %v1033 = vmul.f32 %v1001, %v1001
    %v1034 = vmul.f32 %v1002, %v1002
    %v1035 = vmul.f32 %v1003, %v1003
    %v1036 = vmul.f32 %v1004, %v1004
    %v1037 = vmul.f32 %v1005, %v1005
    %v1038 = vmul.f32 %v1006, %v1006
    %v1039 = vmul.f32 %v1007, %v1007
    %v1040 = vmul.f32 %v1008, %v1008
    %v1041 = vmul.f32 %v1009, %v1009
    %v1042 = vmul.f32 %v1010, %v1010
    %v1043 = vmul.f32 %v1011, %v1011
    %v1044 = vmul.f32 %v1012, %v1012
    %v1045 = vmul.f32 %v1013, %v1013
    %v1046 = vmul.f32 %v1014, %v1014
    %v1047 = vmul.f32 %v1015, %v1015
    %v1048 = vmul.f32 %v1016, %v1016
    %v1049 = vmul.f32 %v1017, %v1017
    %v1050 = vmul.f32 %v1018, %v1018
    %1051 = vadd.xlane.f32.xlu0 %v1019
    %v1052 = vpop.xlane.xlu0 %1051
    %1053 = vadd.xlane.f32.xlu0 %v1020
    %v1054 = vpop.xlane.xlu0 %1053
    %1055 = vadd.xlane.f32.xlu0 %v1021
    %v1056 = vpop.xlane.xlu0 %1055
    %1057 = vadd.xlane.f32.xlu0 %v1022
    %v1058 = vpop.xlane.xlu0 %1057
    %1059 = vadd.xlane.f32.xlu0 %v1023
    %v1060 = vpop.xlane.xlu0 %1059
    %1061 = vadd.xlane.f32.xlu0 %v1024
    %v1062 = vpop.xlane.xlu0 %1061
    %1063 = vadd.xlane.f32.xlu0 %v1025
    %v1064 = vpop.xlane.xlu0 %1063
    %1065 = vadd.xlane.f32.xlu0 %v1026
    %v1066 = vpop.xlane.xlu0 %1065
    %1067 = vadd.xlane.f32.xlu0 %v1027
    %v1068 = vpop.xlane.xlu0 %1067
    %1069 = vadd.xlane.f32.xlu0 %v1028
    %v1070 = vpop.xlane.xlu0 %1069
    %1071 = vadd.xlane.f32.xlu0 %v1029
    %v1072 = vpop.xlane.xlu0 %1071
    %1073 = vadd.xlane.f32.xlu0 %v1030
    %v1074 = vpop.xlane.xlu0 %1073
    %1075 = vadd.xlane.f32.xlu0 %v1031
    %v1076 = vpop.xlane.xlu0 %1075
    %1077 = vadd.xlane.f32.xlu0 %v1032
    %v1078 = vpop.xlane.xlu0 %1077
    %1079 = vadd.xlane.f32.xlu0 %v1033
    %v1080 = vpop.xlane.xlu0 %1079
    %1081 = vadd.xlane.f32.xlu0 %v1034
    %v1082 = vpop.xlane.xlu0 %1081
    %1083 = vadd.xlane.f32.xlu0 %v1035
    %v1084 = vpop.xlane.xlu0 %1083
    %1085 = vadd.xlane.f32.xlu0 %v1036
    %v1086 = vpop.xlane.xlu0 %1085
    %1087 = vadd.xlane.f32.xlu0 %v1037
    %v1088 = vpop.xlane.xlu0 %1087
    %1089 = vadd.xlane.f32.xlu0 %v1038
    %v1090 = vpop.xlane.xlu0 %1089
    %1091 = vadd.xlane.f32.xlu0 %v1039
    %v1092 = vpop.xlane.xlu0 %1091
    %1093 = vadd.xlane.f32.xlu0 %v1040
    %v1094 = vpop.xlane.xlu0 %1093
    %1095 = vadd.xlane.f32.xlu0 %v1041
    %v1096 = vpop.xlane.xlu0 %1095
    %1097 = vadd.xlane.f32.xlu0 %v1042
    %v1098 = vpop.xlane.xlu0 %1097
    %1099 = vadd.xlane.f32.xlu0 %v1043
    %v1100 = vpop.xlane.xlu0 %1099
    %1101 = vadd.xlane.f32.xlu0 %v1044
    %v1102 = vpop.xlane.xlu0 %1101
    %1103 = vadd.xlane.f32.xlu0 %v1045
    %v1104 = vpop.xlane.xlu0 %1103
    %1105 = vadd.xlane.f32.xlu0 %v1046
    %v1106 = vpop.xlane.xlu0 %1105
    %1107 = vadd.xlane.f32.xlu0 %v1047
    %v1108 = vpop.xlane.xlu0 %1107
    %1109 = vadd.xlane.f32.xlu0 %v1048
    %v1110 = vpop.xlane.xlu0 %1109
    %1111 = vadd.xlane.f32.xlu0 %v1049
    %v1112 = vpop.xlane.xlu0 %1111
    %1113 = vadd.xlane.f32.xlu0 %v1050
    %v1114 = vpop.xlane.xlu0 %1113
    %v1115 = vmax.f32 %v1052, 1e-24
    %v1116 = vmax.f32 %v1054, 1e-24
    %v1117 = vmax.f32 %v1056, 1e-24
    %v1118 = vmax.f32 %v1058, 1e-24
    %v1119 = vmax.f32 %v1060, 1e-24
    %v1120 = vmax.f32 %v1062, 1e-24
    %v1121 = vmax.f32 %v1064, 1e-24
    %v1122 = vmax.f32 %v1066, 1e-24
    %v1123 = vmax.f32 %v1068, 1e-24
    %v1124 = vmax.f32 %v1070, 1e-24
    %v1125 = vmax.f32 %v1072, 1e-24
    %v1126 = vmax.f32 %v1074, 1e-24
    %v1127 = vmax.f32 %v1076, 1e-24
    %v1128 = vmax.f32 %v1078, 1e-24
    %v1129 = vmax.f32 %v1080, 1e-24
    %v1130 = vmax.f32 %v1082, 1e-24
    %v1131 = vmax.f32 %v1084, 1e-24
    %v1132 = vmax.f32 %v1086, 1e-24
    %v1133 = vmax.f32 %v1088, 1e-24
    %v1134 = vmax.f32 %v1090, 1e-24
    %v1135 = vmax.f32 %v1092, 1e-24
    %v1136 = vmax.f32 %v1094, 1e-24
    %v1137 = vmax.f32 %v1096, 1e-24
    %v1138 = vmax.f32 %v1098, 1e-24
    %v1139 = vmax.f32 %v1100, 1e-24
    %v1140 = vmax.f32 %v1102, 1e-24
    %v1141 = vmax.f32 %v1104, 1e-24
    %v1142 = vmax.f32 %v1106, 1e-24
    %v1143 = vmax.f32 %v1108, 1e-24
    %v1144 = vmax.f32 %v1110, 1e-24
    %v1145 = vmax.f32 %v1112, 1e-24
    %v1146 = vmax.f32 %v1114, 1e-24
    %v1147 = vrsqrt.pop %v1115
    %v1148 = vmul.f32 %v1147, %v1115
    %v1149 = vmul.f32 %v1148, %v1147
    %v1150 = vmul.f32 0.5, %v1149
    %v1151 = vsub.f32 1.5, %v1150
    %v1152 = vmul.f32 %v1147, %v1151
    %vm1153 = vweird.f32 %v1115
    %vm1154 = vweird.f32 %v1147
    %vm1155 = vmor %vm1153, %vm1154
    %v1156 = vsel %vm1155, %v1147, %v1152
    %v1157 = vrsqrt.pop %v1116
    %v1158 = vmul.f32 %v1157, %v1116
    %v1159 = vmul.f32 %v1158, %v1157
    %v1160 = vmul.f32 0.5, %v1159
    %v1161 = vsub.f32 1.5, %v1160
    %v1162 = vmul.f32 %v1157, %v1161
    %vm1163 = vweird.f32 %v1116
    %vm1164 = vweird.f32 %v1157
    %vm1165 = vmor %vm1163, %vm1164
    %v1166 = vsel %vm1165, %v1157, %v1162
    %v1167 = vrsqrt.pop %v1117
    %v1168 = vmul.f32 %v1167, %v1117
    %v1169 = vmul.f32 %v1168, %v1167
    %v1170 = vmul.f32 0.5, %v1169
    %v1171 = vsub.f32 1.5, %v1170
    %v1172 = vmul.f32 %v1167, %v1171
    %vm1173 = vweird.f32 %v1117
    %vm1174 = vweird.f32 %v1167
    %vm1175 = vmor %vm1173, %vm1174
    %v1176 = vsel %vm1175, %v1167, %v1172
    %v1177 = vrsqrt.pop %v1118
    %v1178 = vmul.f32 %v1177, %v1118
    %v1179 = vmul.f32 %v1178, %v1177
    %v1180 = vmul.f32 0.5, %v1179
    %v1181 = vsub.f32 1.5, %v1180
    %v1182 = vmul.f32 %v1177, %v1181
    %vm1183 = vweird.f32 %v1118
    %vm1184 = vweird.f32 %v1177
    %vm1185 = vmor %vm1183, %vm1184
    %v1186 = vsel %vm1185, %v1177, %v1182
    %v1187 = vrsqrt.pop %v1119
    %v1188 = vmul.f32 %v1187, %v1119
    %v1189 = vmul.f32 %v1188, %v1187
    %v1190 = vmul.f32 0.5, %v1189
    %v1191 = vsub.f32 1.5, %v1190
    %v1192 = vmul.f32 %v1187, %v1191
    %vm1193 = vweird.f32 %v1119
    %vm1194 = vweird.f32 %v1187
    %vm1195 = vmor %vm1193, %vm1194
    %v1196 = vsel %vm1195, %v1187, %v1192
    %v1197 = vrsqrt.pop %v1120
    %v1198 = vmul.f32 %v1197, %v1120
    %v1199 = vmul.f32 %v1198, %v1197
    %v1200 = vmul.f32 0.5, %v1199
    %v1201 = vsub.f32 1.5, %v1200
    %v1202 = vmul.f32 %v1197, %v1201
    %vm1203 = vweird.f32 %v1120
    %vm1204 = vweird.f32 %v1197
    %vm1205 = vmor %vm1203, %vm1204
    %v1206 = vsel %vm1205, %v1197, %v1202
    %v1207 = vrsqrt.pop %v1121
    %v1208 = vmul.f32 %v1207, %v1121
    %v1209 = vmul.f32 %v1208, %v1207
    %v1210 = vmul.f32 0.5, %v1209
    %v1211 = vsub.f32 1.5, %v1210
    %v1212 = vmul.f32 %v1207, %v1211
    %vm1213 = vweird.f32 %v1121
    %vm1214 = vweird.f32 %v1207
    %vm1215 = vmor %vm1213, %vm1214
    %v1216 = vsel %vm1215, %v1207, %v1212
    %v1217 = vrsqrt.pop %v1122
    %v1218 = vmul.f32 %v1217, %v1122
    %v1219 = vmul.f32 %v1218, %v1217
    %v1220 = vmul.f32 0.5, %v1219
    %v1221 = vsub.f32 1.5, %v1220
    %v1222 = vmul.f32 %v1217, %v1221
    %vm1223 = vweird.f32 %v1122
    %vm1224 = vweird.f32 %v1217
    %vm1225 = vmor %vm1223, %vm1224
    %v1226 = vsel %vm1225, %v1217, %v1222
    %v1227 = vrsqrt.pop %v1123
    %v1228 = vmul.f32 %v1227, %v1123
    %v1229 = vmul.f32 %v1228, %v1227
    %v1230 = vmul.f32 0.5, %v1229
    %v1231 = vsub.f32 1.5, %v1230
    %v1232 = vmul.f32 %v1227, %v1231
    %vm1233 = vweird.f32 %v1123
    %vm1234 = vweird.f32 %v1227
    %vm1235 = vmor %vm1233, %vm1234
    %v1236 = vsel %vm1235, %v1227, %v1232
    %v1237 = vrsqrt.pop %v1124
    %v1238 = vmul.f32 %v1237, %v1124
    %v1239 = vmul.f32 %v1238, %v1237
    %v1240 = vmul.f32 0.5, %v1239
    %v1241 = vsub.f32 1.5, %v1240
    %v1242 = vmul.f32 %v1237, %v1241
    %vm1243 = vweird.f32 %v1124
    %vm1244 = vweird.f32 %v1237
    %vm1245 = vmor %vm1243, %vm1244
    %v1246 = vsel %vm1245, %v1237, %v1242
    %v1247 = vrsqrt.pop %v1125
    %v1248 = vmul.f32 %v1247, %v1125
    %v1249 = vmul.f32 %v1248, %v1247
    %v1250 = vmul.f32 0.5, %v1249
    %v1251 = vsub.f32 1.5, %v1250
    %v1252 = vmul.f32 %v1247, %v1251
    %vm1253 = vweird.f32 %v1125
    %vm1254 = vweird.f32 %v1247
    %vm1255 = vmor %vm1253, %vm1254
    %v1256 = vsel %vm1255, %v1247, %v1252
    %v1257 = vrsqrt.pop %v1126
    %v1258 = vmul.f32 %v1257, %v1126
    %v1259 = vmul.f32 %v1258, %v1257
    %v1260 = vmul.f32 0.5, %v1259
    %v1261 = vsub.f32 1.5, %v1260
    %v1262 = vmul.f32 %v1257, %v1261
    %vm1263 = vweird.f32 %v1126
    %vm1264 = vweird.f32 %v1257
    %vm1265 = vmor %vm1263, %vm1264
    %v1266 = vsel %vm1265, %v1257, %v1262
    %v1267 = vrsqrt.pop %v1127
    %v1268 = vmul.f32 %v1267, %v1127
    %v1269 = vmul.f32 %v1268, %v1267
    %v1270 = vmul.f32 0.5, %v1269
    %v1271 = vsub.f32 1.5, %v1270
    %v1272 = vmul.f32 %v1267, %v1271
    %vm1273 = vweird.f32 %v1127
    %vm1274 = vweird.f32 %v1267
    %vm1275 = vmor %vm1273, %vm1274
    %v1276 = vsel %vm1275, %v1267, %v1272
    %v1277 = vrsqrt.pop %v1128
    %v1278 = vmul.f32 %v1277, %v1128
    %v1279 = vmul.f32 %v1278, %v1277
    %v1280 = vmul.f32 0.5, %v1279
    %v1281 = vsub.f32 1.5, %v1280
    %v1282 = vmul.f32 %v1277, %v1281
    %vm1283 = vweird.f32 %v1128
    %vm1284 = vweird.f32 %v1277
    %vm1285 = vmor %vm1283, %vm1284
    %v1286 = vsel %vm1285, %v1277, %v1282
    %v1287 = vrsqrt.pop %v1129
    %v1288 = vmul.f32 %v1287, %v1129
    %v1289 = vmul.f32 %v1288, %v1287
    %v1290 = vmul.f32 0.5, %v1289
    %v1291 = vsub.f32 1.5, %v1290
    %v1292 = vmul.f32 %v1287, %v1291
    %vm1293 = vweird.f32 %v1129
    %vm1294 = vweird.f32 %v1287
    %vm1295 = vmor %vm1293, %vm1294
    %v1296 = vsel %vm1295, %v1287, %v1292
    %v1297 = vrsqrt.pop %v1130
    %v1298 = vmul.f32 %v1297, %v1130
    %v1299 = vmul.f32 %v1298, %v1297
    %v1300 = vmul.f32 0.5, %v1299
    %v1301 = vsub.f32 1.5, %v1300
    %v1302 = vmul.f32 %v1297, %v1301
    %vm1303 = vweird.f32 %v1130
    %vm1304 = vweird.f32 %v1297
    %vm1305 = vmor %vm1303, %vm1304
    %v1306 = vsel %vm1305, %v1297, %v1302
    %v1307 = vrsqrt.pop %v1131
    %v1308 = vmul.f32 %v1307, %v1131
    %v1309 = vmul.f32 %v1308, %v1307
    %v1310 = vmul.f32 0.5, %v1309
    %v1311 = vsub.f32 1.5, %v1310
    %v1312 = vmul.f32 %v1307, %v1311
    %vm1313 = vweird.f32 %v1131
    %vm1314 = vweird.f32 %v1307
    %vm1315 = vmor %vm1313, %vm1314
    %v1316 = vsel %vm1315, %v1307, %v1312
    %v1317 = vrsqrt.pop %v1132
    %v1318 = vmul.f32 %v1317, %v1132
    %v1319 = vmul.f32 %v1318, %v1317
    %v1320 = vmul.f32 0.5, %v1319
    %v1321 = vsub.f32 1.5, %v1320
    %v1322 = vmul.f32 %v1317, %v1321
    %vm1323 = vweird.f32 %v1132
    %vm1324 = vweird.f32 %v1317
    %vm1325 = vmor %vm1323, %vm1324
    %v1326 = vsel %vm1325, %v1317, %v1322
    %v1327 = vrsqrt.pop %v1133
    %v1328 = vmul.f32 %v1327, %v1133
    %v1329 = vmul.f32 %v1328, %v1327
    %v1330 = vmul.f32 0.5, %v1329
    %v1331 = vsub.f32 1.5, %v1330
    %v1332 = vmul.f32 %v1327, %v1331
    %vm1333 = vweird.f32 %v1133
    %vm1334 = vweird.f32 %v1327
    %vm1335 = vmor %vm1333, %vm1334
    %v1336 = vsel %vm1335, %v1327, %v1332
    %v1337 = vrsqrt.pop %v1134
    %v1338 = vmul.f32 %v1337, %v1134
    %v1339 = vmul.f32 %v1338, %v1337
    %v1340 = vmul.f32 0.5, %v1339
    %v1341 = vsub.f32 1.5, %v1340
    %v1342 = vmul.f32 %v1337, %v1341
    %vm1343 = vweird.f32 %v1134
    %vm1344 = vweird.f32 %v1337
    %vm1345 = vmor %vm1343, %vm1344
    %v1346 = vsel %vm1345, %v1337, %v1342
    %v1347 = vrsqrt.pop %v1135
    %v1348 = vmul.f32 %v1347, %v1135
    %v1349 = vmul.f32 %v1348, %v1347
    %v1350 = vmul.f32 0.5, %v1349
    %v1351 = vsub.f32 1.5, %v1350
    %v1352 = vmul.f32 %v1347, %v1351
    %vm1353 = vweird.f32 %v1135
    %vm1354 = vweird.f32 %v1347
    %vm1355 = vmor %vm1353, %vm1354
    %v1356 = vsel %vm1355, %v1347, %v1352
    %v1357 = vrsqrt.pop %v1136
    %v1358 = vmul.f32 %v1357, %v1136
    %v1359 = vmul.f32 %v1358, %v1357
    %v1360 = vmul.f32 0.5, %v1359
    %v1361 = vsub.f32 1.5, %v1360
    %v1362 = vmul.f32 %v1357, %v1361
    %vm1363 = vweird.f32 %v1136
    %vm1364 = vweird.f32 %v1357
    %vm1365 = vmor %vm1363, %vm1364
    %v1366 = vsel %vm1365, %v1357, %v1362
    %v1367 = vrsqrt.pop %v1137
    %v1368 = vmul.f32 %v1367, %v1137
    %v1369 = vmul.f32 %v1368, %v1367
    %v1370 = vmul.f32 0.5, %v1369
    %v1371 = vsub.f32 1.5, %v1370
    %v1372 = vmul.f32 %v1367, %v1371
    %vm1373 = vweird.f32 %v1137
    %vm1374 = vweird.f32 %v1367
    %vm1375 = vmor %vm1373, %vm1374
    %v1376 = vsel %vm1375, %v1367, %v1372
    %v1377 = vrsqrt.pop %v1138
    %v1378 = vmul.f32 %v1377, %v1138
    %v1379 = vmul.f32 %v1378, %v1377
    %v1380 = vmul.f32 0.5, %v1379
    %v1381 = vsub.f32 1.5, %v1380
    %v1382 = vmul.f32 %v1377, %v1381
    %vm1383 = vweird.f32 %v1138
    %vm1384 = vweird.f32 %v1377
    %vm1385 = vmor %vm1383, %vm1384
    %v1386 = vsel %vm1385, %v1377, %v1382
    %v1387 = vrsqrt.pop %v1139
    %v1388 = vmul.f32 %v1387, %v1139
    %v1389 = vmul.f32 %v1388, %v1387
    %v1390 = vmul.f32 0.5, %v1389
    %v1391 = vsub.f32 1.5, %v1390
    %v1392 = vmul.f32 %v1387, %v1391
    %vm1393 = vweird.f32 %v1139
    %vm1394 = vweird.f32 %v1387
    %vm1395 = vmor %vm1393, %vm1394
    %v1396 = vsel %vm1395, %v1387, %v1392
    %v1397 = vrsqrt.pop %v1140
    %v1398 = vmul.f32 %v1397, %v1140
    %v1399 = vmul.f32 %v1398, %v1397
    %v1400 = vmul.f32 0.5, %v1399
    %v1401 = vsub.f32 1.5, %v1400
    %v1402 = vmul.f32 %v1397, %v1401
    %vm1403 = vweird.f32 %v1140
    %vm1404 = vweird.f32 %v1397
    %vm1405 = vmor %vm1403, %vm1404
    %v1406 = vsel %vm1405, %v1397, %v1402
    %v1407 = vrsqrt.pop %v1141
    %v1408 = vmul.f32 %v1407, %v1141
    %v1409 = vmul.f32 %v1408, %v1407
    %v1410 = vmul.f32 0.5, %v1409
    %v1411 = vsub.f32 1.5, %v1410
    %v1412 = vmul.f32 %v1407, %v1411
    %vm1413 = vweird.f32 %v1141
    %vm1414 = vweird.f32 %v1407
    %vm1415 = vmor %vm1413, %vm1414
    %v1416 = vsel %vm1415, %v1407, %v1412
    %v1417 = vrsqrt.pop %v1142
    %v1418 = vmul.f32 %v1417, %v1142
    %v1419 = vmul.f32 %v1418, %v1417
    %v1420 = vmul.f32 0.5, %v1419
    %v1421 = vsub.f32 1.5, %v1420
    %v1422 = vmul.f32 %v1417, %v1421
    %vm1423 = vweird.f32 %v1142
    %vm1424 = vweird.f32 %v1417
    %vm1425 = vmor %vm1423, %vm1424
    %v1426 = vsel %vm1425, %v1417, %v1422
    %v1427 = vrsqrt.pop %v1143
    %v1428 = vmul.f32 %v1427, %v1143
    %v1429 = vmul.f32 %v1428, %v1427
    %v1430 = vmul.f32 0.5, %v1429
    %v1431 = vsub.f32 1.5, %v1430
    %v1432 = vmul.f32 %v1427, %v1431
    %vm1433 = vweird.f32 %v1143
    %vm1434 = vweird.f32 %v1427
    %vm1435 = vmor %vm1433, %vm1434
    %v1436 = vsel %vm1435, %v1427, %v1432
    %v1437 = vrsqrt.pop %v1144
    %v1438 = vmul.f32 %v1437, %v1144
    %v1439 = vmul.f32 %v1438, %v1437
    %v1440 = vmul.f32 0.5, %v1439
    %v1441 = vsub.f32 1.5, %v1440
    %v1442 = vmul.f32 %v1437, %v1441
    %vm1443 = vweird.f32 %v1144
    %vm1444 = vweird.f32 %v1437
    %vm1445 = vmor %vm1443, %vm1444
    %v1446 = vsel %vm1445, %v1437, %v1442
    %v1447 = vrsqrt.pop %v1145
    %v1448 = vmul.f32 %v1447, %v1145
    %v1449 = vmul.f32 %v1448, %v1447
    %v1450 = vmul.f32 0.5, %v1449
    %v1451 = vsub.f32 1.5, %v1450
    %v1452 = vmul.f32 %v1447, %v1451
    %vm1453 = vweird.f32 %v1145
    %vm1454 = vweird.f32 %v1447
    %vm1455 = vmor %vm1453, %vm1454
    %v1456 = vsel %vm1455, %v1447, %v1452
    %v1457 = vrsqrt.pop %v1146
    %v1458 = vmul.f32 %v1457, %v1146
    %v1459 = vmul.f32 %v1458, %v1457
    %v1460 = vmul.f32 0.5, %v1459
    %v1461 = vsub.f32 1.5, %v1460
    %v1462 = vmul.f32 %v1457, %v1461
    %vm1463 = vweird.f32 %v1146
    %vm1464 = vweird.f32 %v1457
    %vm1465 = vmor %vm1463, %vm1464
    %v1466 = vsel %vm1465, %v1457, %v1462
    %v1467 = vmul.f32 %v987, %v1156
    %v1468 = vmul.f32 %v988, %v1166
    %v1469 = vmul.f32 %v989, %v1176
    %v1470 = vmul.f32 %v990, %v1186
    %v1471 = vmul.f32 %v991, %v1196
    %v1472 = vmul.f32 %v992, %v1206
    %v1473 = vmul.f32 %v993, %v1216
    %v1474 = vmul.f32 %v994, %v1226
    %v1475 = vmul.f32 %v995, %v1236
    %v1476 = vmul.f32 %v996, %v1246
    %v1477 = vmul.f32 %v997, %v1256
    %v1478 = vmul.f32 %v998, %v1266
    %v1479 = vmul.f32 %v999, %v1276
    %v1480 = vmul.f32 %v1000, %v1286
    %v1481 = vmul.f32 %v1001, %v1296
    %v1482 = vmul.f32 %v1002, %v1306
    %v1483 = vmul.f32 %v1003, %v1316
    %v1484 = vmul.f32 %v1004, %v1326
    %v1485 = vmul.f32 %v1005, %v1336
    %v1486 = vmul.f32 %v1006, %v1346
    %v1487 = vmul.f32 %v1007, %v1356
    %v1488 = vmul.f32 %v1008, %v1366
    %v1489 = vmul.f32 %v1009, %v1376
    %v1490 = vmul.f32 %v1010, %v1386
    %v1491 = vmul.f32 %v1011, %v1396
    %v1492 = vmul.f32 %v1012, %v1406
    %v1493 = vmul.f32 %v1013, %v1416
    %v1494 = vmul.f32 %v1014, %v1426
    %v1495 = vmul.f32 %v1015, %v1436
    %v1496 = vmul.f32 %v1016, %v1446
    %v1497 = vmul.f32 %v1017, %v1456
    %v1498 = vmul.f32 %v1018, %v1466
    %v1499 = vmax.f32 %v1467, 0.0
    %v1500 = vmax.f32 %v1468, 0.0
    %v1501 = vmax.f32 %v1469, 0.0
    %v1502 = vmax.f32 %v1470, 0.0
    %v1503 = vmax.f32 %v1471, 0.0
    %v1504 = vmax.f32 %v1472, 0.0
    %v1505 = vmax.f32 %v1473, 0.0
    %v1506 = vmax.f32 %v1474, 0.0
    %v1507 = vmax.f32 %v1475, 0.0
    %v1508 = vmax.f32 %v1476, 0.0
    %v1509 = vmax.f32 %v1477, 0.0
    %v1510 = vmax.f32 %v1478, 0.0
    %v1511 = vmax.f32 %v1479, 0.0
    %v1512 = vmax.f32 %v1480, 0.0
    %v1513 = vmax.f32 %v1481, 0.0
    %v1514 = vmax.f32 %v1482, 0.0
    %v1515 = vmax.f32 %v1483, 0.0
    %v1516 = vmax.f32 %v1484, 0.0
    %v1517 = vmax.f32 %v1485, 0.0
    %v1518 = vmax.f32 %v1486, 0.0
    %v1519 = vmax.f32 %v1487, 0.0
    %v1520 = vmax.f32 %v1488, 0.0
    %v1521 = vmax.f32 %v1489, 0.0
    %v1522 = vmax.f32 %v1490, 0.0
    %v1523 = vmax.f32 %v1491, 0.0
    %v1524 = vmax.f32 %v1492, 0.0
    %v1525 = vmax.f32 %v1493, 0.0
    %v1526 = vmax.f32 %v1494, 0.0
    %v1527 = vmax.f32 %v1495, 0.0
    %v1528 = vmax.f32 %v1496, 0.0
    %v1529 = vmax.f32 %v1497, 0.0
    %v1530 = vmax.f32 %v1498, 0.0
    %v1531 = vld [vmem:[%s4] sm:$0x1]
    %v1533 = vperm.slane %v1531, 0
    %v1535 = vmul.f32 %v1499, %v1533
    %v1536 = vmul.f32 %v1500, %v1533
    %v1537 = vmul.f32 %v1501, %v1533
    %v1538 = vmul.f32 %v1502, %v1533
    %v1539 = vmul.f32 %v1503, %v1533
    %v1540 = vmul.f32 %v1504, %v1533
    %v1541 = vmul.f32 %v1505, %v1533
    %v1542 = vmul.f32 %v1506, %v1533
    %v1543 = vmul.f32 %v1507, %v1533
    %v1544 = vmul.f32 %v1508, %v1533
    %v1545 = vmul.f32 %v1509, %v1533
    %v1546 = vmul.f32 %v1510, %v1533
    %v1547 = vmul.f32 %v1511, %v1533
    %v1548 = vmul.f32 %v1512, %v1533
    %v1549 = vmul.f32 %v1513, %v1533
    %v1550 = vmul.f32 %v1514, %v1533
    %v1551 = vmul.f32 %v1515, %v1533
    %v1552 = vmul.f32 %v1516, %v1533
    %v1553 = vmul.f32 %v1517, %v1533
    %v1554 = vmul.f32 %v1518, %v1533
    %v1555 = vmul.f32 %v1519, %v1533
    %v1556 = vmul.f32 %v1520, %v1533
    %v1557 = vmul.f32 %v1521, %v1533
    %v1558 = vmul.f32 %v1522, %v1533
    %v1559 = vmul.f32 %v1523, %v1533
    %v1560 = vmul.f32 %v1524, %v1533
    %v1561 = vmul.f32 %v1525, %v1533
    %v1562 = vmul.f32 %v1526, %v1533
    %v1563 = vmul.f32 %v1527, %v1533
    %v1564 = vmul.f32 %v1528, %v1533
    %v1565 = vmul.f32 %v1529, %v1533
    %v1566 = vmul.f32 %v1530, %v1533
    %v1567 = vld [vmem:[%s5] sm:$0x1]
    %v1569 = vperm.slane %v1567, 0
    %v1571 = vadd.f32 %v1535, %v1569
    %v1572 = vadd.f32 %v1536, %v1569
    %v1573 = vadd.f32 %v1537, %v1569
    %v1574 = vadd.f32 %v1538, %v1569
    %v1575 = vadd.f32 %v1539, %v1569
    %v1576 = vadd.f32 %v1540, %v1569
    %v1577 = vadd.f32 %v1541, %v1569
    %v1578 = vadd.f32 %v1542, %v1569
    %v1579 = vadd.f32 %v1543, %v1569
    %v1580 = vadd.f32 %v1544, %v1569
    %v1581 = vadd.f32 %v1545, %v1569
    %v1582 = vadd.f32 %v1546, %v1569
    %v1583 = vadd.f32 %v1547, %v1569
    %v1584 = vadd.f32 %v1548, %v1569
    %v1585 = vadd.f32 %v1549, %v1569
    %v1586 = vadd.f32 %v1550, %v1569
    %v1587 = vadd.f32 %v1551, %v1569
    %v1588 = vadd.f32 %v1552, %v1569
    %v1589 = vadd.f32 %v1553, %v1569
    %v1590 = vadd.f32 %v1554, %v1569
    %v1591 = vadd.f32 %v1555, %v1569
    %v1592 = vadd.f32 %v1556, %v1569
    %v1593 = vadd.f32 %v1557, %v1569
    %v1594 = vadd.f32 %v1558, %v1569
    %v1595 = vadd.f32 %v1559, %v1569
    %v1596 = vadd.f32 %v1560, %v1569
    %v1597 = vadd.f32 %v1561, %v1569
    %v1598 = vadd.f32 %v1562, %v1569
    %v1599 = vadd.f32 %v1563, %v1569
    %v1600 = vadd.f32 %v1564, %v1569
    %v1601 = vadd.f32 %v1565, %v1569
    %v1602 = vadd.f32 %v1566, %v1569
    %v1603 = vpack.c.bf16 %v1572, %v1571
    %v1604 = vpack.c.bf16 %v1574, %v1573
    %v1605 = vpack.c.bf16 %v1576, %v1575
    %v1606 = vpack.c.bf16 %v1578, %v1577
    %v1607 = vpack.c.bf16 %v1580, %v1579
    %v1608 = vpack.c.bf16 %v1582, %v1581
    %v1609 = vpack.c.bf16 %v1584, %v1583
    %v1610 = vpack.c.bf16 %v1586, %v1585
    %v1611 = vpack.c.bf16 %v1588, %v1587
    %v1612 = vpack.c.bf16 %v1590, %v1589
    %v1613 = vpack.c.bf16 %v1592, %v1591
    %v1614 = vpack.c.bf16 %v1594, %v1593
    %v1615 = vpack.c.bf16 %v1596, %v1595
    %v1616 = vpack.c.bf16 %v1598, %v1597
    %v1617 = vpack.c.bf16 %v1600, %v1599
    %v1618 = vpack.c.bf16 %v1602, %v1601
    %v1619 = vld [vmem:[%s6] sm:$0xf]
    %v1620 = vld [vmem:[%s6 + $0x4] sm:$0xf]
    %v1621 = vld [vmem:[%s6 + $0x8] sm:$0xf]
    %v1622 = vld [vmem:[%s6 + $0xc] sm:$0xf]
    %v1623 = vld [vmem:[%s6 + $0x10] sm:$0xf]
    %v1624 = vld [vmem:[%s6 + $0x14] sm:$0xf]
    %v1625 = vld [vmem:[%s6 + $0x18] sm:$0xf]
    %v1626 = vld [vmem:[%s6 + $0x1c] sm:$0xf]
    %v1627 = vld [vmem:[%s6 + $0x20] sm:$0xf]
    %v1628 = vld [vmem:[%s6 + $0x24] sm:$0xf]
    %v1629 = vld [vmem:[%s6 + $0x28] sm:$0xf]
    %v1630 = vld [vmem:[%s6 + $0x2c] sm:$0xf]
    %v1631 = vld [vmem:[%s6 + $0x30] sm:$0xf]
    %v1632 = vld [vmem:[%s6 + $0x34] sm:$0xf]
    %v1633 = vld [vmem:[%s6 + $0x38] sm:$0xf]
    %v1634 = vld [vmem:[%s6 + $0x3c] sm:$0xf]
    %v1651 = vunpack.c.l.b16 %v1619
    %v1652 = vunpack.c.l.b16 %v1620
    %v1653 = vunpack.c.l.b16 %v1621
    %v1654 = vunpack.c.l.b16 %v1622
    %v1655 = vunpack.c.l.b16 %v1623
    %v1656 = vunpack.c.l.b16 %v1624
    %v1657 = vunpack.c.l.b16 %v1625
    %v1658 = vunpack.c.l.b16 %v1626
    %v1659 = vunpack.c.l.b16 %v1627
    %v1660 = vunpack.c.l.b16 %v1628
    %v1661 = vunpack.c.l.b16 %v1629
    %v1662 = vunpack.c.l.b16 %v1630
    %v1663 = vunpack.c.l.b16 %v1631
    %v1664 = vunpack.c.l.b16 %v1632
    %v1665 = vunpack.c.l.b16 %v1633
    %v1666 = vunpack.c.l.b16 %v1634
    %v1667 = vpack.c.b16 %v1652, %v1651
    %v1668 = vpack.c.b16 %v1654, %v1653
    %v1669 = vpack.c.b16 %v1656, %v1655
    %v1670 = vpack.c.b16 %v1658, %v1657
    %v1671 = vpack.c.b16 %v1660, %v1659
    %v1672 = vpack.c.b16 %v1662, %v1661
    %v1673 = vpack.c.b16 %v1664, %v1663
    %v1674 = vpack.c.b16 %v1666, %v1665
    %1683 = vmatpush.bf16.msra.mxu0 %v1674
    %1684 = vmatpush.bf16.msra.mxu0 %v1673
    %1685 = vmatpush.bf16.msra.mxu0 %v1672
    %1686 = vmatpush.bf16.msra.mxu0 %v1671
    %1687 = vmatpush.bf16.msra.mxu0 %v1670
    %1688 = vmatpush.bf16.msra.mxu0 %v1669
    %1689 = vmatpush.bf16.msra.mxu0 %v1668
    %1690 = vmatpush.bf16.msra.mxu0 %v1667
    %1691 = vmatmul.bf16.gmra.mxu0 %v1603
    %v1692 = vpop.f32.mrf.mxu0
    %v1693 = vadd.f32 0.0, %v1692
    %v1694 = vpop.f32.mrf.mxu0
    %v1695 = vadd.f32 0.0, %v1694
    %1696 = vmatmul.bf16.gmra.mxu0 %v1604
    %v1697 = vpop.f32.mrf.mxu0
    %v1698 = vadd.f32 0.0, %v1697
    %v1699 = vpop.f32.mrf.mxu0
    %v1700 = vadd.f32 0.0, %v1699
    %1701 = vmatmul.bf16.gmra.mxu0 %v1605
    %v1702 = vpop.f32.mrf.mxu0
    %v1703 = vadd.f32 0.0, %v1702
    %v1704 = vpop.f32.mrf.mxu0
    %v1705 = vadd.f32 0.0, %v1704
    %1706 = vmatmul.bf16.gmra.mxu0 %v1606
    %v1707 = vpop.f32.mrf.mxu0
    %v1708 = vadd.f32 0.0, %v1707
    %v1709 = vpop.f32.mrf.mxu0
    %v1710 = vadd.f32 0.0, %v1709
    %1711 = vmatmul.bf16.gmra.mxu0 %v1607
    %v1712 = vpop.f32.mrf.mxu0
    %v1713 = vadd.f32 0.0, %v1712
    %v1714 = vpop.f32.mrf.mxu0
    %v1715 = vadd.f32 0.0, %v1714
    %1716 = vmatmul.bf16.gmra.mxu0 %v1608
    %v1717 = vpop.f32.mrf.mxu0
    %v1718 = vadd.f32 0.0, %v1717
    %v1719 = vpop.f32.mrf.mxu0
    %v1720 = vadd.f32 0.0, %v1719
    %1721 = vmatmul.bf16.gmra.mxu0 %v1609
    %v1722 = vpop.f32.mrf.mxu0
    %v1723 = vadd.f32 0.0, %v1722
    %v1724 = vpop.f32.mrf.mxu0
    %v1725 = vadd.f32 0.0, %v1724
    %1726 = vmatmul.bf16.gmra.mxu0 %v1610
    %v1727 = vpop.f32.mrf.mxu0
    %v1728 = vadd.f32 0.0, %v1727
    %v1729 = vpop.f32.mrf.mxu0
    %v1730 = vadd.f32 0.0, %v1729
    %1731 = vmatmul.bf16.gmra.mxu0 %v1611
    %v1732 = vpop.f32.mrf.mxu0
    %v1733 = vadd.f32 0.0, %v1732
    %v1734 = vpop.f32.mrf.mxu0
    %v1735 = vadd.f32 0.0, %v1734
    %1736 = vmatmul.bf16.gmra.mxu0 %v1612
    %v1737 = vpop.f32.mrf.mxu0
    %v1738 = vadd.f32 0.0, %v1737
    %v1739 = vpop.f32.mrf.mxu0
    %v1740 = vadd.f32 0.0, %v1739
    %1741 = vmatmul.bf16.gmra.mxu0 %v1613
    %v1742 = vpop.f32.mrf.mxu0
    %v1743 = vadd.f32 0.0, %v1742
    %v1744 = vpop.f32.mrf.mxu0
    %v1745 = vadd.f32 0.0, %v1744
    %1746 = vmatmul.bf16.gmra.mxu0 %v1614
    %v1747 = vpop.f32.mrf.mxu0
    %v1748 = vadd.f32 0.0, %v1747
    %v1749 = vpop.f32.mrf.mxu0
    %v1750 = vadd.f32 0.0, %v1749
    %1751 = vmatmul.bf16.gmra.mxu0 %v1615
    %v1752 = vpop.f32.mrf.mxu0
    %v1753 = vadd.f32 0.0, %v1752
    %v1754 = vpop.f32.mrf.mxu0
    %v1755 = vadd.f32 0.0, %v1754
    %1756 = vmatmul.bf16.gmra.mxu0 %v1616
    %v1757 = vpop.f32.mrf.mxu0
    %v1758 = vadd.f32 0.0, %v1757
    %v1759 = vpop.f32.mrf.mxu0
    %v1760 = vadd.f32 0.0, %v1759
    %1761 = vmatmul.bf16.gmra.mxu0 %v1617
    %v1762 = vpop.f32.mrf.mxu0
    %v1763 = vadd.f32 0.0, %v1762
    %v1764 = vpop.f32.mrf.mxu0
    %v1765 = vadd.f32 0.0, %v1764
    %1766 = vmatmul.bf16.gmra.mxu0 %v1618
    %v1767 = vpop.f32.mrf.mxu0
    %v1768 = vadd.f32 0.0, %v1767
    %v1769 = vpop.f32.mrf.mxu0
    %v1770 = vadd.f32 0.0, %v1769
    %1771 = vdwg.mxu0
    %v1772 = vpack.c.bf16 %v1693, %v1693
    %v1773 = vpack.c.bf16 %v1695, %v1695
    %v1774 = vpack.c.bf16 %v1698, %v1698
    %v1775 = vpack.c.bf16 %v1700, %v1700
    %v1776 = vpack.c.bf16 %v1703, %v1703
    %v1777 = vpack.c.bf16 %v1705, %v1705
    %v1778 = vpack.c.bf16 %v1708, %v1708
    %v1779 = vpack.c.bf16 %v1710, %v1710
    %v1780 = vpack.c.bf16 %v1713, %v1713
    %v1781 = vpack.c.bf16 %v1715, %v1715
    %v1782 = vpack.c.bf16 %v1718, %v1718
    %v1783 = vpack.c.bf16 %v1720, %v1720
    %v1784 = vpack.c.bf16 %v1723, %v1723
    %v1785 = vpack.c.bf16 %v1725, %v1725
    %v1786 = vpack.c.bf16 %v1728, %v1728
    %v1787 = vpack.c.bf16 %v1730, %v1730
    %v1788 = vpack.c.bf16 %v1733, %v1733
    %v1789 = vpack.c.bf16 %v1735, %v1735
    %v1790 = vpack.c.bf16 %v1738, %v1738
    %v1791 = vpack.c.bf16 %v1740, %v1740
    %v1792 = vpack.c.bf16 %v1743, %v1743
    %v1793 = vpack.c.bf16 %v1745, %v1745
    %v1794 = vpack.c.bf16 %v1748, %v1748
    %v1795 = vpack.c.bf16 %v1750, %v1750
    %v1796 = vpack.c.bf16 %v1753, %v1753
    %v1797 = vpack.c.bf16 %v1755, %v1755
    %v1798 = vpack.c.bf16 %v1758, %v1758
    %v1799 = vpack.c.bf16 %v1760, %v1760
    %v1800 = vpack.c.bf16 %v1763, %v1763
    %v1801 = vpack.c.bf16 %v1765, %v1765
    %v1802 = vpack.c.bf16 %v1768, %v1768
    %v1803 = vpack.c.bf16 %v1770, %v1770
    %1804 = vst [vmem:[%s9] sm:$0xf] %v1772
    %1805 = vst [vmem:[%s9 + $0x4] sm:$0xf] %v1773
    %1806 = vst [vmem:[%s9 + $0x8] sm:$0xf] %v1774
    %1807 = vst [vmem:[%s9 + $0xc] sm:$0xf] %v1775
    %1808 = vst [vmem:[%s9 + $0x10] sm:$0xf] %v1776
    %1809 = vst [vmem:[%s9 + $0x14] sm:$0xf] %v1777
    %1810 = vst [vmem:[%s9 + $0x18] sm:$0xf] %v1778
    %1811 = vst [vmem:[%s9 + $0x1c] sm:$0xf] %v1779
    %1812 = vst [vmem:[%s9 + $0x20] sm:$0xf] %v1780
    %1813 = vst [vmem:[%s9 + $0x24] sm:$0xf] %v1781
    %1814 = vst [vmem:[%s9 + $0x28] sm:$0xf] %v1782
    %1815 = vst [vmem:[%s9 + $0x2c] sm:$0xf] %v1783
    %1816 = vst [vmem:[%s9 + $0x30] sm:$0xf] %v1784
    %1817 = vst [vmem:[%s9 + $0x34] sm:$0xf] %v1785
    %1818 = vst [vmem:[%s9 + $0x38] sm:$0xf] %v1786
    %1819 = vst [vmem:[%s9 + $0x3c] sm:$0xf] %v1787
    %1820 = vst [vmem:[%s9 + $0x40] sm:$0xf] %v1788
    %1821 = vst [vmem:[%s9 + $0x44] sm:$0xf] %v1789
    %1822 = vst [vmem:[%s9 + $0x48] sm:$0xf] %v1790
    %1823 = vst [vmem:[%s9 + $0x4c] sm:$0xf] %v1791
    %1824 = vst [vmem:[%s9 + $0x50] sm:$0xf] %v1792
    %1825 = vst [vmem:[%s9 + $0x54] sm:$0xf] %v1793
    %1826 = vst [vmem:[%s9 + $0x58] sm:$0xf] %v1794
    %1827 = vst [vmem:[%s9 + $0x5c] sm:$0xf] %v1795
    %1828 = vst [vmem:[%s9 + $0x60] sm:$0xf] %v1796
    %1829 = vst [vmem:[%s9 + $0x64] sm:$0xf] %v1797
    %1830 = vst [vmem:[%s9 + $0x68] sm:$0xf] %v1798
    %1831 = vst [vmem:[%s9 + $0x6c] sm:$0xf] %v1799
    %1832 = vst [vmem:[%s9 + $0x70] sm:$0xf] %v1800
    %1833 = vst [vmem:[%s9 + $0x74] sm:$0xf] %v1801
    %1834 = vst [vmem:[%s9 + $0x78] sm:$0xf] %v1802
    %1835 = vst [vmem:[%s9 + $0x7c] sm:$0xf] %v1803
    %v1836 = vld [vmem:[%s7] sm:$0xf]
    %v1837 = vld [vmem:[%s7 + $0x4] sm:$0xf]
    %v1838 = vld [vmem:[%s7 + $0x8] sm:$0xf]
    %v1839 = vld [vmem:[%s7 + $0xc] sm:$0xf]
    %v1840 = vld [vmem:[%s7 + $0x10] sm:$0xf]
    %v1841 = vld [vmem:[%s7 + $0x14] sm:$0xf]
    %v1842 = vld [vmem:[%s7 + $0x18] sm:$0xf]
    %v1843 = vld [vmem:[%s7 + $0x1c] sm:$0xf]
    %v1844 = vld [vmem:[%s7 + $0x20] sm:$0xf]
    %v1845 = vld [vmem:[%s7 + $0x24] sm:$0xf]
    %v1846 = vld [vmem:[%s7 + $0x28] sm:$0xf]
    %v1847 = vld [vmem:[%s7 + $0x2c] sm:$0xf]
    %v1848 = vld [vmem:[%s7 + $0x30] sm:$0xf]
    %v1849 = vld [vmem:[%s7 + $0x34] sm:$0xf]
    %v1850 = vld [vmem:[%s7 + $0x38] sm:$0xf]
    %v1851 = vld [vmem:[%s7 + $0x3c] sm:$0xf]
    %v1852 = vld [vmem:[%s8] sm:$0x1]
    %v1854 = vperm.slane %v1852, 0
    %v1872 = vunpack.c.l.b16 %v1836
    %v1873 = vunpack.c.l.b16 %v1837
    %v1874 = vunpack.c.l.b16 %v1838
    %v1875 = vunpack.c.l.b16 %v1839
    %v1876 = vunpack.c.l.b16 %v1840
    %v1877 = vunpack.c.l.b16 %v1841
    %v1878 = vunpack.c.l.b16 %v1842
    %v1879 = vunpack.c.l.b16 %v1843
    %v1880 = vunpack.c.l.b16 %v1844
    %v1881 = vunpack.c.l.b16 %v1845
    %v1882 = vunpack.c.l.b16 %v1846
    %v1883 = vunpack.c.l.b16 %v1847
    %v1884 = vunpack.c.l.b16 %v1848
    %v1885 = vunpack.c.l.b16 %v1849
    %v1886 = vunpack.c.l.b16 %v1850
    %v1887 = vunpack.c.l.b16 %v1851
    %v1888 = vpack.c.b16 %v1873, %v1872
    %v1889 = vpack.c.b16 %v1875, %v1874
    %v1890 = vpack.c.b16 %v1877, %v1876
    %v1891 = vpack.c.b16 %v1879, %v1878
    %v1892 = vpack.c.b16 %v1881, %v1880
    %v1893 = vpack.c.b16 %v1883, %v1882
    %v1894 = vpack.c.b16 %v1885, %v1884
    %v1895 = vpack.c.b16 %v1887, %v1886
    %1904 = vmatpush.bf16.msra.mxu0 %v1895
    %1905 = vmatpush.bf16.msra.mxu0 %v1894
    %1906 = vmatpush.bf16.msra.mxu0 %v1893
    %1907 = vmatpush.bf16.msra.mxu0 %v1892
    %1908 = vmatpush.bf16.msra.mxu0 %v1891
    %1909 = vmatpush.bf16.msra.mxu0 %v1890
    %1910 = vmatpush.bf16.msra.mxu0 %v1889
    %1911 = vmatpush.bf16.msra.mxu0 %v1888
    %1912 = vmatmul.bf16.gmra.mxu0 %v1603
    %v1913 = vpop.f32.mrf.mxu0
    %v1914 = vadd.f32 %v1854, %v1913
    %v1915 = vpop.f32.mrf.mxu0
    %v1916 = vadd.f32 %v1854, %v1915
    %1917 = vmatmul.bf16.gmra.mxu0 %v1604
    %v1918 = vpop.f32.mrf.mxu0
    %v1919 = vadd.f32 %v1854, %v1918
    %v1920 = vpop.f32.mrf.mxu0
    %v1921 = vadd.f32 %v1854, %v1920
    %1922 = vmatmul.bf16.gmra.mxu0 %v1605
    %v1923 = vpop.f32.mrf.mxu0
    %v1924 = vadd.f32 %v1854, %v1923
    %v1925 = vpop.f32.mrf.mxu0
    %v1926 = vadd.f32 %v1854, %v1925
    %1927 = vmatmul.bf16.gmra.mxu0 %v1606
    %v1928 = vpop.f32.mrf.mxu0
    %v1929 = vadd.f32 %v1854, %v1928
    %v1930 = vpop.f32.mrf.mxu0
    %v1931 = vadd.f32 %v1854, %v1930
    %1932 = vmatmul.bf16.gmra.mxu0 %v1607
    %v1933 = vpop.f32.mrf.mxu0
    %v1934 = vadd.f32 %v1854, %v1933
    %v1935 = vpop.f32.mrf.mxu0
    %v1936 = vadd.f32 %v1854, %v1935
    %1937 = vmatmul.bf16.gmra.mxu0 %v1608
    %v1938 = vpop.f32.mrf.mxu0
    %v1939 = vadd.f32 %v1854, %v1938
    %v1940 = vpop.f32.mrf.mxu0
    %v1941 = vadd.f32 %v1854, %v1940
    %1942 = vmatmul.bf16.gmra.mxu0 %v1609
    %v1943 = vpop.f32.mrf.mxu0
    %v1944 = vadd.f32 %v1854, %v1943
    %v1945 = vpop.f32.mrf.mxu0
    %v1946 = vadd.f32 %v1854, %v1945
    %1947 = vmatmul.bf16.gmra.mxu0 %v1610
    %v1948 = vpop.f32.mrf.mxu0
    %v1949 = vadd.f32 %v1854, %v1948
    %v1950 = vpop.f32.mrf.mxu0
    %v1951 = vadd.f32 %v1854, %v1950
    %1952 = vmatmul.bf16.gmra.mxu0 %v1611
    %v1953 = vpop.f32.mrf.mxu0
    %v1954 = vadd.f32 %v1854, %v1953
    %v1955 = vpop.f32.mrf.mxu0
    %v1956 = vadd.f32 %v1854, %v1955
    %1957 = vmatmul.bf16.gmra.mxu0 %v1612
    %v1958 = vpop.f32.mrf.mxu0
    %v1959 = vadd.f32 %v1854, %v1958
    %v1960 = vpop.f32.mrf.mxu0
    %v1961 = vadd.f32 %v1854, %v1960
    %1962 = vmatmul.bf16.gmra.mxu0 %v1613
    %v1963 = vpop.f32.mrf.mxu0
    %v1964 = vadd.f32 %v1854, %v1963
    %v1965 = vpop.f32.mrf.mxu0
    %v1966 = vadd.f32 %v1854, %v1965
    %1967 = vmatmul.bf16.gmra.mxu0 %v1614
    %v1968 = vpop.f32.mrf.mxu0
    %v1969 = vadd.f32 %v1854, %v1968
    %v1970 = vpop.f32.mrf.mxu0
    %v1971 = vadd.f32 %v1854, %v1970
    %1972 = vmatmul.bf16.gmra.mxu0 %v1615
    %v1973 = vpop.f32.mrf.mxu0
    %v1974 = vadd.f32 %v1854, %v1973
    %v1975 = vpop.f32.mrf.mxu0
    %v1976 = vadd.f32 %v1854, %v1975
    %1977 = vmatmul.bf16.gmra.mxu0 %v1616
    %v1978 = vpop.f32.mrf.mxu0
    %v1979 = vadd.f32 %v1854, %v1978
    %v1980 = vpop.f32.mrf.mxu0
    %v1981 = vadd.f32 %v1854, %v1980
    %1982 = vmatmul.bf16.gmra.mxu0 %v1617
    %v1983 = vpop.f32.mrf.mxu0
    %v1984 = vadd.f32 %v1854, %v1983
    %v1985 = vpop.f32.mrf.mxu0
    %v1986 = vadd.f32 %v1854, %v1985
    %1987 = vmatmul.bf16.gmra.mxu0 %v1618
    %v1988 = vpop.f32.mrf.mxu0
    %v1989 = vadd.f32 %v1854, %v1988
    %v1990 = vpop.f32.mrf.mxu0
    %v1991 = vadd.f32 %v1854, %v1990
    %1992 = vdwg.mxu0
    %v1993 = vpack.c.bf16 %v1914, %v1914
    %v1994 = vpack.c.bf16 %v1916, %v1916
    %v1995 = vpack.c.bf16 %v1919, %v1919
    %v1996 = vpack.c.bf16 %v1921, %v1921
    %v1997 = vpack.c.bf16 %v1924, %v1924
    %v1998 = vpack.c.bf16 %v1926, %v1926
    %v1999 = vpack.c.bf16 %v1929, %v1929
    %v2000 = vpack.c.bf16 %v1931, %v1931
    %v2001 = vpack.c.bf16 %v1934, %v1934
    %v2002 = vpack.c.bf16 %v1936, %v1936
    %v2003 = vpack.c.bf16 %v1939, %v1939
    %v2004 = vpack.c.bf16 %v1941, %v1941
    %v2005 = vpack.c.bf16 %v1944, %v1944
    %v2006 = vpack.c.bf16 %v1946, %v1946
    %v2007 = vpack.c.bf16 %v1949, %v1949
    %v2008 = vpack.c.bf16 %v1951, %v1951
    %v2009 = vpack.c.bf16 %v1954, %v1954
    %v2010 = vpack.c.bf16 %v1956, %v1956
    %v2011 = vpack.c.bf16 %v1959, %v1959
    %v2012 = vpack.c.bf16 %v1961, %v1961
    %v2013 = vpack.c.bf16 %v1964, %v1964
    %v2014 = vpack.c.bf16 %v1966, %v1966
    %v2015 = vpack.c.bf16 %v1969, %v1969
    %v2016 = vpack.c.bf16 %v1971, %v1971
    %v2017 = vpack.c.bf16 %v1974, %v1974
    %v2018 = vpack.c.bf16 %v1976, %v1976
    %v2019 = vpack.c.bf16 %v1979, %v1979
    %v2020 = vpack.c.bf16 %v1981, %v1981
    %v2021 = vpack.c.bf16 %v1984, %v1984
    %v2022 = vpack.c.bf16 %v1986, %v1986
    %v2023 = vpack.c.bf16 %v1989, %v1989
    %v2024 = vpack.c.bf16 %v1991, %v1991
    %2025 = vst [vmem:[%s10] sm:$0xf] %v1993
    %2026 = vst [vmem:[%s10 + $0x4] sm:$0xf] %v1994
    %2027 = vst [vmem:[%s10 + $0x8] sm:$0xf] %v1995
    %2028 = vst [vmem:[%s10 + $0xc] sm:$0xf] %v1996
    %2029 = vst [vmem:[%s10 + $0x10] sm:$0xf] %v1997
    %2030 = vst [vmem:[%s10 + $0x14] sm:$0xf] %v1998
    %2031 = vst [vmem:[%s10 + $0x18] sm:$0xf] %v1999
    %2032 = vst [vmem:[%s10 + $0x1c] sm:$0xf] %v2000
    %2033 = vst [vmem:[%s10 + $0x20] sm:$0xf] %v2001
    %2034 = vst [vmem:[%s10 + $0x24] sm:$0xf] %v2002
    %2035 = vst [vmem:[%s10 + $0x28] sm:$0xf] %v2003
    %2036 = vst [vmem:[%s10 + $0x2c] sm:$0xf] %v2004
    %2037 = vst [vmem:[%s10 + $0x30] sm:$0xf] %v2005
    %2038 = vst [vmem:[%s10 + $0x34] sm:$0xf] %v2006
    %2039 = vst [vmem:[%s10 + $0x38] sm:$0xf] %v2007
    %2040 = vst [vmem:[%s10 + $0x3c] sm:$0xf] %v2008
    %2041 = vst [vmem:[%s10 + $0x40] sm:$0xf] %v2009
    %2042 = vst [vmem:[%s10 + $0x44] sm:$0xf] %v2010
    %2043 = vst [vmem:[%s10 + $0x48] sm:$0xf] %v2011
    %2044 = vst [vmem:[%s10 + $0x4c] sm:$0xf] %v2012
    %2045 = vst [vmem:[%s10 + $0x50] sm:$0xf] %v2013
    %2046 = vst [vmem:[%s10 + $0x54] sm:$0xf] %v2014
    %2047 = vst [vmem:[%s10 + $0x58] sm:$0xf] %v2015
    %2048 = vst [vmem:[%s10 + $0x5c] sm:$0xf] %v2016
    %2049 = vst [vmem:[%s10 + $0x60] sm:$0xf] %v2017
    %2050 = vst [vmem:[%s10 + $0x64] sm:$0xf] %v2018
    %2051 = vst [vmem:[%s10 + $0x68] sm:$0xf] %v2019
    %2052 = vst [vmem:[%s10 + $0x6c] sm:$0xf] %v2020
    %2053 = vst [vmem:[%s10 + $0x70] sm:$0xf] %v2021
    %2054 = vst [vmem:[%s10 + $0x74] sm:$0xf] %v2022
    %2055 = vst [vmem:[%s10 + $0x78] sm:$0xf] %v2023
    %2056 = vst [vmem:[%s10 + $0x7c] sm:$0xf] %v2024
  $region45: #{nifty_forward.4} parent=0 // pred_fallthru
    _
  // Predicated region
  $region46: #{nifty_forward.4} parent=0 // pred_check
    _
  $region47: #{nifty_forward.4} parent=0 // pred_check_branch
    %2058 = sbr.rel (0) target = $region49
  $region48: #{nifty_forward.4} parent=0 // pred_region
    _
  $region49: #{nifty_forward.4} parent=0 // pred_fallthru
    _
  // Predicated region
  $region50: #{nifty_forward.4} parent=0 // pred_check
    _
  $region51: #{nifty_forward.4} parent=0 // pred_check_branch
    %2060 = sbr.rel (0) target = $region53
  $region52: #{nifty_forward.4} parent=0 // pred_region
    _
  $region53: #{nifty_forward.4} parent=0 // pred_fallthru
    _
  // Predicated region
  $region54: #{nifty_forward.4} parent=0 // pred_check
    _
  $region55: #{nifty_forward.4} parent=0 // pred_check_branch
    %2062 = sbr.rel (0) target = $region57
  $region56: #{nifty_forward.4} parent=0 // pred_region
    _
  $region57: #{nifty_forward.4} parent=0 // pred_fallthru
    _
  // Predicated region
  $region58: #{nifty_forward.4} parent=0 // pred_check
    _
  $region59: #{nifty_forward.4} parent=0 // pred_check_branch
    %2064 = sbr.rel (0) target = $region61
  $region60: #{nifty_forward.4} parent=0 // pred_region
    _
  $region61: #{nifty_forward.4} parent=0 // pred_fallthru
    _

</llo_original>
